<compile_context>
chip_gen: v5e
topology: v5e:2x2
jax: 0.10.0
libtpu: 0.0.40
codegen_flags: <defaults>
</compile_context>

<pallas_src>
import functools

import jax
import jax.numpy as jnp
from jax.experimental import pallas as pl
from jax.experimental.pallas import tpu as pltpu

_VMEM_BUDGET = 20 * 1024 * 1024   # working-set target, well under the 32 MiB scoped limit


def _round_up(x, m):
    return ((x + m - 1) // m) * m


def _pick_tile(n, unit, cap):
    """Largest multiple of `unit` dividing n with value <= cap; else n (full dim)."""
    best = None
    limit = min(n, cap)
    t = unit
    while t <= limit:
        if n % t == 0:
            best = t
        t += unit
    return best if best is not None else n


def _bn_fc_partial_kernel(x_ref, g_ref, bt_ref, w_ref,
                          p_ref, s_ref, t_ref,
                          sum_ref, sumsq_ref, *, inv_n, eps):
    # x_ref: (tb, C, HW); g/bt: (C, 1); w_ref: (K, C, HW)
    # p_ref: (C, tb, K) out; s_ref/t_ref: (C, 1) out (written on last step only)
    # sum_ref/sumsq_ref: (C, HW) f32 resident scratch
    i = pl.program_id(0)
    C = sum_ref.shape[0]

    @pl.when(i == 0)
    def _():
        sum_ref[...] = jnp.zeros_like(sum_ref)
        sumsq_ref[...] = jnp.zeros_like(sumsq_ref)

    # Per-feature partial stats: reduce over the leading batch axis only (VPU);
    # the cross-lane HW reduce is deferred to the final pl.when.
    x = x_ref[...].astype(jnp.float32)                       # (tb, C, HW)
    sum_ref[...] += jnp.sum(x, axis=0)
    sumsq_ref[...] += jnp.sum(x * x, axis=0)

    # Per-channel partial Linear for this batch tile:
    #   P[c, b, k] = sum_hw x[b, c, hw] * W[k, c, hw]
    # C plain 2-D MXU dots with static ref slices (exact; only reassociates
    # the reference's F-long contraction into per-channel pieces).
    for c in range(C):
        x_c = x_ref[:, c, :].astype(jnp.float32)             # (tb, HW)
        w_c = w_ref[:, c, :].astype(jnp.float32)             # (K, HW)
        p_ref[c] = jax.lax.dot_general(
            x_c, w_c,
            dimension_numbers=(((1,), (1,)), ((), ())),      # contract HW
            precision=jax.lax.Precision.HIGHEST,
            preferred_element_type=jnp.float32)

    @pl.when(i == pl.num_programs(0) - 1)
    def _():
        mean = jnp.sum(sum_ref[...], axis=1, keepdims=True) * inv_n            # (C, 1)
        var = jnp.sum(sumsq_ref[...], axis=1, keepdims=True) * inv_n - mean * mean
        var = jnp.maximum(var, 0.0)      # guard E[x^2]-mean^2 cancellation (train-mode biased var)
        s = g_ref[...] * jax.lax.rsqrt(var + eps)
        s_ref[...] = s
        t_ref[...] = bt_ref[...] - mean * s


def _combine_kernel(p_ref, s_ref, const_ref, o_ref):
    # p_ref: (C, tb, K); s_ref: (C, 1); const_ref: (1, K); o_ref: (tb, K)
    C = p_ref.shape[0]
    acc = jnp.zeros(o_ref.shape, dtype=jnp.float32)
    for c in range(C):
        acc = acc + p_ref[c] * s_ref[pl.ds(c, 1), :]          # (tb, K) * (1, 1)
    o_ref[...] = (acc + const_ref[...]).astype(o_ref.dtype)


def sn_linear_layer_forward(x, gamma, beta, weight, bias, *, eps=1e-5):
    """x: (B, C, H, W); gamma/beta: (C,); weight: (K, C*H*W); bias: (K,)."""
    B, C, H, W = x.shape
    HW = H * W
    K = weight.shape[0]

    x3 = x.reshape(B, C, HW)                 # contiguous view, no transpose
    w3 = weight.reshape(K, C, HW)            # contiguous view of the FC weight

    # ---- batch tile from an explicit VMEM budget (v7x-safe) -------------------
    lane, sub = 128, 8
    x_row = _round_up(C, sub) * _round_up(HW, lane) * 4       # one batch row of the x block (padded)
    p_row = C * _round_up(K, lane) * 4                        # one batch row of the P block (padded)
    w_blk = K * _round_up(C, sub) * _round_up(HW, lane) * 4   # resident weight block
    scratch = 2 * _round_up(C, sub) * _round_up(HW, lane) * 4
    avail = _VMEM_BUDGET - 2 * w_blk - scratch
    cap = sub
    if avail > 0:
        cap = max(sub, (avail // (2 * (x_row + p_row))) // sub * sub)
    tb = _pick_tile(B, sub, min(cap, 1024))
    grid = (B // tb,)

    # ---- pass 1: fused BN-stats reduction + per-channel partial FC ------------
    p, s_c, t_c = pl.pallas_call(
        functools.partial(_bn_fc_partial_kernel,
                          inv_n=1.0 / float(B * HW), eps=eps),
        out_shape=(jax.ShapeDtypeStruct((C, B, K), jnp.float32),
                   jax.ShapeDtypeStruct((C, 1), jnp.float32),
                   jax.ShapeDtypeStruct((C, 1), jnp.float32)),
        grid=grid,
        in_specs=[pl.BlockSpec((tb, C, HW), lambda i: (i, 0, 0)),
                  pl.BlockSpec((C, 1), lambda i: (0, 0)),
                  pl.BlockSpec((C, 1), lambda i: (0, 0)),
                  pl.BlockSpec((K, C, HW), lambda i: (0, 0, 0))],
        out_specs=(pl.BlockSpec((C, tb, K), lambda i: (0, i, 0)),
                   pl.BlockSpec((C, 1), lambda i: (0, 0)),
                   pl.BlockSpec((C, 1), lambda i: (0, 0))),
        scratch_shapes=[pltpu.VMEM((C, HW), jnp.float32),
                        pltpu.VMEM((C, HW), jnp.float32)],
        compiler_params=pltpu.CompilerParams(
            dimension_semantics=("arbitrary",),     # stats reduce over batch tiles
            vmem_limit_bytes=32 * 1024 * 1024),
    )(x3, gamma.reshape(C, 1), beta.reshape(C, 1), w3)

    # ---- tiny parameter-only XLA glue: fold BN shift into the FC bias ---------
    # const = bias + t_f @ W^T   (t_f is t_c broadcast over HW); only K x F work.
    w_ch = jnp.sum(w3.astype(jnp.float32), axis=-1)                       # (K, C)
    const = bias.reshape(1, K) + jnp.dot(
        t_c.reshape(1, C), w_ch.T, precision=jax.lax.Precision.HIGHEST)   # (1, K)

    # ---- pass 2 (epilogue): y = sum_c s_c * P[c] + const ----------------------
    out = pl.pallas_call(
        _combine_kernel,
        out_shape=jax.ShapeDtypeStruct((B, K), jnp.float32),
        grid=grid,
        in_specs=[pl.BlockSpec((C, tb, K), lambda i: (0, i, 0)),
                  pl.BlockSpec((C, 1), lambda i: (0, 0)),
                  pl.BlockSpec((1, K), lambda i: (0, 0))],
        out_specs=pl.BlockSpec((tb, K), lambda i: (i, 0)),
        compiler_params=pltpu.CompilerParams(
            dimension_semantics=("parallel",),
            vmem_limit_bytes=32 * 1024 * 1024),
    )(p, s_c, const)
    return out


def _reference(x, gamma, beta, weight, bias):
    mean = jnp.mean(x, axis=(0, 2, 3), keepdims=True)
    var = jnp.mean((x - mean) ** 2, axis=(0, 2, 3), keepdims=True)
    xn = (x - mean) / jnp.sqrt(var + 1e-5)
    y = xn * gamma.reshape(1, -1, 1, 1) + beta.reshape(1, -1, 1, 1)
    flat = y.reshape(x.shape[0], -1)
    return jnp.dot(flat, weight.T, precision=jax.lax.Precision.HIGHEST) + bias


if __name__ == "__main__":
    # Small shapes consistent with the module:
    #   n_coefficients=4, M_coefficient=N_coefficient=8 -> C = 12, H = W = 8
    #   features F = 3 * 8 * 8 * 4 = 768, num_classes = 10, batch = 2
    num_classes = 10
    n_coefficients = 4
    M = N = 8
    C = 3 * n_coefficients
    F = C * M * N
    B = 2

    key = jax.random.PRNGKey(0)
    kx, kw, kb = jax.random.split(key, 3)

    x = jax.random.normal(kx, (B, C, M, N), dtype=jnp.float32)

    # BatchNorm2d affine params: PyTorch default init (gamma=1, beta=0)
    gamma = jnp.ones((C,), dtype=jnp.float32)
    beta = jnp.zeros((C,), dtype=jnp.float32)

    # nn.Linear default init: U(-1/sqrt(F), 1/sqrt(F)) for weight and bias
    bound = 1.0 / (F ** 0.5)
    weight = jax.random.uniform(kw, (num_classes, F), minval=-bound, maxval=bound,
                                dtype=jnp.float32)
    bias = jax.random.uniform(kb, (num_classes,), minval=-bound, maxval=bound,
                              dtype=jnp.float32)

    out = sn_linear_layer_forward(x, gamma, beta, weight, bias)
    out = jax.block_until_ready(out)

    ref = _reference(x, gamma, beta, weight, bias)
    assert out.shape == (B, num_classes)
    assert jnp.allclose(out, ref, atol=1e-4, rtol=1e-4), "mismatch vs JAX reference"

    print("KERNEL_OK")
</pallas_src>

<mosaic_0001>
module attributes {stable_mosaic.version = 11 : i64} {
  func.func @_bn_fc_partial_kernel(%arg0: i32, %arg1: memref<2x12x64xf32, #tpu.memory_space<vmem>>, %arg2: memref<12x1xf32, #tpu.memory_space<vmem>>, %arg3: memref<12x1xf32, #tpu.memory_space<vmem>>, %arg4: memref<10x12x64xf32, #tpu.memory_space<vmem>>, %arg5: memref<12x2x10xf32, #tpu.memory_space<vmem>>, %arg6: memref<12x1xf32, #tpu.memory_space<vmem>>, %arg7: memref<12x1xf32, #tpu.memory_space<vmem>>, %arg8: memref<12x64xf32, #tpu.memory_space<vmem>>, %arg9: memref<12x64xf32, #tpu.memory_space<vmem>>) attributes {dimension_semantics = [#tpu.dimension_semantics<arbitrary>], iteration_bounds = array<i64: 1>, scalar_prefetch = 0 : i64, scratch_operands = 2 : i64, tpu.core_type = #tpu.core_type<tc>, window_params = [{transform_indices = @transform_0, window_bounds = array<i64: 2, 12, 64>}, {pipeline_mode = #tpu.pipeline_mode<synchronous>, transform_indices = @transform_1, window_bounds = array<i64: 12, 1>}, {pipeline_mode = #tpu.pipeline_mode<synchronous>, transform_indices = @transform_2, window_bounds = array<i64: 12, 1>}, {pipeline_mode = #tpu.pipeline_mode<synchronous>, transform_indices = @transform_3, window_bounds = array<i64: 10, 12, 64>}, {transform_indices = @transform_4, window_bounds = array<i64: 12, 2, 10>}, {pipeline_mode = #tpu.pipeline_mode<synchronous>, transform_indices = @transform_5, window_bounds = array<i64: 12, 1>}, {pipeline_mode = #tpu.pipeline_mode<synchronous>, transform_indices = @transform_6, window_bounds = array<i64: 12, 1>}]} {
    %c0_i32 = arith.constant 0 : i32
    %0 = arith.cmpi eq, %arg0, %c0_i32 : i32
    %1 = arith.extui %0 : i1 to i32
    %c0_i32_0 = arith.constant 0 : i32
    %2 = arith.cmpi ne, %1, %c0_i32_0 : i32
    scf.if %2 {
      %cst_123 = arith.constant 0.000000e+00 : f32
      %112 = vector.broadcast %cst_123 : f32 to vector<12x64xf32>
      %c0_124 = arith.constant 0 : index
      %c0_125 = arith.constant 0 : index
      %113 = vector.load %arg8[%c0_124, %c0_125] : memref<12x64xf32, #tpu.memory_space<vmem>>, vector<12x64xf32>
      tpu.vector_store %arg8[%c0_124, %c0_125], %112 {strides = array<i32>} : memref<12x64xf32, #tpu.memory_space<vmem>>, vector<12x64xf32>,
      %cst_126 = arith.constant 0.000000e+00 : f32
      %114 = vector.broadcast %cst_126 : f32 to vector<12x64xf32>
      %c0_127 = arith.constant 0 : index
      %c0_128 = arith.constant 0 : index
      %115 = vector.load %arg9[%c0_127, %c0_128] : memref<12x64xf32, #tpu.memory_space<vmem>>, vector<12x64xf32>
      tpu.vector_store %arg9[%c0_127, %c0_128], %114 {strides = array<i32>} : memref<12x64xf32, #tpu.memory_space<vmem>>, vector<12x64xf32>,
    } else {
    }
    %c0 = arith.constant 0 : index
    %c0_1 = arith.constant 0 : index
    %c0_2 = arith.constant 0 : index
    %3 = vector.load %arg1[%c0, %c0_1, %c0_2] : memref<2x12x64xf32, #tpu.memory_space<vmem>>, vector<2x12x64xf32>
    %c0_3 = arith.constant 0 : index
    %c0_4 = arith.constant 0 : index
    %4 = vector.load %arg8[%c0_3, %c0_4] : memref<12x64xf32, #tpu.memory_space<vmem>>, vector<12x64xf32>
    %cst = arith.constant dense<0.000000e+00> : vector<12x64xf32>
    %5 = vector.multi_reduction <add>, %3, %cst [0] : vector<2x12x64xf32> to vector<12x64xf32>
    %6 = arith.addf %4, %5 : vector<12x64xf32>
    %c0_5 = arith.constant 0 : index
    %c0_6 = arith.constant 0 : index
    %7 = vector.load %arg8[%c0_5, %c0_6] : memref<12x64xf32, #tpu.memory_space<vmem>>, vector<12x64xf32>
    tpu.vector_store %arg8[%c0_5, %c0_6], %6 {strides = array<i32>} : memref<12x64xf32, #tpu.memory_space<vmem>>, vector<12x64xf32>,
    %c0_7 = arith.constant 0 : index
    %c0_8 = arith.constant 0 : index
    %8 = vector.load %arg9[%c0_7, %c0_8] : memref<12x64xf32, #tpu.memory_space<vmem>>, vector<12x64xf32>
    %9 = arith.mulf %3, %3 : vector<2x12x64xf32>
    %cst_9 = arith.constant dense<0.000000e+00> : vector<12x64xf32>
    %10 = vector.multi_reduction <add>, %9, %cst_9 [0] : vector<2x12x64xf32> to vector<12x64xf32>
    %11 = arith.addf %8, %10 : vector<12x64xf32>
    %c0_10 = arith.constant 0 : index
    %c0_11 = arith.constant 0 : index
    %12 = vector.load %arg9[%c0_10, %c0_11] : memref<12x64xf32, #tpu.memory_space<vmem>>, vector<12x64xf32>
    tpu.vector_store %arg9[%c0_10, %c0_11], %11 {strides = array<i32>} : memref<12x64xf32, #tpu.memory_space<vmem>>, vector<12x64xf32>,
    %c0_12 = arith.constant 0 : index
    %c0_13 = arith.constant 0 : index
    %c0_14 = arith.constant 0 : index
    %13 = vector.load %arg1[%c0_12, %c0_13, %c0_14] : memref<2x12x64xf32, #tpu.memory_space<vmem>>, vector<2x1x64xf32>
    %14 = vector.shape_cast %13 : vector<2x1x64xf32> to vector<2x64xf32>
    %c0_15 = arith.constant 0 : index
    %c0_16 = arith.constant 0 : index
    %c0_17 = arith.constant 0 : index
    %15 = vector.load %arg4[%c0_15, %c0_16, %c0_17] : memref<10x12x64xf32, #tpu.memory_space<vmem>>, vector<10x1x64xf32>
    %16 = vector.shape_cast %15 : vector<10x1x64xf32> to vector<10x64xf32>
    %cst_18 = arith.constant dense<0.000000e+00> : vector<2x10xf32>
    %17 = tpu.matmul %14, %16, %cst_18 {dimension_numbers = #tpu.dot_dimension_numbers<[1], [1], [0], [0], [0, 0, 1, 0], [], []>, precision = #tpu.contract_precision<fp32>} : vector<2x64xf32>, vector<10x64xf32>, vector<2x10xf32> -> vector<2x10xf32>
    %c0_19 = arith.constant 0 : index
    %c0_20 = arith.constant 0 : index
    %c0_21 = arith.constant 0 : index
    %18 = vector.load %arg5[%c0_19, %c0_20, %c0_21] : memref<12x2x10xf32, #tpu.memory_space<vmem>>, vector<1x2x10xf32>
    %19 = vector.shape_cast %18 : vector<1x2x10xf32> to vector<2x10xf32>
    %20 = vector.shape_cast %17 : vector<2x10xf32> to vector<1x2x10xf32>
    tpu.vector_store %arg5[%c0_19, %c0_20, %c0_21], %20 {strides = array<i32>} : memref<12x2x10xf32, #tpu.memory_space<vmem>>, vector<1x2x10xf32>,
    %c0_22 = arith.constant 0 : index
    %c1 = arith.constant 1 : index
    %c0_23 = arith.constant 0 : index
    %21 = vector.load %arg1[%c0_22, %c1, %c0_23] : memref<2x12x64xf32, #tpu.memory_space<vmem>>, vector<2x1x64xf32>
    %22 = vector.shape_cast %21 : vector<2x1x64xf32> to vector<2x64xf32>
    %c0_24 = arith.constant 0 : index
    %c1_25 = arith.constant 1 : index
    %c0_26 = arith.constant 0 : index
    %23 = vector.load %arg4[%c0_24, %c1_25, %c0_26] : memref<10x12x64xf32, #tpu.memory_space<vmem>>, vector<10x1x64xf32>
    %24 = vector.shape_cast %23 : vector<10x1x64xf32> to vector<10x64xf32>
    %cst_27 = arith.constant dense<0.000000e+00> : vector<2x10xf32>
    %25 = tpu.matmul %22, %24, %cst_27 {dimension_numbers = #tpu.dot_dimension_numbers<[1], [1], [0], [0], [0, 0, 1, 0], [], []>, precision = #tpu.contract_precision<fp32>} : vector<2x64xf32>, vector<10x64xf32>, vector<2x10xf32> -> vector<2x10xf32>
    %c1_28 = arith.constant 1 : index
    %c0_29 = arith.constant 0 : index
    %c0_30 = arith.constant 0 : index
    %26 = vector.load %arg5[%c1_28, %c0_29, %c0_30] : memref<12x2x10xf32, #tpu.memory_space<vmem>>, vector<1x2x10xf32>
    %27 = vector.shape_cast %26 : vector<1x2x10xf32> to vector<2x10xf32>
    %28 = vector.shape_cast %25 : vector<2x10xf32> to vector<1x2x10xf32>
    tpu.vector_store %arg5[%c1_28, %c0_29, %c0_30], %28 {strides = array<i32>} : memref<12x2x10xf32, #tpu.memory_space<vmem>>, vector<1x2x10xf32>,
    %c0_31 = arith.constant 0 : index
    %c2 = arith.constant 2 : index
    %c0_32 = arith.constant 0 : index
    %29 = vector.load %arg1[%c0_31, %c2, %c0_32] : memref<2x12x64xf32, #tpu.memory_space<vmem>>, vector<2x1x64xf32>
    %30 = vector.shape_cast %29 : vector<2x1x64xf32> to vector<2x64xf32>
    %c0_33 = arith.constant 0 : index
    %c2_34 = arith.constant 2 : index
    %c0_35 = arith.constant 0 : index
    %31 = vector.load %arg4[%c0_33, %c2_34, %c0_35] : memref<10x12x64xf32, #tpu.memory_space<vmem>>, vector<10x1x64xf32>
    %32 = vector.shape_cast %31 : vector<10x1x64xf32> to vector<10x64xf32>
    %cst_36 = arith.constant dense<0.000000e+00> : vector<2x10xf32>
    %33 = tpu.matmul %30, %32, %cst_36 {dimension_numbers = #tpu.dot_dimension_numbers<[1], [1], [0], [0], [0, 0, 1, 0], [], []>, precision = #tpu.contract_precision<fp32>} : vector<2x64xf32>, vector<10x64xf32>, vector<2x10xf32> -> vector<2x10xf32>
    %c2_37 = arith.constant 2 : index
    %c0_38 = arith.constant 0 : index
    %c0_39 = arith.constant 0 : index
    %34 = vector.load %arg5[%c2_37, %c0_38, %c0_39] : memref<12x2x10xf32, #tpu.memory_space<vmem>>, vector<1x2x10xf32>
    %35 = vector.shape_cast %34 : vector<1x2x10xf32> to vector<2x10xf32>
    %36 = vector.shape_cast %33 : vector<2x10xf32> to vector<1x2x10xf32>
    tpu.vector_store %arg5[%c2_37, %c0_38, %c0_39], %36 {strides = array<i32>} : memref<12x2x10xf32, #tpu.memory_space<vmem>>, vector<1x2x10xf32>,
    %c0_40 = arith.constant 0 : index
    %c3 = arith.constant 3 : index
    %c0_41 = arith.constant 0 : index
    %37 = vector.load %arg1[%c0_40, %c3, %c0_41] : memref<2x12x64xf32, #tpu.memory_space<vmem>>, vector<2x1x64xf32>
    %38 = vector.shape_cast %37 : vector<2x1x64xf32> to vector<2x64xf32>
    %c0_42 = arith.constant 0 : index
    %c3_43 = arith.constant 3 : index
    %c0_44 = arith.constant 0 : index
    %39 = vector.load %arg4[%c0_42, %c3_43, %c0_44] : memref<10x12x64xf32, #tpu.memory_space<vmem>>, vector<10x1x64xf32>
    %40 = vector.shape_cast %39 : vector<10x1x64xf32> to vector<10x64xf32>
    %cst_45 = arith.constant dense<0.000000e+00> : vector<2x10xf32>
    %41 = tpu.matmul %38, %40, %cst_45 {dimension_numbers = #tpu.dot_dimension_numbers<[1], [1], [0], [0], [0, 0, 1, 0], [], []>, precision = #tpu.contract_precision<fp32>} : vector<2x64xf32>, vector<10x64xf32>, vector<2x10xf32> -> vector<2x10xf32>
    %c3_46 = arith.constant 3 : index
    %c0_47 = arith.constant 0 : index
    %c0_48 = arith.constant 0 : index
    %42 = vector.load %arg5[%c3_46, %c0_47, %c0_48] : memref<12x2x10xf32, #tpu.memory_space<vmem>>, vector<1x2x10xf32>
    %43 = vector.shape_cast %42 : vector<1x2x10xf32> to vector<2x10xf32>
    %44 = vector.shape_cast %41 : vector<2x10xf32> to vector<1x2x10xf32>
    tpu.vector_store %arg5[%c3_46, %c0_47, %c0_48], %44 {strides = array<i32>} : memref<12x2x10xf32, #tpu.memory_space<vmem>>, vector<1x2x10xf32>,
    %c0_49 = arith.constant 0 : index
    %c4 = arith.constant 4 : index
    %c0_50 = arith.constant 0 : index
    %45 = vector.load %arg1[%c0_49, %c4, %c0_50] : memref<2x12x64xf32, #tpu.memory_space<vmem>>, vector<2x1x64xf32>
    %46 = vector.shape_cast %45 : vector<2x1x64xf32> to vector<2x64xf32>
    %c0_51 = arith.constant 0 : index
    %c4_52 = arith.constant 4 : index
    %c0_53 = arith.constant 0 : index
    %47 = vector.load %arg4[%c0_51, %c4_52, %c0_53] : memref<10x12x64xf32, #tpu.memory_space<vmem>>, vector<10x1x64xf32>
    %48 = vector.shape_cast %47 : vector<10x1x64xf32> to vector<10x64xf32>
    %cst_54 = arith.constant dense<0.000000e+00> : vector<2x10xf32>
    %49 = tpu.matmul %46, %48, %cst_54 {dimension_numbers = #tpu.dot_dimension_numbers<[1], [1], [0], [0], [0, 0, 1, 0], [], []>, precision = #tpu.contract_precision<fp32>} : vector<2x64xf32>, vector<10x64xf32>, vector<2x10xf32> -> vector<2x10xf32>
    %c4_55 = arith.constant 4 : index
    %c0_56 = arith.constant 0 : index
    %c0_57 = arith.constant 0 : index
    %50 = vector.load %arg5[%c4_55, %c0_56, %c0_57] : memref<12x2x10xf32, #tpu.memory_space<vmem>>, vector<1x2x10xf32>
    %51 = vector.shape_cast %50 : vector<1x2x10xf32> to vector<2x10xf32>
    %52 = vector.shape_cast %49 : vector<2x10xf32> to vector<1x2x10xf32>
    tpu.vector_store %arg5[%c4_55, %c0_56, %c0_57], %52 {strides = array<i32>} : memref<12x2x10xf32, #tpu.memory_space<vmem>>, vector<1x2x10xf32>,
    %c0_58 = arith.constant 0 : index
    %c5 = arith.constant 5 : index
    %c0_59 = arith.constant 0 : index
    %53 = vector.load %arg1[%c0_58, %c5, %c0_59] : memref<2x12x64xf32, #tpu.memory_space<vmem>>, vector<2x1x64xf32>
    %54 = vector.shape_cast %53 : vector<2x1x64xf32> to vector<2x64xf32>
    %c0_60 = arith.constant 0 : index
    %c5_61 = arith.constant 5 : index
    %c0_62 = arith.constant 0 : index
    %55 = vector.load %arg4[%c0_60, %c5_61, %c0_62] : memref<10x12x64xf32, #tpu.memory_space<vmem>>, vector<10x1x64xf32>
    %56 = vector.shape_cast %55 : vector<10x1x64xf32> to vector<10x64xf32>
    %cst_63 = arith.constant dense<0.000000e+00> : vector<2x10xf32>
    %57 = tpu.matmul %54, %56, %cst_63 {dimension_numbers = #tpu.dot_dimension_numbers<[1], [1], [0], [0], [0, 0, 1, 0], [], []>, precision = #tpu.contract_precision<fp32>} : vector<2x64xf32>, vector<10x64xf32>, vector<2x10xf32> -> vector<2x10xf32>
    %c5_64 = arith.constant 5 : index
    %c0_65 = arith.constant 0 : index
    %c0_66 = arith.constant 0 : index
    %58 = vector.load %arg5[%c5_64, %c0_65, %c0_66] : memref<12x2x10xf32, #tpu.memory_space<vmem>>, vector<1x2x10xf32>
    %59 = vector.shape_cast %58 : vector<1x2x10xf32> to vector<2x10xf32>
    %60 = vector.shape_cast %57 : vector<2x10xf32> to vector<1x2x10xf32>
    tpu.vector_store %arg5[%c5_64, %c0_65, %c0_66], %60 {strides = array<i32>} : memref<12x2x10xf32, #tpu.memory_space<vmem>>, vector<1x2x10xf32>,
    %c0_67 = arith.constant 0 : index
    %c6 = arith.constant 6 : index
    %c0_68 = arith.constant 0 : index
    %61 = vector.load %arg1[%c0_67, %c6, %c0_68] : memref<2x12x64xf32, #tpu.memory_space<vmem>>, vector<2x1x64xf32>
    %62 = vector.shape_cast %61 : vector<2x1x64xf32> to vector<2x64xf32>
    %c0_69 = arith.constant 0 : index
    %c6_70 = arith.constant 6 : index
    %c0_71 = arith.constant 0 : index
    %63 = vector.load %arg4[%c0_69, %c6_70, %c0_71] : memref<10x12x64xf32, #tpu.memory_space<vmem>>, vector<10x1x64xf32>
    %64 = vector.shape_cast %63 : vector<10x1x64xf32> to vector<10x64xf32>
    %cst_72 = arith.constant dense<0.000000e+00> : vector<2x10xf32>
    %65 = tpu.matmul %62, %64, %cst_72 {dimension_numbers = #tpu.dot_dimension_numbers<[1], [1], [0], [0], [0, 0, 1, 0], [], []>, precision = #tpu.contract_precision<fp32>} : vector<2x64xf32>, vector<10x64xf32>, vector<2x10xf32> -> vector<2x10xf32>
    %c6_73 = arith.constant 6 : index
    %c0_74 = arith.constant 0 : index
    %c0_75 = arith.constant 0 : index
    %66 = vector.load %arg5[%c6_73, %c0_74, %c0_75] : memref<12x2x10xf32, #tpu.memory_space<vmem>>, vector<1x2x10xf32>
    %67 = vector.shape_cast %66 : vector<1x2x10xf32> to vector<2x10xf32>
    %68 = vector.shape_cast %65 : vector<2x10xf32> to vector<1x2x10xf32>
    tpu.vector_store %arg5[%c6_73, %c0_74, %c0_75], %68 {strides = array<i32>} : memref<12x2x10xf32, #tpu.memory_space<vmem>>, vector<1x2x10xf32>,
    %c0_76 = arith.constant 0 : index
    %c7 = arith.constant 7 : index
    %c0_77 = arith.constant 0 : index
    %69 = vector.load %arg1[%c0_76, %c7, %c0_77] : memref<2x12x64xf32, #tpu.memory_space<vmem>>, vector<2x1x64xf32>
    %70 = vector.shape_cast %69 : vector<2x1x64xf32> to vector<2x64xf32>
    %c0_78 = arith.constant 0 : index
    %c7_79 = arith.constant 7 : index
    %c0_80 = arith.constant 0 : index
    %71 = vector.load %arg4[%c0_78, %c7_79, %c0_80] : memref<10x12x64xf32, #tpu.memory_space<vmem>>, vector<10x1x64xf32>
    %72 = vector.shape_cast %71 : vector<10x1x64xf32> to vector<10x64xf32>
    %cst_81 = arith.constant dense<0.000000e+00> : vector<2x10xf32>
    %73 = tpu.matmul %70, %72, %cst_81 {dimension_numbers = #tpu.dot_dimension_numbers<[1], [1], [0], [0], [0, 0, 1, 0], [], []>, precision = #tpu.contract_precision<fp32>} : vector<2x64xf32>, vector<10x64xf32>, vector<2x10xf32> -> vector<2x10xf32>
    %c7_82 = arith.constant 7 : index
    %c0_83 = arith.constant 0 : index
    %c0_84 = arith.constant 0 : index
    %74 = vector.load %arg5[%c7_82, %c0_83, %c0_84] : memref<12x2x10xf32, #tpu.memory_space<vmem>>, vector<1x2x10xf32>
    %75 = vector.shape_cast %74 : vector<1x2x10xf32> to vector<2x10xf32>
    %76 = vector.shape_cast %73 : vector<2x10xf32> to vector<1x2x10xf32>
    tpu.vector_store %arg5[%c7_82, %c0_83, %c0_84], %76 {strides = array<i32>} : memref<12x2x10xf32, #tpu.memory_space<vmem>>, vector<1x2x10xf32>,
    %c0_85 = arith.constant 0 : index
    %c8 = arith.constant 8 : index
    %c0_86 = arith.constant 0 : index
    %77 = vector.load %arg1[%c0_85, %c8, %c0_86] : memref<2x12x64xf32, #tpu.memory_space<vmem>>, vector<2x1x64xf32>
    %78 = vector.shape_cast %77 : vector<2x1x64xf32> to vector<2x64xf32>
    %c0_87 = arith.constant 0 : index
    %c8_88 = arith.constant 8 : index
    %c0_89 = arith.constant 0 : index
    %79 = vector.load %arg4[%c0_87, %c8_88, %c0_89] : memref<10x12x64xf32, #tpu.memory_space<vmem>>, vector<10x1x64xf32>
    %80 = vector.shape_cast %79 : vector<10x1x64xf32> to vector<10x64xf32>
    %cst_90 = arith.constant dense<0.000000e+00> : vector<2x10xf32>
    %81 = tpu.matmul %78, %80, %cst_90 {dimension_numbers = #tpu.dot_dimension_numbers<[1], [1], [0], [0], [0, 0, 1, 0], [], []>, precision = #tpu.contract_precision<fp32>} : vector<2x64xf32>, vector<10x64xf32>, vector<2x10xf32> -> vector<2x10xf32>
    %c8_91 = arith.constant 8 : index
    %c0_92 = arith.constant 0 : index
    %c0_93 = arith.constant 0 : index
    %82 = vector.load %arg5[%c8_91, %c0_92, %c0_93] : memref<12x2x10xf32, #tpu.memory_space<vmem>>, vector<1x2x10xf32>
    %83 = vector.shape_cast %82 : vector<1x2x10xf32> to vector<2x10xf32>
    %84 = vector.shape_cast %81 : vector<2x10xf32> to vector<1x2x10xf32>
    tpu.vector_store %arg5[%c8_91, %c0_92, %c0_93], %84 {strides = array<i32>} : memref<12x2x10xf32, #tpu.memory_space<vmem>>, vector<1x2x10xf32>,
    %c0_94 = arith.constant 0 : index
    %c9 = arith.constant 9 : index
    %c0_95 = arith.constant 0 : index
    %85 = vector.load %arg1[%c0_94, %c9, %c0_95] : memref<2x12x64xf32, #tpu.memory_space<vmem>>, vector<2x1x64xf32>
    %86 = vector.shape_cast %85 : vector<2x1x64xf32> to vector<2x64xf32>
    %c0_96 = arith.constant 0 : index
    %c9_97 = arith.constant 9 : index
    %c0_98 = arith.constant 0 : index
    %87 = vector.load %arg4[%c0_96, %c9_97, %c0_98] : memref<10x12x64xf32, #tpu.memory_space<vmem>>, vector<10x1x64xf32>
    %88 = vector.shape_cast %87 : vector<10x1x64xf32> to vector<10x64xf32>
    %cst_99 = arith.constant dense<0.000000e+00> : vector<2x10xf32>
    %89 = tpu.matmul %86, %88, %cst_99 {dimension_numbers = #tpu.dot_dimension_numbers<[1], [1], [0], [0], [0, 0, 1, 0], [], []>, precision = #tpu.contract_precision<fp32>} : vector<2x64xf32>, vector<10x64xf32>, vector<2x10xf32> -> vector<2x10xf32>
    %c9_100 = arith.constant 9 : index
    %c0_101 = arith.constant 0 : index
    %c0_102 = arith.constant 0 : index
    %90 = vector.load %arg5[%c9_100, %c0_101, %c0_102] : memref<12x2x10xf32, #tpu.memory_space<vmem>>, vector<1x2x10xf32>
    %91 = vector.shape_cast %90 : vector<1x2x10xf32> to vector<2x10xf32>
    %92 = vector.shape_cast %89 : vector<2x10xf32> to vector<1x2x10xf32>
    tpu.vector_store %arg5[%c9_100, %c0_101, %c0_102], %92 {strides = array<i32>} : memref<12x2x10xf32, #tpu.memory_space<vmem>>, vector<1x2x10xf32>,
    %c0_103 = arith.constant 0 : index
    %c10 = arith.constant 10 : index
    %c0_104 = arith.constant 0 : index
    %93 = vector.load %arg1[%c0_103, %c10, %c0_104] : memref<2x12x64xf32, #tpu.memory_space<vmem>>, vector<2x1x64xf32>
    %94 = vector.shape_cast %93 : vector<2x1x64xf32> to vector<2x64xf32>
    %c0_105 = arith.constant 0 : index
    %c10_106 = arith.constant 10 : index
    %c0_107 = arith.constant 0 : index
    %95 = vector.load %arg4[%c0_105, %c10_106, %c0_107] : memref<10x12x64xf32, #tpu.memory_space<vmem>>, vector<10x1x64xf32>
    %96 = vector.shape_cast %95 : vector<10x1x64xf32> to vector<10x64xf32>
    %cst_108 = arith.constant dense<0.000000e+00> : vector<2x10xf32>
    %97 = tpu.matmul %94, %96, %cst_108 {dimension_numbers = #tpu.dot_dimension_numbers<[1], [1], [0], [0], [0, 0, 1, 0], [], []>, precision = #tpu.contract_precision<fp32>} : vector<2x64xf32>, vector<10x64xf32>, vector<2x10xf32> -> vector<2x10xf32>
    %c10_109 = arith.constant 10 : index
    %c0_110 = arith.constant 0 : index
    %c0_111 = arith.constant 0 : index
    %98 = vector.load %arg5[%c10_109, %c0_110, %c0_111] : memref<12x2x10xf32, #tpu.memory_space<vmem>>, vector<1x2x10xf32>
    %99 = vector.shape_cast %98 : vector<1x2x10xf32> to vector<2x10xf32>
    %100 = vector.shape_cast %97 : vector<2x10xf32> to vector<1x2x10xf32>
    tpu.vector_store %arg5[%c10_109, %c0_110, %c0_111], %100 {strides = array<i32>} : memref<12x2x10xf32, #tpu.memory_space<vmem>>, vector<1x2x10xf32>,
    %c0_112 = arith.constant 0 : index
    %c11 = arith.constant 11 : index
    %c0_113 = arith.constant 0 : index
    %101 = vector.load %arg1[%c0_112, %c11, %c0_113] : memref<2x12x64xf32, #tpu.memory_space<vmem>>, vector<2x1x64xf32>
    %102 = vector.shape_cast %101 : vector<2x1x64xf32> to vector<2x64xf32>
    %c0_114 = arith.constant 0 : index
    %c11_115 = arith.constant 11 : index
    %c0_116 = arith.constant 0 : index
    %103 = vector.load %arg4[%c0_114, %c11_115, %c0_116] : memref<10x12x64xf32, #tpu.memory_space<vmem>>, vector<10x1x64xf32>
    %104 = vector.shape_cast %103 : vector<10x1x64xf32> to vector<10x64xf32>
    %cst_117 = arith.constant dense<0.000000e+00> : vector<2x10xf32>
    %105 = tpu.matmul %102, %104, %cst_117 {dimension_numbers = #tpu.dot_dimension_numbers<[1], [1], [0], [0], [0, 0, 1, 0], [], []>, precision = #tpu.contract_precision<fp32>} : vector<2x64xf32>, vector<10x64xf32>, vector<2x10xf32> -> vector<2x10xf32>
    %c11_118 = arith.constant 11 : index
    %c0_119 = arith.constant 0 : index
    %c0_120 = arith.constant 0 : index
    %106 = vector.load %arg5[%c11_118, %c0_119, %c0_120] : memref<12x2x10xf32, #tpu.memory_space<vmem>>, vector<1x2x10xf32>
    %107 = vector.shape_cast %106 : vector<1x2x10xf32> to vector<2x10xf32>
    %108 = vector.shape_cast %105 : vector<2x10xf32> to vector<1x2x10xf32>
    tpu.vector_store %arg5[%c11_118, %c0_119, %c0_120], %108 {strides = array<i32>} : memref<12x2x10xf32, #tpu.memory_space<vmem>>, vector<1x2x10xf32>,
    %c0_i32_121 = arith.constant 0 : i32
    %109 = arith.cmpi eq, %arg0, %c0_i32_121 : i32
    %110 = arith.extui %109 : i1 to i32
    %c0_i32_122 = arith.constant 0 : i32
    %111 = arith.cmpi ne, %110, %c0_i32_122 : i32
    scf.if %111 {
      %c0_123 = arith.constant 0 : index
      %c0_124 = arith.constant 0 : index
      %112 = vector.load %arg8[%c0_123, %c0_124] : memref<12x64xf32, #tpu.memory_space<vmem>>, vector<12x64xf32>
      %cst_125 = arith.constant dense<0.000000e+00> : vector<12xf32>
      %113 = vector.multi_reduction <add>, %112, %cst_125 [1] : vector<12x64xf32> to vector<12xf32>
      %114 = vector.shape_cast %113 : vector<12xf32> to vector<12x1xf32>
      %cst_126 = arith.constant 7.812500e-03 : f32
      %115 = vector.broadcast %cst_126 : f32 to vector<12x1xf32>
      %116 = arith.mulf %114, %115 : vector<12x1xf32>
      %c0_127 = arith.constant 0 : index
      %c0_128 = arith.constant 0 : index
      %117 = vector.load %arg9[%c0_127, %c0_128] : memref<12x64xf32, #tpu.memory_space<vmem>>, vector<12x64xf32>
      %cst_129 = arith.constant dense<0.000000e+00> : vector<12xf32>
      %118 = vector.multi_reduction <add>, %117, %cst_129 [1] : vector<12x64xf32> to vector<12xf32>
      %119 = vector.shape_cast %118 : vector<12xf32> to vector<12x1xf32>
      %cst_130 = arith.constant 7.812500e-03 : f32
      %120 = vector.broadcast %cst_130 : f32 to vector<12x1xf32>
      %121 = arith.mulf %119, %120 : vector<12x1xf32>
      %122 = arith.mulf %116, %116 : vector<12x1xf32>
      %123 = arith.subf %121, %122 : vector<12x1xf32>
      %cst_131 = arith.constant 0.000000e+00 : f32
      %124 = vector.broadcast %cst_131 : f32 to vector<12x1xf32>
      %125 = arith.maximumf %123, %124 : vector<12x1xf32>
      %c0_132 = arith.constant 0 : index
      %c0_133 = arith.constant 0 : index
      %126 = vector.load %arg2[%c0_132, %c0_133] : memref<12x1xf32, #tpu.memory_space<vmem>>, vector<12x1xf32>
      %cst_134 = arith.constant 9.99999974E-6 : f32
      %127 = vector.broadcast %cst_134 : f32 to vector<12x1xf32>
      %128 = arith.addf %125, %127 : vector<12x1xf32>
      %129 = math.rsqrt %128 : vector<12x1xf32>
      %130 = arith.mulf %126, %129 : vector<12x1xf32>
      %c0_135 = arith.constant 0 : index
      %c0_136 = arith.constant 0 : index
      %131 = vector.load %arg6[%c0_135, %c0_136] : memref<12x1xf32, #tpu.memory_space<vmem>>, vector<12x1xf32>
      tpu.vector_store %arg6[%c0_135, %c0_136], %130 {strides = array<i32>} : memref<12x1xf32, #tpu.memory_space<vmem>>, vector<12x1xf32>,
      %c0_137 = arith.constant 0 : index
      %c0_138 = arith.constant 0 : index
      %132 = vector.load %arg3[%c0_137, %c0_138] : memref<12x1xf32, #tpu.memory_space<vmem>>, vector<12x1xf32>
      %133 = arith.mulf %116, %130 : vector<12x1xf32>
      %134 = arith.subf %132, %133 : vector<12x1xf32>
      %c0_139 = arith.constant 0 : index
      %c0_140 = arith.constant 0 : index
      %135 = vector.load %arg7[%c0_139, %c0_140] : memref<12x1xf32, #tpu.memory_space<vmem>>, vector<12x1xf32>
      tpu.vector_store %arg7[%c0_139, %c0_140], %134 {strides = array<i32>} : memref<12x1xf32, #tpu.memory_space<vmem>>, vector<12x1xf32>,
    } else {
    }
    return
  }
  func.func @transform_0(%arg0: i32) -> (i32, i32, i32) {
    %c0_i32 = arith.constant 0 : i32
    %c0_i32_0 = arith.constant 0 : i32
    %c0_i32_1 = arith.constant 0 : i32
    return %arg0, %c0_i32, %c0_i32_0 : i32, i32, i32
  }
  func.func @transform_1(%arg0: i32) -> (i32, i32) {
    %c0_i32 = arith.constant 0 : i32
    %c0_i32_0 = arith.constant 0 : i32
    %c0_i32_1 = arith.constant 0 : i32
    return %c0_i32, %c0_i32_0 : i32, i32
  }
  func.func @transform_2(%arg0: i32) -> (i32, i32) {
    %c0_i32 = arith.constant 0 : i32
    %c0_i32_0 = arith.constant 0 : i32
    %c0_i32_1 = arith.constant 0 : i32
    return %c0_i32, %c0_i32_0 : i32, i32
  }
  func.func @transform_3(%arg0: i32) -> (i32, i32, i32) {
    %c0_i32 = arith.constant 0 : i32
    %c0_i32_0 = arith.constant 0 : i32
    %c0_i32_1 = arith.constant 0 : i32
    %c0_i32_2 = arith.constant 0 : i32
    return %c0_i32, %c0_i32_0, %c0_i32_1 : i32, i32, i32
  }
  func.func @transform_4(%arg0: i32) -> (i32, i32, i32) {
    %c0_i32 = arith.constant 0 : i32
    %c0_i32_0 = arith.constant 0 : i32
    %c0_i32_1 = arith.constant 0 : i32
    return %c0_i32, %arg0, %c0_i32_0 : i32, i32, i32
  }
  func.func @transform_5(%arg0: i32) -> (i32, i32) {
    %c0_i32 = arith.constant 0 : i32
    %c0_i32_0 = arith.constant 0 : i32
    %c0_i32_1 = arith.constant 0 : i32
    return %c0_i32, %c0_i32_0 : i32, i32
  }
  func.func @transform_6(%arg0: i32) -> (i32, i32) {
    %c0_i32 = arith.constant 0 : i32
    %c0_i32_0 = arith.constant 0 : i32
    %c0_i32_1 = arith.constant 0 : i32
    return %c0_i32, %c0_i32_0 : i32, i32
  }
}

</mosaic_0001>

<llo_original>
// kernel: tpu_custom_call.1
$region0: #{tpu_custom_call.1}
  #allocation0 [shape = 'u32[]', space=smem, size = 0x4, offset = 0x4, fixed_abs, tag = 'smem constant byte address 0x4 - core index']
  #allocation1 [shape = 'u32[72,128]{1,0:T(1,128)}', space=vmem, size = 0x9000, scoped, tag = 'internal scratch']
  #allocation2 [shape = 'f32[12,64]{1,0:T(8,128)}', space=vmem, size = 0x2000, scoped, tag = 'scratch operand']
  #allocation3 [shape = 'f32[12,64]{1,0:T(8,128)}', space=vmem, size = 0x2000, scoped, tag = 'scratch operand']
  %s0 = inlined_call_operand.vmem [shape: f32[2,12,64], index: 0, kind: input, shape index: {}]
  %s1 = inlined_call_operand.vmem [shape: f32[12,1], index: 1, kind: input, shape index: {}]
  %s2 = inlined_call_operand.vmem [shape: f32[12,1], index: 2, kind: input, shape index: {}]
  %s3 = inlined_call_operand.hbm [shape: f32[10,12,64], index: 3, kind: input, shape index: {}]
  %s4 = inlined_call_operand.vmem [shape: f32[12,2,10], index: 4, kind: output, shape index: {0}]
  %s5 = inlined_call_operand.vmem [shape: f32[12,1], index: 5, kind: output, shape index: {1}]
  %s6 = inlined_call_operand.vmem [shape: f32[12,1], index: 6, kind: output, shape index: {2}]
  %7 = xla_tuple %s4, %s5, %s6
  %s8 = sld [smem:[#allocation0]]
  $region54: #{tpu_custom_call.1} parent=0
    _
  %s10 = ssub.s32 1, %s8
  %s11 = scalar_select 0, %s10, %s8
  $region1: #{tpu_custom_call.1} parent=0
    #allocation4 [shape = 'u8[81920]{0}', space=vmem, size = 0x14000, scoped, tag = 'input window, operand 3, single buffered']
    #allocation5 [shape = 's32[1]{0}', space=sflag, size = 0x4, scoped, tag = 'scoped memory for tpu_custom_call.1']
    %12 = vsyncpa [#allocation5], 0
    // Predicated region
    $region2: #{tpu_custom_call.1} parent=1 // pred_check
      _
    $region3: #{tpu_custom_call.1} parent=1 // pred_check_branch
      %14 = sbr.rel (0) target = $region5
    $region4: #{tpu_custom_call.1} parent=1 // pred_region
      _
    $region5: #{tpu_custom_call.1} parent=1 // pred_fallthru
      _
    // Predicated region
    $region6: #{tpu_custom_call.1} parent=1 // pred_check
      _
    $region7: #{tpu_custom_call.1} parent=1 // pred_check_branch
      %16 = sbr.rel (0) target = $region9
    $region8: #{tpu_custom_call.1} parent=1 // pred_region
      _
    $region9: #{tpu_custom_call.1} parent=1 // pred_fallthru
      _
    // Predicated region
    $region10: #{tpu_custom_call.1} parent=1 // pred_check
      _
    $region11: #{tpu_custom_call.1} parent=1 // pred_check_branch
      %18 = sbr.rel (0) target = $region13
    $region12: #{tpu_custom_call.1} parent=1 // pred_region
      _
    $region13: #{tpu_custom_call.1} parent=1 // pred_fallthru
      _
    // Predicated region
    $region14: #{tpu_custom_call.1} parent=1 // pred_check
      _
    $region15: #{tpu_custom_call.1} parent=1 // pred_check_branch
      %20 = sbr.rel (0) target = $region17
    $region16: #{tpu_custom_call.1} parent=1 // pred_region
      %22 = vsyncadd [#allocation5], 0
      %s23 = sshll.u32 %s3, 4
      %s24 = int_to_ptr.hbm [resolvable:$true] %s23
      %s25 = sshll.u32 [#allocation4], 4
      %s26 = int_to_ptr.vmem [resolvable:$true] %s25
      %31 = dma.hbm_to_vmem [thread:$0]  %s24, 2560, %s26, [#allocation5], 128, 128, 8
    $region17: #{tpu_custom_call.1} parent=1 // pred_fallthru
      _
    // Predicated region
    $region18: #{tpu_custom_call.1} parent=1 // pred_check
      _
    $region19: #{tpu_custom_call.1} parent=1 // pred_check_branch
      %33 = sbr.rel (0) target = $region21
    $region20: #{tpu_custom_call.1} parent=1 // pred_region
      %35 = dma.done [#allocation5], 2560
    $region21: #{tpu_custom_call.1} parent=1 // pred_fallthru
      _
    %p36 = scmp.eq.s32.totalorder 0, 0
    // Predicated region
    $region22: #{tpu_custom_call.1} parent=1 // pred_check
      %p37 = pneg %p36
    $region23: #{tpu_custom_call.1} parent=1 // pred_check_branch
      %39 = sbr.rel (%p37) target = $region25
    $region24: #{tpu_custom_call.1} parent=1 // pred_region
      %vm40 = vcmask 523264
      %41 = vst.msk [vmem:[#allocation2] sm:$0xff] %vm40, 0.0
      %vm42 = vcmask 519168
      %43 = vst.msk [vmem:[#allocation2 + $0x8] sm:$0xf] %vm42, 0.0
      %44 = vst.msk [vmem:[#allocation3] sm:$0xff] %vm40, 0.0
      %45 = vst.msk [vmem:[#allocation3 + $0x8] sm:$0xf] %vm42, 0.0
    $region25: #{tpu_custom_call.1} parent=1 // pred_fallthru
      _
    %v46 = vld [vmem:[%s0] sm:$0xff]
    %v47 = vld [vmem:[%s0 + $0x8] sm:$0xf]
    %v48 = vld [vmem:[%s0 + $0x10] sm:$0xff]
    %v49 = vld [vmem:[%s0 + $0x18] sm:$0xf]
    %v50 = vld [vmem:[#allocation2] sm:$0xff]
    %v51 = vld [vmem:[#allocation2 + $0x8] sm:$0xf]
    %vm52 = vcmask 523264
    %v53 = vsel %vm52, %v46, 0.0
    %v54 = vsel %vm52, %v48, 0.0
    %v55 = vadd.f32 %v53, %v54
    %vm56 = vcmask 519168
    %v57 = vsel %vm56, %v47, 0.0
    %v58 = vsel %vm56, %v49, 0.0
    %v59 = vadd.f32 %v57, %v58
    %v60 = vadd.f32 %v50, %v55
    %v61 = vadd.f32 %v51, %v59
    %62 = vst.msk [vmem:[#allocation2] sm:$0xff] %vm52, %v60
    %63 = vst.msk [vmem:[#allocation2 + $0x8] sm:$0xf] %vm56, %v61
    %v64 = vld [vmem:[#allocation3] sm:$0xff]
    %v65 = vld [vmem:[#allocation3 + $0x8] sm:$0xf]
    %v66 = vmul.f32 %v46, %v46
    %v67 = vmul.f32 %v47, %v47
    %v68 = vmul.f32 %v48, %v48
    %v69 = vmul.f32 %v49, %v49
    %v70 = vsel %vm52, %v66, 0.0
    %v71 = vsel %vm52, %v68, 0.0
    %v72 = vadd.f32 %v70, %v71
    %v73 = vsel %vm56, %v67, 0.0
    %v74 = vsel %vm56, %v69, 0.0
    %v75 = vadd.f32 %v73, %v74
    %v76 = vadd.f32 %v64, %v72
    %v77 = vadd.f32 %v65, %v75
    %78 = vst.msk [vmem:[#allocation3] sm:$0xff] %vm52, %v76
    %79 = vst.msk [vmem:[#allocation3 + $0x8] sm:$0xf] %vm56, %v77
    %v80 = vld [vmem:[%s0] sm:$0x1]
    %v81 = vld [vmem:[%s0 + $0x10] sm:$0x1]
    %v82 = vld [vmem:[#allocation4] sm:$0x1]
    %v83 = vld [vmem:[#allocation4 + $0x10] sm:$0x1]
    %v84 = vld [vmem:[#allocation4 + $0x20] sm:$0x1]
    %v85 = vld [vmem:[#allocation4 + $0x30] sm:$0x1]
    %v86 = vld [vmem:[#allocation4 + $0x40] sm:$0x1]
    %v87 = vld [vmem:[#allocation4 + $0x50] sm:$0x1]
    %v88 = vld [vmem:[#allocation4 + $0x60] sm:$0x1]
    %v89 = vld [vmem:[#allocation4 + $0x70] sm:$0x1]
    %v90 = vld [vmem:[#allocation4 + $0x80] sm:$0x1]
    %v91 = vld [vmem:[#allocation4 + $0x90] sm:$0x1]
    %v94 = vrot.slane %v81, 7
    %vm95 = vcmask 1041409
    %v96 = vsel %vm95, %v94, %v80
    %v107 = vrot.slane %v83, 7
    %v108 = vsel %vm95, %v107, %v82
    %v109 = vrot.slane %v84, 6
    %vm110 = vcmask 1042434
    %v111 = vsel %vm110, %v109, %v108
    %v112 = vrot.slane %v85, 5
    %vm113 = vcmask 1043459
    %v114 = vsel %vm113, %v112, %v111
    %v115 = vrot.slane %v86, 4
    %vm116 = vcmask 1044484
    %v117 = vsel %vm116, %v115, %v114
    %v118 = vrot.slane %v87, 3
    %vm119 = vcmask 1045509
    %v120 = vsel %vm119, %v118, %v117
    %v121 = vrot.slane %v88, 2
    %vm122 = vcmask 1046534
    %v123 = vsel %vm122, %v121, %v120
    %v124 = vrot.slane %v89, 1
    %vm125 = vcmask 1047559
    %v126 = vsel %vm125, %v124, %v123
    %v127 = vrot.slane %v91, 7
    %v128 = vsel %vm95, %v127, %v90
    %v129 = vsel %vm52, %v96, 0
    %v131 = vsel %vm52, %v126, 0
    %v133 = vsel %vm52, %v128, 0
    %135 = vmatpush.xpose.msra.mxu0 0.0
    %136 = vmatpush.xpose.msra.mxu0 0.0
    %137 = vmatpush.xpose.msra.mxu0 0.0
    %138 = vmatpush.xpose.msra.mxu0 0.0
    %139 = vmatpush.xpose.msra.mxu0 0.0
    %140 = vmatpush.xpose.msra.mxu0 0.0
    %141 = vmatpush.xpose.msra.mxu0 0.0
    %142 = vmatpush.xpose.msra.mxu0 0.0
    %143 = vmatpush.xpose.msra.mxu0 0.0
    %144 = vmatpush.xpose.msra.mxu0 0.0
    %145 = vmatpush.xpose.msra.mxu0 0.0
    %146 = vmatpush.xpose.msra.mxu0 0.0
    %147 = vmatpush.xpose.msra.mxu0 0.0
    %148 = vmatpush.xpose.msra.mxu0 0.0
    %v149 = vand.u32 %v133, 4294901760
    %150 = vmatpush.xpose.msra.mxu0 %v149
    %v151 = vand.u32 %v131, 4294901760
    %152 = vmatpush.xpose.msra.mxu0 %v151
    %v153 = vand.u32 %v129, 4294901760
    %v154 = vsub.f32 %v129, %v153
    %v155 = vand.u32 %v154, 4294901760
    %v156 = vsub.f32 %v154, %v155
    %v157 = vand.u32 %v156, 4294901760
    %158 = vmatmul.f32.gmra.mxu0 %v157
    %v159 = vpop.f32.mrf.mxu0
    %v160 = vadd.f32 0.0, %v159
    %161 = vdwg.mxu0
    %162 = vmatpush.xpose.msra.mxu0 0.0
    %163 = vmatpush.xpose.msra.mxu0 0.0
    %164 = vmatpush.xpose.msra.mxu0 0.0
    %165 = vmatpush.xpose.msra.mxu0 0.0
    %166 = vmatpush.xpose.msra.mxu0 0.0
    %167 = vmatpush.xpose.msra.mxu0 0.0
    %168 = vmatpush.xpose.msra.mxu0 0.0
    %169 = vmatpush.xpose.msra.mxu0 0.0
    %170 = vmatpush.xpose.msra.mxu0 0.0
    %171 = vmatpush.xpose.msra.mxu0 0.0
    %172 = vmatpush.xpose.msra.mxu0 0.0
    %173 = vmatpush.xpose.msra.mxu0 0.0
    %174 = vmatpush.xpose.msra.mxu0 0.0
    %175 = vmatpush.xpose.msra.mxu0 0.0
    %v176 = vand.u32 %v133, 4294901760
    %v177 = vsub.f32 %v133, %v176
    %v178 = vand.u32 %v177, 4294901760
    %v179 = vsub.f32 %v177, %v178
    %v180 = vand.u32 %v179, 4294901760
    %181 = vmatpush.xpose.msra.mxu0 %v180
    %v182 = vand.u32 %v131, 4294901760
    %v183 = vsub.f32 %v131, %v182
    %v184 = vand.u32 %v183, 4294901760
    %v185 = vsub.f32 %v183, %v184
    %v186 = vand.u32 %v185, 4294901760
    %187 = vmatpush.xpose.msra.mxu0 %v186
    %v188 = vand.u32 %v129, 4294901760
    %189 = vmatmul.f32.gmra.mxu0 %v188
    %v190 = vpop.f32.mrf.mxu0
    %v191 = vadd.f32 %v160, %v190
    %192 = vdwg.mxu0
    %193 = vmatpush.xpose.msra.mxu0 0.0
    %194 = vmatpush.xpose.msra.mxu0 0.0
    %195 = vmatpush.xpose.msra.mxu0 0.0
    %196 = vmatpush.xpose.msra.mxu0 0.0
    %197 = vmatpush.xpose.msra.mxu0 0.0
    %198 = vmatpush.xpose.msra.mxu0 0.0
    %199 = vmatpush.xpose.msra.mxu0 0.0
    %200 = vmatpush.xpose.msra.mxu0 0.0
    %201 = vmatpush.xpose.msra.mxu0 0.0
    %202 = vmatpush.xpose.msra.mxu0 0.0
    %203 = vmatpush.xpose.msra.mxu0 0.0
    %204 = vmatpush.xpose.msra.mxu0 0.0
    %205 = vmatpush.xpose.msra.mxu0 0.0
    %206 = vmatpush.xpose.msra.mxu0 0.0
    %v207 = vand.u32 %v133, 4294901760
    %v208 = vsub.f32 %v133, %v207
    %209 = vmatpush.xpose.msra.mxu0 %v208
    %v210 = vand.u32 %v131, 4294901760
    %v211 = vsub.f32 %v131, %v210
    %212 = vmatpush.xpose.msra.mxu0 %v211
    %v213 = vand.u32 %v129, 4294901760
    %v214 = vsub.f32 %v129, %v213
    %215 = vmatmul.f32.gmra.mxu0 %v214
    %v216 = vpop.f32.mrf.mxu0
    %v217 = vadd.f32 %v191, %v216
    %218 = vdwg.mxu0
    %219 = vmatpush.xpose.msra.mxu0 0.0
    %220 = vmatpush.xpose.msra.mxu0 0.0
    %221 = vmatpush.xpose.msra.mxu0 0.0
    %222 = vmatpush.xpose.msra.mxu0 0.0
    %223 = vmatpush.xpose.msra.mxu0 0.0
    %224 = vmatpush.xpose.msra.mxu0 0.0
    %225 = vmatpush.xpose.msra.mxu0 0.0
    %226 = vmatpush.xpose.msra.mxu0 0.0
    %227 = vmatpush.xpose.msra.mxu0 0.0
    %228 = vmatpush.xpose.msra.mxu0 0.0
    %229 = vmatpush.xpose.msra.mxu0 0.0
    %230 = vmatpush.xpose.msra.mxu0 0.0
    %231 = vmatpush.xpose.msra.mxu0 0.0
    %232 = vmatpush.xpose.msra.mxu0 0.0
    %v233 = vand.u32 %v133, 4294901760
    %234 = vmatpush.xpose.msra.mxu0 %v233
    %v235 = vand.u32 %v131, 4294901760
    %236 = vmatpush.xpose.msra.mxu0 %v235
    %v237 = vand.u32 %v129, 4294901760
    %v238 = vsub.f32 %v129, %v237
    %v239 = vand.u32 %v238, 4294901760
    %240 = vmatmul.f32.gmra.mxu0 %v239
    %v241 = vpop.f32.mrf.mxu0
    %v242 = vadd.f32 %v217, %v241
    %243 = vdwg.mxu0
    %244 = vmatpush.xpose.msra.mxu0 0.0
    %245 = vmatpush.xpose.msra.mxu0 0.0
    %246 = vmatpush.xpose.msra.mxu0 0.0
    %247 = vmatpush.xpose.msra.mxu0 0.0
    %248 = vmatpush.xpose.msra.mxu0 0.0
    %249 = vmatpush.xpose.msra.mxu0 0.0
    %250 = vmatpush.xpose.msra.mxu0 0.0
    %251 = vmatpush.xpose.msra.mxu0 0.0
    %252 = vmatpush.xpose.msra.mxu0 0.0
    %253 = vmatpush.xpose.msra.mxu0 0.0
    %254 = vmatpush.xpose.msra.mxu0 0.0
    %255 = vmatpush.xpose.msra.mxu0 0.0
    %256 = vmatpush.xpose.msra.mxu0 0.0
    %257 = vmatpush.xpose.msra.mxu0 0.0
    %v258 = vand.u32 %v133, 4294901760
    %v259 = vsub.f32 %v133, %v258
    %v260 = vand.u32 %v259, 4294901760
    %261 = vmatpush.xpose.msra.mxu0 %v260
    %v262 = vand.u32 %v131, 4294901760
    %v263 = vsub.f32 %v131, %v262
    %v264 = vand.u32 %v263, 4294901760
    %265 = vmatpush.xpose.msra.mxu0 %v264
    %v266 = vand.u32 %v129, 4294901760
    %267 = vmatmul.f32.gmra.mxu0 %v266
    %v268 = vpop.f32.mrf.mxu0
    %v269 = vadd.f32 %v242, %v268
    %270 = vdwg.mxu0
    %271 = vmatpush.xpose.msra.mxu0 0.0
    %272 = vmatpush.xpose.msra.mxu0 0.0
    %273 = vmatpush.xpose.msra.mxu0 0.0
    %274 = vmatpush.xpose.msra.mxu0 0.0
    %275 = vmatpush.xpose.msra.mxu0 0.0
    %276 = vmatpush.xpose.msra.mxu0 0.0
    %277 = vmatpush.xpose.msra.mxu0 0.0
    %278 = vmatpush.xpose.msra.mxu0 0.0
    %279 = vmatpush.xpose.msra.mxu0 0.0
    %280 = vmatpush.xpose.msra.mxu0 0.0
    %281 = vmatpush.xpose.msra.mxu0 0.0
    %282 = vmatpush.xpose.msra.mxu0 0.0
    %283 = vmatpush.xpose.msra.mxu0 0.0
    %284 = vmatpush.xpose.msra.mxu0 0.0
    %v285 = vand.u32 %v133, 4294901760
    %286 = vmatpush.xpose.msra.mxu0 %v285
    %v287 = vand.u32 %v131, 4294901760
    %288 = vmatpush.xpose.msra.mxu0 %v287
    %v289 = vand.u32 %v129, 4294901760
    %290 = vmatmul.f32.gmra.mxu0 %v289
    %v291 = vpop.f32.mrf.mxu0
    %v292 = vadd.f32 %v269, %v291
    %293 = vdwg.mxu0
    %vm294 = vcmask 74752
    %295 = vst.msk [vmem:[%s4] sm:$0x3] %vm294, %v292
    %v296 = vld [vmem:[%s0 + $0x1] sm:$0x1]
    %v297 = vld [vmem:[%s0 + $0x11] sm:$0x1]
    %v298 = vld [vmem:[#allocation4 + $0x1] sm:$0x1]
    %v299 = vld [vmem:[#allocation4 + $0x11] sm:$0x1]
    %v300 = vld [vmem:[#allocation4 + $0x21] sm:$0x1]
    %v301 = vld [vmem:[#allocation4 + $0x31] sm:$0x1]
    %v302 = vld [vmem:[#allocation4 + $0x41] sm:$0x1]
    %v303 = vld [vmem:[#allocation4 + $0x51] sm:$0x1]
    %v304 = vld [vmem:[#allocation4 + $0x61] sm:$0x1]
    %v305 = vld [vmem:[#allocation4 + $0x71] sm:$0x1]
    %v306 = vld [vmem:[#allocation4 + $0x81] sm:$0x1]
    %v307 = vld [vmem:[#allocation4 + $0x91] sm:$0x1]
    %v310 = vrot.slane %v297, 7
    %v311 = vsel %vm95, %v310, %v296
    %v322 = vrot.slane %v299, 7
    %v323 = vsel %vm95, %v322, %v298
    %v324 = vrot.slane %v300, 6
    %v325 = vsel %vm110, %v324, %v323
    %v326 = vrot.slane %v301, 5
    %v327 = vsel %vm113, %v326, %v325
    %v328 = vrot.slane %v302, 4
    %v329 = vsel %vm116, %v328, %v327
    %v330 = vrot.slane %v303, 3
    %v331 = vsel %vm119, %v330, %v329
    %v332 = vrot.slane %v304, 2
    %v333 = vsel %vm122, %v332, %v331
    %v334 = vrot.slane %v305, 1
    %v335 = vsel %vm125, %v334, %v333
    %v336 = vrot.slane %v307, 7
    %v337 = vsel %vm95, %v336, %v306
    %v338 = vsel %vm52, %v311, 0
    %v340 = vsel %vm52, %v335, 0
    %v342 = vsel %vm52, %v337, 0
    %344 = vmatpush.xpose.msra.mxu0 0.0
    %345 = vmatpush.xpose.msra.mxu0 0.0
    %346 = vmatpush.xpose.msra.mxu0 0.0
    %347 = vmatpush.xpose.msra.mxu0 0.0
    %348 = vmatpush.xpose.msra.mxu0 0.0
    %349 = vmatpush.xpose.msra.mxu0 0.0
    %350 = vmatpush.xpose.msra.mxu0 0.0
    %351 = vmatpush.xpose.msra.mxu0 0.0
    %352 = vmatpush.xpose.msra.mxu0 0.0
    %353 = vmatpush.xpose.msra.mxu0 0.0
    %354 = vmatpush.xpose.msra.mxu0 0.0
    %355 = vmatpush.xpose.msra.mxu0 0.0
    %356 = vmatpush.xpose.msra.mxu0 0.0
    %357 = vmatpush.xpose.msra.mxu0 0.0
    %v358 = vand.u32 %v342, 4294901760
    %359 = vmatpush.xpose.msra.mxu0 %v358
    %v360 = vand.u32 %v340, 4294901760
    %361 = vmatpush.xpose.msra.mxu0 %v360
    %v362 = vand.u32 %v338, 4294901760
    %v363 = vsub.f32 %v338, %v362
    %v364 = vand.u32 %v363, 4294901760
    %v365 = vsub.f32 %v363, %v364
    %v366 = vand.u32 %v365, 4294901760
    %367 = vmatmul.f32.gmra.mxu0 %v366
    %v368 = vpop.f32.mrf.mxu0
    %v369 = vadd.f32 0.0, %v368
    %370 = vdwg.mxu0
    %371 = vmatpush.xpose.msra.mxu0 0.0
    %372 = vmatpush.xpose.msra.mxu0 0.0
    %373 = vmatpush.xpose.msra.mxu0 0.0
    %374 = vmatpush.xpose.msra.mxu0 0.0
    %375 = vmatpush.xpose.msra.mxu0 0.0
    %376 = vmatpush.xpose.msra.mxu0 0.0
    %377 = vmatpush.xpose.msra.mxu0 0.0
    %378 = vmatpush.xpose.msra.mxu0 0.0
    %379 = vmatpush.xpose.msra.mxu0 0.0
    %380 = vmatpush.xpose.msra.mxu0 0.0
    %381 = vmatpush.xpose.msra.mxu0 0.0
    %382 = vmatpush.xpose.msra.mxu0 0.0
    %383 = vmatpush.xpose.msra.mxu0 0.0
    %384 = vmatpush.xpose.msra.mxu0 0.0
    %v385 = vand.u32 %v342, 4294901760
    %v386 = vsub.f32 %v342, %v385
    %v387 = vand.u32 %v386, 4294901760
    %v388 = vsub.f32 %v386, %v387
    %v389 = vand.u32 %v388, 4294901760
    %390 = vmatpush.xpose.msra.mxu0 %v389
    %v391 = vand.u32 %v340, 4294901760
    %v392 = vsub.f32 %v340, %v391
    %v393 = vand.u32 %v392, 4294901760
    %v394 = vsub.f32 %v392, %v393
    %v395 = vand.u32 %v394, 4294901760
    %396 = vmatpush.xpose.msra.mxu0 %v395
    %v397 = vand.u32 %v338, 4294901760
    %398 = vmatmul.f32.gmra.mxu0 %v397
    %v399 = vpop.f32.mrf.mxu0
    %v400 = vadd.f32 %v369, %v399
    %401 = vdwg.mxu0
    %402 = vmatpush.xpose.msra.mxu0 0.0
    %403 = vmatpush.xpose.msra.mxu0 0.0
    %404 = vmatpush.xpose.msra.mxu0 0.0
    %405 = vmatpush.xpose.msra.mxu0 0.0
    %406 = vmatpush.xpose.msra.mxu0 0.0
    %407 = vmatpush.xpose.msra.mxu0 0.0
    %408 = vmatpush.xpose.msra.mxu0 0.0
    %409 = vmatpush.xpose.msra.mxu0 0.0
    %410 = vmatpush.xpose.msra.mxu0 0.0
    %411 = vmatpush.xpose.msra.mxu0 0.0
    %412 = vmatpush.xpose.msra.mxu0 0.0
    %413 = vmatpush.xpose.msra.mxu0 0.0
    %414 = vmatpush.xpose.msra.mxu0 0.0
    %415 = vmatpush.xpose.msra.mxu0 0.0
    %v416 = vand.u32 %v342, 4294901760
    %v417 = vsub.f32 %v342, %v416
    %418 = vmatpush.xpose.msra.mxu0 %v417
    %v419 = vand.u32 %v340, 4294901760
    %v420 = vsub.f32 %v340, %v419
    %421 = vmatpush.xpose.msra.mxu0 %v420
    %v422 = vand.u32 %v338, 4294901760
    %v423 = vsub.f32 %v338, %v422
    %424 = vmatmul.f32.gmra.mxu0 %v423
    %v425 = vpop.f32.mrf.mxu0
    %v426 = vadd.f32 %v400, %v425
    %427 = vdwg.mxu0
    %428 = vmatpush.xpose.msra.mxu0 0.0
    %429 = vmatpush.xpose.msra.mxu0 0.0
    %430 = vmatpush.xpose.msra.mxu0 0.0
    %431 = vmatpush.xpose.msra.mxu0 0.0
    %432 = vmatpush.xpose.msra.mxu0 0.0
    %433 = vmatpush.xpose.msra.mxu0 0.0
    %434 = vmatpush.xpose.msra.mxu0 0.0
    %435 = vmatpush.xpose.msra.mxu0 0.0
    %436 = vmatpush.xpose.msra.mxu0 0.0
    %437 = vmatpush.xpose.msra.mxu0 0.0
    %438 = vmatpush.xpose.msra.mxu0 0.0
    %439 = vmatpush.xpose.msra.mxu0 0.0
    %440 = vmatpush.xpose.msra.mxu0 0.0
    %441 = vmatpush.xpose.msra.mxu0 0.0
    %v442 = vand.u32 %v342, 4294901760
    %443 = vmatpush.xpose.msra.mxu0 %v442
    %v444 = vand.u32 %v340, 4294901760
    %445 = vmatpush.xpose.msra.mxu0 %v444
    %v446 = vand.u32 %v338, 4294901760
    %v447 = vsub.f32 %v338, %v446
    %v448 = vand.u32 %v447, 4294901760
    %449 = vmatmul.f32.gmra.mxu0 %v448
    %v450 = vpop.f32.mrf.mxu0
    %v451 = vadd.f32 %v426, %v450
    %452 = vdwg.mxu0
    %453 = vmatpush.xpose.msra.mxu0 0.0
    %454 = vmatpush.xpose.msra.mxu0 0.0
    %455 = vmatpush.xpose.msra.mxu0 0.0
    %456 = vmatpush.xpose.msra.mxu0 0.0
    %457 = vmatpush.xpose.msra.mxu0 0.0
    %458 = vmatpush.xpose.msra.mxu0 0.0
    %459 = vmatpush.xpose.msra.mxu0 0.0
    %460 = vmatpush.xpose.msra.mxu0 0.0
    %461 = vmatpush.xpose.msra.mxu0 0.0
    %462 = vmatpush.xpose.msra.mxu0 0.0
    %463 = vmatpush.xpose.msra.mxu0 0.0
    %464 = vmatpush.xpose.msra.mxu0 0.0
    %465 = vmatpush.xpose.msra.mxu0 0.0
    %466 = vmatpush.xpose.msra.mxu0 0.0
    %v467 = vand.u32 %v342, 4294901760
    %v468 = vsub.f32 %v342, %v467
    %v469 = vand.u32 %v468, 4294901760
    %470 = vmatpush.xpose.msra.mxu0 %v469
    %v471 = vand.u32 %v340, 4294901760
    %v472 = vsub.f32 %v340, %v471
    %v473 = vand.u32 %v472, 4294901760
    %474 = vmatpush.xpose.msra.mxu0 %v473
    %v475 = vand.u32 %v338, 4294901760
    %476 = vmatmul.f32.gmra.mxu0 %v475
    %v477 = vpop.f32.mrf.mxu0
    %v478 = vadd.f32 %v451, %v477
    %479 = vdwg.mxu0
    %480 = vmatpush.xpose.msra.mxu0 0.0
    %481 = vmatpush.xpose.msra.mxu0 0.0
    %482 = vmatpush.xpose.msra.mxu0 0.0
    %483 = vmatpush.xpose.msra.mxu0 0.0
    %484 = vmatpush.xpose.msra.mxu0 0.0
    %485 = vmatpush.xpose.msra.mxu0 0.0
    %486 = vmatpush.xpose.msra.mxu0 0.0
    %487 = vmatpush.xpose.msra.mxu0 0.0
    %488 = vmatpush.xpose.msra.mxu0 0.0
    %489 = vmatpush.xpose.msra.mxu0 0.0
    %490 = vmatpush.xpose.msra.mxu0 0.0
    %491 = vmatpush.xpose.msra.mxu0 0.0
    %492 = vmatpush.xpose.msra.mxu0 0.0
    %493 = vmatpush.xpose.msra.mxu0 0.0
    %v494 = vand.u32 %v342, 4294901760
    %495 = vmatpush.xpose.msra.mxu0 %v494
    %v496 = vand.u32 %v340, 4294901760
    %497 = vmatpush.xpose.msra.mxu0 %v496
    %v498 = vand.u32 %v338, 4294901760
    %499 = vmatmul.f32.gmra.mxu0 %v498
    %v500 = vpop.f32.mrf.mxu0
    %v501 = vadd.f32 %v478, %v500
    %502 = vdwg.mxu0
    %s503 = scalar_lea.vmem %s4, 2
    %504 = vst.msk [vmem:[%s503] sm:$0x3] %vm294, %v501
    %v505 = vld [vmem:[%s0 + $0x2] sm:$0x1]
    %v506 = vld [vmem:[%s0 + $0x12] sm:$0x1]
    %v507 = vld [vmem:[#allocation4 + $0x2] sm:$0x1]
    %v508 = vld [vmem:[#allocation4 + $0x12] sm:$0x1]
    %v509 = vld [vmem:[#allocation4 + $0x22] sm:$0x1]
    %v510 = vld [vmem:[#allocation4 + $0x32] sm:$0x1]
    %v511 = vld [vmem:[#allocation4 + $0x42] sm:$0x1]
    %v512 = vld [vmem:[#allocation4 + $0x52] sm:$0x1]
    %v513 = vld [vmem:[#allocation4 + $0x62] sm:$0x1]
    %v514 = vld [vmem:[#allocation4 + $0x72] sm:$0x1]
    %v515 = vld [vmem:[#allocation4 + $0x82] sm:$0x1]
    %v516 = vld [vmem:[#allocation4 + $0x92] sm:$0x1]
    %v519 = vrot.slane %v506, 7
    %v520 = vsel %vm95, %v519, %v505
    %v531 = vrot.slane %v508, 7
    %v532 = vsel %vm95, %v531, %v507
    %v533 = vrot.slane %v509, 6
    %v534 = vsel %vm110, %v533, %v532
    %v535 = vrot.slane %v510, 5
    %v536 = vsel %vm113, %v535, %v534
    %v537 = vrot.slane %v511, 4
    %v538 = vsel %vm116, %v537, %v536
    %v539 = vrot.slane %v512, 3
    %v540 = vsel %vm119, %v539, %v538
    %v541 = vrot.slane %v513, 2
    %v542 = vsel %vm122, %v541, %v540
    %v543 = vrot.slane %v514, 1
    %v544 = vsel %vm125, %v543, %v542
    %v545 = vrot.slane %v516, 7
    %v546 = vsel %vm95, %v545, %v515
    %v547 = vsel %vm52, %v520, 0
    %v549 = vsel %vm52, %v544, 0
    %v551 = vsel %vm52, %v546, 0
    %553 = vmatpush.xpose.msra.mxu0 0.0
    %554 = vmatpush.xpose.msra.mxu0 0.0
    %555 = vmatpush.xpose.msra.mxu0 0.0
    %556 = vmatpush.xpose.msra.mxu0 0.0
    %557 = vmatpush.xpose.msra.mxu0 0.0
    %558 = vmatpush.xpose.msra.mxu0 0.0
    %559 = vmatpush.xpose.msra.mxu0 0.0
    %560 = vmatpush.xpose.msra.mxu0 0.0
    %561 = vmatpush.xpose.msra.mxu0 0.0
    %562 = vmatpush.xpose.msra.mxu0 0.0
    %563 = vmatpush.xpose.msra.mxu0 0.0
    %564 = vmatpush.xpose.msra.mxu0 0.0
    %565 = vmatpush.xpose.msra.mxu0 0.0
    %566 = vmatpush.xpose.msra.mxu0 0.0
    %v567 = vand.u32 %v551, 4294901760
    %568 = vmatpush.xpose.msra.mxu0 %v567
    %v569 = vand.u32 %v549, 4294901760
    %570 = vmatpush.xpose.msra.mxu0 %v569
    %v571 = vand.u32 %v547, 4294901760
    %v572 = vsub.f32 %v547, %v571
    %v573 = vand.u32 %v572, 4294901760
    %v574 = vsub.f32 %v572, %v573
    %v575 = vand.u32 %v574, 4294901760
    %576 = vmatmul.f32.gmra.mxu0 %v575
    %v577 = vpop.f32.mrf.mxu0
    %v578 = vadd.f32 0.0, %v577
    %579 = vdwg.mxu0
    %580 = vmatpush.xpose.msra.mxu0 0.0
    %581 = vmatpush.xpose.msra.mxu0 0.0
    %582 = vmatpush.xpose.msra.mxu0 0.0
    %583 = vmatpush.xpose.msra.mxu0 0.0
    %584 = vmatpush.xpose.msra.mxu0 0.0
    %585 = vmatpush.xpose.msra.mxu0 0.0
    %586 = vmatpush.xpose.msra.mxu0 0.0
    %587 = vmatpush.xpose.msra.mxu0 0.0
    %588 = vmatpush.xpose.msra.mxu0 0.0
    %589 = vmatpush.xpose.msra.mxu0 0.0
    %590 = vmatpush.xpose.msra.mxu0 0.0
    %591 = vmatpush.xpose.msra.mxu0 0.0
    %592 = vmatpush.xpose.msra.mxu0 0.0
    %593 = vmatpush.xpose.msra.mxu0 0.0
    %v594 = vand.u32 %v551, 4294901760
    %v595 = vsub.f32 %v551, %v594
    %v596 = vand.u32 %v595, 4294901760
    %v597 = vsub.f32 %v595, %v596
    %v598 = vand.u32 %v597, 4294901760
    %599 = vmatpush.xpose.msra.mxu0 %v598
    %v600 = vand.u32 %v549, 4294901760
    %v601 = vsub.f32 %v549, %v600
    %v602 = vand.u32 %v601, 4294901760
    %v603 = vsub.f32 %v601, %v602
    %v604 = vand.u32 %v603, 4294901760
    %605 = vmatpush.xpose.msra.mxu0 %v604
    %v606 = vand.u32 %v547, 4294901760
    %607 = vmatmul.f32.gmra.mxu0 %v606
    %v608 = vpop.f32.mrf.mxu0
    %v609 = vadd.f32 %v578, %v608
    %610 = vdwg.mxu0
    %611 = vmatpush.xpose.msra.mxu0 0.0
    %612 = vmatpush.xpose.msra.mxu0 0.0
    %613 = vmatpush.xpose.msra.mxu0 0.0
    %614 = vmatpush.xpose.msra.mxu0 0.0
    %615 = vmatpush.xpose.msra.mxu0 0.0
    %616 = vmatpush.xpose.msra.mxu0 0.0
    %617 = vmatpush.xpose.msra.mxu0 0.0
    %618 = vmatpush.xpose.msra.mxu0 0.0
    %619 = vmatpush.xpose.msra.mxu0 0.0
    %620 = vmatpush.xpose.msra.mxu0 0.0
    %621 = vmatpush.xpose.msra.mxu0 0.0
    %622 = vmatpush.xpose.msra.mxu0 0.0
    %623 = vmatpush.xpose.msra.mxu0 0.0
    %624 = vmatpush.xpose.msra.mxu0 0.0
    %v625 = vand.u32 %v551, 4294901760
    %v626 = vsub.f32 %v551, %v625
    %627 = vmatpush.xpose.msra.mxu0 %v626
    %v628 = vand.u32 %v549, 4294901760
    %v629 = vsub.f32 %v549, %v628
    %630 = vmatpush.xpose.msra.mxu0 %v629
    %v631 = vand.u32 %v547, 4294901760
    %v632 = vsub.f32 %v547, %v631
    %633 = vmatmul.f32.gmra.mxu0 %v632
    %v634 = vpop.f32.mrf.mxu0
    %v635 = vadd.f32 %v609, %v634
    %636 = vdwg.mxu0
    %637 = vmatpush.xpose.msra.mxu0 0.0
    %638 = vmatpush.xpose.msra.mxu0 0.0
    %639 = vmatpush.xpose.msra.mxu0 0.0
    %640 = vmatpush.xpose.msra.mxu0 0.0
    %641 = vmatpush.xpose.msra.mxu0 0.0
    %642 = vmatpush.xpose.msra.mxu0 0.0
    %643 = vmatpush.xpose.msra.mxu0 0.0
    %644 = vmatpush.xpose.msra.mxu0 0.0
    %645 = vmatpush.xpose.msra.mxu0 0.0
    %646 = vmatpush.xpose.msra.mxu0 0.0
    %647 = vmatpush.xpose.msra.mxu0 0.0
    %648 = vmatpush.xpose.msra.mxu0 0.0
    %649 = vmatpush.xpose.msra.mxu0 0.0
    %650 = vmatpush.xpose.msra.mxu0 0.0
    %v651 = vand.u32 %v551, 4294901760
    %652 = vmatpush.xpose.msra.mxu0 %v651
    %v653 = vand.u32 %v549, 4294901760
    %654 = vmatpush.xpose.msra.mxu0 %v653
    %v655 = vand.u32 %v547, 4294901760
    %v656 = vsub.f32 %v547, %v655
    %v657 = vand.u32 %v656, 4294901760
    %658 = vmatmul.f32.gmra.mxu0 %v657
    %v659 = vpop.f32.mrf.mxu0
    %v660 = vadd.f32 %v635, %v659
    %661 = vdwg.mxu0
    %662 = vmatpush.xpose.msra.mxu0 0.0
    %663 = vmatpush.xpose.msra.mxu0 0.0
    %664 = vmatpush.xpose.msra.mxu0 0.0
    %665 = vmatpush.xpose.msra.mxu0 0.0
    %666 = vmatpush.xpose.msra.mxu0 0.0
    %667 = vmatpush.xpose.msra.mxu0 0.0
    %668 = vmatpush.xpose.msra.mxu0 0.0
    %669 = vmatpush.xpose.msra.mxu0 0.0
    %670 = vmatpush.xpose.msra.mxu0 0.0
    %671 = vmatpush.xpose.msra.mxu0 0.0
    %672 = vmatpush.xpose.msra.mxu0 0.0
    %673 = vmatpush.xpose.msra.mxu0 0.0
    %674 = vmatpush.xpose.msra.mxu0 0.0
    %675 = vmatpush.xpose.msra.mxu0 0.0
    %v676 = vand.u32 %v551, 4294901760
    %v677 = vsub.f32 %v551, %v676
    %v678 = vand.u32 %v677, 4294901760
    %679 = vmatpush.xpose.msra.mxu0 %v678
    %v680 = vand.u32 %v549, 4294901760
    %v681 = vsub.f32 %v549, %v680
    %v682 = vand.u32 %v681, 4294901760
    %683 = vmatpush.xpose.msra.mxu0 %v682
    %v684 = vand.u32 %v547, 4294901760
    %685 = vmatmul.f32.gmra.mxu0 %v684
    %v686 = vpop.f32.mrf.mxu0
    %v687 = vadd.f32 %v660, %v686
    %688 = vdwg.mxu0
    %689 = vmatpush.xpose.msra.mxu0 0.0
    %690 = vmatpush.xpose.msra.mxu0 0.0
    %691 = vmatpush.xpose.msra.mxu0 0.0
    %692 = vmatpush.xpose.msra.mxu0 0.0
    %693 = vmatpush.xpose.msra.mxu0 0.0
    %694 = vmatpush.xpose.msra.mxu0 0.0
    %695 = vmatpush.xpose.msra.mxu0 0.0
    %696 = vmatpush.xpose.msra.mxu0 0.0
    %697 = vmatpush.xpose.msra.mxu0 0.0
    %698 = vmatpush.xpose.msra.mxu0 0.0
    %699 = vmatpush.xpose.msra.mxu0 0.0
    %700 = vmatpush.xpose.msra.mxu0 0.0
    %701 = vmatpush.xpose.msra.mxu0 0.0
    %702 = vmatpush.xpose.msra.mxu0 0.0
    %v703 = vand.u32 %v551, 4294901760
    %704 = vmatpush.xpose.msra.mxu0 %v703
    %v705 = vand.u32 %v549, 4294901760
    %706 = vmatpush.xpose.msra.mxu0 %v705
    %v707 = vand.u32 %v547, 4294901760
    %708 = vmatmul.f32.gmra.mxu0 %v707
    %v709 = vpop.f32.mrf.mxu0
    %v710 = vadd.f32 %v687, %v709
    %711 = vdwg.mxu0
    %s712 = scalar_lea.vmem %s4, 4
    %713 = vst.msk [vmem:[%s712] sm:$0x3] %vm294, %v710
    %v714 = vld [vmem:[%s0 + $0x3] sm:$0x1]
    %v715 = vld [vmem:[%s0 + $0x13] sm:$0x1]
    %v716 = vld [vmem:[#allocation4 + $0x3] sm:$0x1]
    %v717 = vld [vmem:[#allocation4 + $0x13] sm:$0x1]
    %v718 = vld [vmem:[#allocation4 + $0x23] sm:$0x1]
    %v719 = vld [vmem:[#allocation4 + $0x33] sm:$0x1]
    %v720 = vld [vmem:[#allocation4 + $0x43] sm:$0x1]
    %v721 = vld [vmem:[#allocation4 + $0x53] sm:$0x1]
    %v722 = vld [vmem:[#allocation4 + $0x63] sm:$0x1]
    %v723 = vld [vmem:[#allocation4 + $0x73] sm:$0x1]
    %v724 = vld [vmem:[#allocation4 + $0x83] sm:$0x1]
    %v725 = vld [vmem:[#allocation4 + $0x93] sm:$0x1]
    %v728 = vrot.slane %v715, 7
    %v729 = vsel %vm95, %v728, %v714
    %v740 = vrot.slane %v717, 7
    %v741 = vsel %vm95, %v740, %v716
    %v742 = vrot.slane %v718, 6
    %v743 = vsel %vm110, %v742, %v741
    %v744 = vrot.slane %v719, 5
    %v745 = vsel %vm113, %v744, %v743
    %v746 = vrot.slane %v720, 4
    %v747 = vsel %vm116, %v746, %v745
    %v748 = vrot.slane %v721, 3
    %v749 = vsel %vm119, %v748, %v747
    %v750 = vrot.slane %v722, 2
    %v751 = vsel %vm122, %v750, %v749
    %v752 = vrot.slane %v723, 1
    %v753 = vsel %vm125, %v752, %v751
    %v754 = vrot.slane %v725, 7
    %v755 = vsel %vm95, %v754, %v724
    %v756 = vsel %vm52, %v729, 0
    %v758 = vsel %vm52, %v753, 0
    %v760 = vsel %vm52, %v755, 0
    %762 = vmatpush.xpose.msra.mxu0 0.0
    %763 = vmatpush.xpose.msra.mxu0 0.0
    %764 = vmatpush.xpose.msra.mxu0 0.0
    %765 = vmatpush.xpose.msra.mxu0 0.0
    %766 = vmatpush.xpose.msra.mxu0 0.0
    %767 = vmatpush.xpose.msra.mxu0 0.0
    %768 = vmatpush.xpose.msra.mxu0 0.0
    %769 = vmatpush.xpose.msra.mxu0 0.0
    %770 = vmatpush.xpose.msra.mxu0 0.0
    %771 = vmatpush.xpose.msra.mxu0 0.0
    %772 = vmatpush.xpose.msra.mxu0 0.0
    %773 = vmatpush.xpose.msra.mxu0 0.0
    %774 = vmatpush.xpose.msra.mxu0 0.0
    %775 = vmatpush.xpose.msra.mxu0 0.0
    %v776 = vand.u32 %v760, 4294901760
    %777 = vmatpush.xpose.msra.mxu0 %v776
    %v778 = vand.u32 %v758, 4294901760
    %779 = vmatpush.xpose.msra.mxu0 %v778
    %v780 = vand.u32 %v756, 4294901760
    %v781 = vsub.f32 %v756, %v780
    %v782 = vand.u32 %v781, 4294901760
    %v783 = vsub.f32 %v781, %v782
    %v784 = vand.u32 %v783, 4294901760
    %785 = vmatmul.f32.gmra.mxu0 %v784
    %v786 = vpop.f32.mrf.mxu0
    %v787 = vadd.f32 0.0, %v786
    %788 = vdwg.mxu0
    %789 = vmatpush.xpose.msra.mxu0 0.0
    %790 = vmatpush.xpose.msra.mxu0 0.0
    %791 = vmatpush.xpose.msra.mxu0 0.0
    %792 = vmatpush.xpose.msra.mxu0 0.0
    %793 = vmatpush.xpose.msra.mxu0 0.0
    %794 = vmatpush.xpose.msra.mxu0 0.0
    %795 = vmatpush.xpose.msra.mxu0 0.0
    %796 = vmatpush.xpose.msra.mxu0 0.0
    %797 = vmatpush.xpose.msra.mxu0 0.0
    %798 = vmatpush.xpose.msra.mxu0 0.0
    %799 = vmatpush.xpose.msra.mxu0 0.0
    %800 = vmatpush.xpose.msra.mxu0 0.0
    %801 = vmatpush.xpose.msra.mxu0 0.0
    %802 = vmatpush.xpose.msra.mxu0 0.0
    %v803 = vand.u32 %v760, 4294901760
    %v804 = vsub.f32 %v760, %v803
    %v805 = vand.u32 %v804, 4294901760
    %v806 = vsub.f32 %v804, %v805
    %v807 = vand.u32 %v806, 4294901760
    %808 = vmatpush.xpose.msra.mxu0 %v807
    %v809 = vand.u32 %v758, 4294901760
    %v810 = vsub.f32 %v758, %v809
    %v811 = vand.u32 %v810, 4294901760
    %v812 = vsub.f32 %v810, %v811
    %v813 = vand.u32 %v812, 4294901760
    %814 = vmatpush.xpose.msra.mxu0 %v813
    %v815 = vand.u32 %v756, 4294901760
    %816 = vmatmul.f32.gmra.mxu0 %v815
    %v817 = vpop.f32.mrf.mxu0
    %v818 = vadd.f32 %v787, %v817
    %819 = vdwg.mxu0
    %820 = vmatpush.xpose.msra.mxu0 0.0
    %821 = vmatpush.xpose.msra.mxu0 0.0
    %822 = vmatpush.xpose.msra.mxu0 0.0
    %823 = vmatpush.xpose.msra.mxu0 0.0
    %824 = vmatpush.xpose.msra.mxu0 0.0
    %825 = vmatpush.xpose.msra.mxu0 0.0
    %826 = vmatpush.xpose.msra.mxu0 0.0
    %827 = vmatpush.xpose.msra.mxu0 0.0
    %828 = vmatpush.xpose.msra.mxu0 0.0
    %829 = vmatpush.xpose.msra.mxu0 0.0
    %830 = vmatpush.xpose.msra.mxu0 0.0
    %831 = vmatpush.xpose.msra.mxu0 0.0
    %832 = vmatpush.xpose.msra.mxu0 0.0
    %833 = vmatpush.xpose.msra.mxu0 0.0
    %v834 = vand.u32 %v760, 4294901760
    %v835 = vsub.f32 %v760, %v834
    %836 = vmatpush.xpose.msra.mxu0 %v835
    %v837 = vand.u32 %v758, 4294901760
    %v838 = vsub.f32 %v758, %v837
    %839 = vmatpush.xpose.msra.mxu0 %v838
    %v840 = vand.u32 %v756, 4294901760
    %v841 = vsub.f32 %v756, %v840
    %842 = vmatmul.f32.gmra.mxu0 %v841
    %v843 = vpop.f32.mrf.mxu0
    %v844 = vadd.f32 %v818, %v843
    %845 = vdwg.mxu0
    %846 = vmatpush.xpose.msra.mxu0 0.0
    %847 = vmatpush.xpose.msra.mxu0 0.0
    %848 = vmatpush.xpose.msra.mxu0 0.0
    %849 = vmatpush.xpose.msra.mxu0 0.0
    %850 = vmatpush.xpose.msra.mxu0 0.0
    %851 = vmatpush.xpose.msra.mxu0 0.0
    %852 = vmatpush.xpose.msra.mxu0 0.0
    %853 = vmatpush.xpose.msra.mxu0 0.0
    %854 = vmatpush.xpose.msra.mxu0 0.0
    %855 = vmatpush.xpose.msra.mxu0 0.0
    %856 = vmatpush.xpose.msra.mxu0 0.0
    %857 = vmatpush.xpose.msra.mxu0 0.0
    %858 = vmatpush.xpose.msra.mxu0 0.0
    %859 = vmatpush.xpose.msra.mxu0 0.0
    %v860 = vand.u32 %v760, 4294901760
    %861 = vmatpush.xpose.msra.mxu0 %v860
    %v862 = vand.u32 %v758, 4294901760
    %863 = vmatpush.xpose.msra.mxu0 %v862
    %v864 = vand.u32 %v756, 4294901760
    %v865 = vsub.f32 %v756, %v864
    %v866 = vand.u32 %v865, 4294901760
    %867 = vmatmul.f32.gmra.mxu0 %v866
    %v868 = vpop.f32.mrf.mxu0
    %v869 = vadd.f32 %v844, %v868
    %870 = vdwg.mxu0
    %871 = vmatpush.xpose.msra.mxu0 0.0
    %872 = vmatpush.xpose.msra.mxu0 0.0
    %873 = vmatpush.xpose.msra.mxu0 0.0
    %874 = vmatpush.xpose.msra.mxu0 0.0
    %875 = vmatpush.xpose.msra.mxu0 0.0
    %876 = vmatpush.xpose.msra.mxu0 0.0
    %877 = vmatpush.xpose.msra.mxu0 0.0
    %878 = vmatpush.xpose.msra.mxu0 0.0
    %879 = vmatpush.xpose.msra.mxu0 0.0
    %880 = vmatpush.xpose.msra.mxu0 0.0
    %881 = vmatpush.xpose.msra.mxu0 0.0
    %882 = vmatpush.xpose.msra.mxu0 0.0
    %883 = vmatpush.xpose.msra.mxu0 0.0
    %884 = vmatpush.xpose.msra.mxu0 0.0
    %v885 = vand.u32 %v760, 4294901760
    %v886 = vsub.f32 %v760, %v885
    %v887 = vand.u32 %v886, 4294901760
    %888 = vmatpush.xpose.msra.mxu0 %v887
    %v889 = vand.u32 %v758, 4294901760
    %v890 = vsub.f32 %v758, %v889
    %v891 = vand.u32 %v890, 4294901760
    %892 = vmatpush.xpose.msra.mxu0 %v891
    %v893 = vand.u32 %v756, 4294901760
    %894 = vmatmul.f32.gmra.mxu0 %v893
    %v895 = vpop.f32.mrf.mxu0
    %v896 = vadd.f32 %v869, %v895
    %897 = vdwg.mxu0
    %898 = vmatpush.xpose.msra.mxu0 0.0
    %899 = vmatpush.xpose.msra.mxu0 0.0
    %900 = vmatpush.xpose.msra.mxu0 0.0
    %901 = vmatpush.xpose.msra.mxu0 0.0
    %902 = vmatpush.xpose.msra.mxu0 0.0
    %903 = vmatpush.xpose.msra.mxu0 0.0
    %904 = vmatpush.xpose.msra.mxu0 0.0
    %905 = vmatpush.xpose.msra.mxu0 0.0
    %906 = vmatpush.xpose.msra.mxu0 0.0
    %907 = vmatpush.xpose.msra.mxu0 0.0
    %908 = vmatpush.xpose.msra.mxu0 0.0
    %909 = vmatpush.xpose.msra.mxu0 0.0
    %910 = vmatpush.xpose.msra.mxu0 0.0
    %911 = vmatpush.xpose.msra.mxu0 0.0
    %v912 = vand.u32 %v760, 4294901760
    %913 = vmatpush.xpose.msra.mxu0 %v912
    %v914 = vand.u32 %v758, 4294901760
    %915 = vmatpush.xpose.msra.mxu0 %v914
    %v916 = vand.u32 %v756, 4294901760
    %917 = vmatmul.f32.gmra.mxu0 %v916
    %v918 = vpop.f32.mrf.mxu0
    %v919 = vadd.f32 %v896, %v918
    %920 = vdwg.mxu0
    %s921 = scalar_lea.vmem %s4, 6
    %922 = vst.msk [vmem:[%s921] sm:$0x3] %vm294, %v919
    %v923 = vld [vmem:[%s0 + $0x4] sm:$0x1]
    %v924 = vld [vmem:[%s0 + $0x14] sm:$0x1]
    %v925 = vld [vmem:[#allocation4 + $0x4] sm:$0x1]
    %v926 = vld [vmem:[#allocation4 + $0x14] sm:$0x1]
    %v927 = vld [vmem:[#allocation4 + $0x24] sm:$0x1]
    %v928 = vld [vmem:[#allocation4 + $0x34] sm:$0x1]
    %v929 = vld [vmem:[#allocation4 + $0x44] sm:$0x1]
    %v930 = vld [vmem:[#allocation4 + $0x54] sm:$0x1]
    %v931 = vld [vmem:[#allocation4 + $0x64] sm:$0x1]
    %v932 = vld [vmem:[#allocation4 + $0x74] sm:$0x1]
    %v933 = vld [vmem:[#allocation4 + $0x84] sm:$0x1]
    %v934 = vld [vmem:[#allocation4 + $0x94] sm:$0x1]
    %v937 = vrot.slane %v924, 7
    %v938 = vsel %vm95, %v937, %v923
    %v949 = vrot.slane %v926, 7
    %v950 = vsel %vm95, %v949, %v925
    %v951 = vrot.slane %v927, 6
    %v952 = vsel %vm110, %v951, %v950
    %v953 = vrot.slane %v928, 5
    %v954 = vsel %vm113, %v953, %v952
    %v955 = vrot.slane %v929, 4
    %v956 = vsel %vm116, %v955, %v954
    %v957 = vrot.slane %v930, 3
    %v958 = vsel %vm119, %v957, %v956
    %v959 = vrot.slane %v931, 2
    %v960 = vsel %vm122, %v959, %v958
    %v961 = vrot.slane %v932, 1
    %v962 = vsel %vm125, %v961, %v960
    %v963 = vrot.slane %v934, 7
    %v964 = vsel %vm95, %v963, %v933
    %v965 = vsel %vm52, %v938, 0
    %v967 = vsel %vm52, %v962, 0
    %v969 = vsel %vm52, %v964, 0
    %971 = vmatpush.xpose.msra.mxu0 0.0
    %972 = vmatpush.xpose.msra.mxu0 0.0
    %973 = vmatpush.xpose.msra.mxu0 0.0
    %974 = vmatpush.xpose.msra.mxu0 0.0
    %975 = vmatpush.xpose.msra.mxu0 0.0
    %976 = vmatpush.xpose.msra.mxu0 0.0
    %977 = vmatpush.xpose.msra.mxu0 0.0
    %978 = vmatpush.xpose.msra.mxu0 0.0
    %979 = vmatpush.xpose.msra.mxu0 0.0
    %980 = vmatpush.xpose.msra.mxu0 0.0
    %981 = vmatpush.xpose.msra.mxu0 0.0
    %982 = vmatpush.xpose.msra.mxu0 0.0
    %983 = vmatpush.xpose.msra.mxu0 0.0
    %984 = vmatpush.xpose.msra.mxu0 0.0
    %v985 = vand.u32 %v969, 4294901760
    %986 = vmatpush.xpose.msra.mxu0 %v985
    %v987 = vand.u32 %v967, 4294901760
    %988 = vmatpush.xpose.msra.mxu0 %v987
    %v989 = vand.u32 %v965, 4294901760
    %v990 = vsub.f32 %v965, %v989
    %v991 = vand.u32 %v990, 4294901760
    %v992 = vsub.f32 %v990, %v991
    %v993 = vand.u32 %v992, 4294901760
    %994 = vmatmul.f32.gmra.mxu0 %v993
    %v995 = vpop.f32.mrf.mxu0
    %v996 = vadd.f32 0.0, %v995
    %997 = vdwg.mxu0
    %998 = vmatpush.xpose.msra.mxu0 0.0
    %999 = vmatpush.xpose.msra.mxu0 0.0
    %1000 = vmatpush.xpose.msra.mxu0 0.0
    %1001 = vmatpush.xpose.msra.mxu0 0.0
    %1002 = vmatpush.xpose.msra.mxu0 0.0
    %1003 = vmatpush.xpose.msra.mxu0 0.0
    %1004 = vmatpush.xpose.msra.mxu0 0.0
    %1005 = vmatpush.xpose.msra.mxu0 0.0
    %1006 = vmatpush.xpose.msra.mxu0 0.0
    %1007 = vmatpush.xpose.msra.mxu0 0.0
    %1008 = vmatpush.xpose.msra.mxu0 0.0
    %1009 = vmatpush.xpose.msra.mxu0 0.0
    %1010 = vmatpush.xpose.msra.mxu0 0.0
    %1011 = vmatpush.xpose.msra.mxu0 0.0
    %v1012 = vand.u32 %v969, 4294901760
    %v1013 = vsub.f32 %v969, %v1012
    %v1014 = vand.u32 %v1013, 4294901760
    %v1015 = vsub.f32 %v1013, %v1014
    %v1016 = vand.u32 %v1015, 4294901760
    %1017 = vmatpush.xpose.msra.mxu0 %v1016
    %v1018 = vand.u32 %v967, 4294901760
    %v1019 = vsub.f32 %v967, %v1018
    %v1020 = vand.u32 %v1019, 4294901760
    %v1021 = vsub.f32 %v1019, %v1020
    %v1022 = vand.u32 %v1021, 4294901760
    %1023 = vmatpush.xpose.msra.mxu0 %v1022
    %v1024 = vand.u32 %v965, 4294901760
    %1025 = vmatmul.f32.gmra.mxu0 %v1024
    %v1026 = vpop.f32.mrf.mxu0
    %v1027 = vadd.f32 %v996, %v1026
    %1028 = vdwg.mxu0
    %1029 = vmatpush.xpose.msra.mxu0 0.0
    %1030 = vmatpush.xpose.msra.mxu0 0.0
    %1031 = vmatpush.xpose.msra.mxu0 0.0
    %1032 = vmatpush.xpose.msra.mxu0 0.0
    %1033 = vmatpush.xpose.msra.mxu0 0.0
    %1034 = vmatpush.xpose.msra.mxu0 0.0
    %1035 = vmatpush.xpose.msra.mxu0 0.0
    %1036 = vmatpush.xpose.msra.mxu0 0.0
    %1037 = vmatpush.xpose.msra.mxu0 0.0
    %1038 = vmatpush.xpose.msra.mxu0 0.0
    %1039 = vmatpush.xpose.msra.mxu0 0.0
    %1040 = vmatpush.xpose.msra.mxu0 0.0
    %1041 = vmatpush.xpose.msra.mxu0 0.0
    %1042 = vmatpush.xpose.msra.mxu0 0.0
    %v1043 = vand.u32 %v969, 4294901760
    %v1044 = vsub.f32 %v969, %v1043
    %1045 = vmatpush.xpose.msra.mxu0 %v1044
    %v1046 = vand.u32 %v967, 4294901760
    %v1047 = vsub.f32 %v967, %v1046
    %1048 = vmatpush.xpose.msra.mxu0 %v1047
    %v1049 = vand.u32 %v965, 4294901760
    %v1050 = vsub.f32 %v965, %v1049
    %1051 = vmatmul.f32.gmra.mxu0 %v1050
    %v1052 = vpop.f32.mrf.mxu0
    %v1053 = vadd.f32 %v1027, %v1052
    %1054 = vdwg.mxu0
    %1055 = vmatpush.xpose.msra.mxu0 0.0
    %1056 = vmatpush.xpose.msra.mxu0 0.0
    %1057 = vmatpush.xpose.msra.mxu0 0.0
    %1058 = vmatpush.xpose.msra.mxu0 0.0
    %1059 = vmatpush.xpose.msra.mxu0 0.0
    %1060 = vmatpush.xpose.msra.mxu0 0.0
    %1061 = vmatpush.xpose.msra.mxu0 0.0
    %1062 = vmatpush.xpose.msra.mxu0 0.0
    %1063 = vmatpush.xpose.msra.mxu0 0.0
    %1064 = vmatpush.xpose.msra.mxu0 0.0
    %1065 = vmatpush.xpose.msra.mxu0 0.0
    %1066 = vmatpush.xpose.msra.mxu0 0.0
    %1067 = vmatpush.xpose.msra.mxu0 0.0
    %1068 = vmatpush.xpose.msra.mxu0 0.0
    %v1069 = vand.u32 %v969, 4294901760
    %1070 = vmatpush.xpose.msra.mxu0 %v1069
    %v1071 = vand.u32 %v967, 4294901760
    %1072 = vmatpush.xpose.msra.mxu0 %v1071
    %v1073 = vand.u32 %v965, 4294901760
    %v1074 = vsub.f32 %v965, %v1073
    %v1075 = vand.u32 %v1074, 4294901760
    %1076 = vmatmul.f32.gmra.mxu0 %v1075
    %v1077 = vpop.f32.mrf.mxu0
    %v1078 = vadd.f32 %v1053, %v1077
    %1079 = vdwg.mxu0
    %1080 = vmatpush.xpose.msra.mxu0 0.0
    %1081 = vmatpush.xpose.msra.mxu0 0.0
    %1082 = vmatpush.xpose.msra.mxu0 0.0
    %1083 = vmatpush.xpose.msra.mxu0 0.0
    %1084 = vmatpush.xpose.msra.mxu0 0.0
    %1085 = vmatpush.xpose.msra.mxu0 0.0
    %1086 = vmatpush.xpose.msra.mxu0 0.0
    %1087 = vmatpush.xpose.msra.mxu0 0.0
    %1088 = vmatpush.xpose.msra.mxu0 0.0
    %1089 = vmatpush.xpose.msra.mxu0 0.0
    %1090 = vmatpush.xpose.msra.mxu0 0.0
    %1091 = vmatpush.xpose.msra.mxu0 0.0
    %1092 = vmatpush.xpose.msra.mxu0 0.0
    %1093 = vmatpush.xpose.msra.mxu0 0.0
    %v1094 = vand.u32 %v969, 4294901760
    %v1095 = vsub.f32 %v969, %v1094
    %v1096 = vand.u32 %v1095, 4294901760
    %1097 = vmatpush.xpose.msra.mxu0 %v1096
    %v1098 = vand.u32 %v967, 4294901760
    %v1099 = vsub.f32 %v967, %v1098
    %v1100 = vand.u32 %v1099, 4294901760
    %1101 = vmatpush.xpose.msra.mxu0 %v1100
    %v1102 = vand.u32 %v965, 4294901760
    %1103 = vmatmul.f32.gmra.mxu0 %v1102
    %v1104 = vpop.f32.mrf.mxu0
    %v1105 = vadd.f32 %v1078, %v1104
    %1106 = vdwg.mxu0
    %1107 = vmatpush.xpose.msra.mxu0 0.0
    %1108 = vmatpush.xpose.msra.mxu0 0.0
    %1109 = vmatpush.xpose.msra.mxu0 0.0
    %1110 = vmatpush.xpose.msra.mxu0 0.0
    %1111 = vmatpush.xpose.msra.mxu0 0.0
    %1112 = vmatpush.xpose.msra.mxu0 0.0
    %1113 = vmatpush.xpose.msra.mxu0 0.0
    %1114 = vmatpush.xpose.msra.mxu0 0.0
    %1115 = vmatpush.xpose.msra.mxu0 0.0
    %1116 = vmatpush.xpose.msra.mxu0 0.0
    %1117 = vmatpush.xpose.msra.mxu0 0.0
    %1118 = vmatpush.xpose.msra.mxu0 0.0
    %1119 = vmatpush.xpose.msra.mxu0 0.0
    %1120 = vmatpush.xpose.msra.mxu0 0.0
    %v1121 = vand.u32 %v969, 4294901760
    %1122 = vmatpush.xpose.msra.mxu0 %v1121
    %v1123 = vand.u32 %v967, 4294901760
    %1124 = vmatpush.xpose.msra.mxu0 %v1123
    %v1125 = vand.u32 %v965, 4294901760
    %1126 = vmatmul.f32.gmra.mxu0 %v1125
    %v1127 = vpop.f32.mrf.mxu0
    %v1128 = vadd.f32 %v1105, %v1127
    %1129 = vdwg.mxu0
    %s1130 = scalar_lea.vmem %s4, 8
    %1131 = vst.msk [vmem:[%s1130] sm:$0x3] %vm294, %v1128
    %v1132 = vld [vmem:[%s0 + $0x5] sm:$0x1]
    %v1133 = vld [vmem:[%s0 + $0x15] sm:$0x1]
    %v1134 = vld [vmem:[#allocation4 + $0x5] sm:$0x1]
    %v1135 = vld [vmem:[#allocation4 + $0x15] sm:$0x1]
    %v1136 = vld [vmem:[#allocation4 + $0x25] sm:$0x1]
    %v1137 = vld [vmem:[#allocation4 + $0x35] sm:$0x1]
    %v1138 = vld [vmem:[#allocation4 + $0x45] sm:$0x1]
    %v1139 = vld [vmem:[#allocation4 + $0x55] sm:$0x1]
    %v1140 = vld [vmem:[#allocation4 + $0x65] sm:$0x1]
    %v1141 = vld [vmem:[#allocation4 + $0x75] sm:$0x1]
    %v1142 = vld [vmem:[#allocation4 + $0x85] sm:$0x1]
    %v1143 = vld [vmem:[#allocation4 + $0x95] sm:$0x1]
    %v1146 = vrot.slane %v1133, 7
    %v1147 = vsel %vm95, %v1146, %v1132
    %v1158 = vrot.slane %v1135, 7
    %v1159 = vsel %vm95, %v1158, %v1134
    %v1160 = vrot.slane %v1136, 6
    %v1161 = vsel %vm110, %v1160, %v1159
    %v1162 = vrot.slane %v1137, 5
    %v1163 = vsel %vm113, %v1162, %v1161
    %v1164 = vrot.slane %v1138, 4
    %v1165 = vsel %vm116, %v1164, %v1163
    %v1166 = vrot.slane %v1139, 3
    %v1167 = vsel %vm119, %v1166, %v1165
    %v1168 = vrot.slane %v1140, 2
    %v1169 = vsel %vm122, %v1168, %v1167
    %v1170 = vrot.slane %v1141, 1
    %v1171 = vsel %vm125, %v1170, %v1169
    %v1172 = vrot.slane %v1143, 7
    %v1173 = vsel %vm95, %v1172, %v1142
    %v1174 = vsel %vm52, %v1147, 0
    %v1176 = vsel %vm52, %v1171, 0
    %v1178 = vsel %vm52, %v1173, 0
    %1180 = vmatpush.xpose.msra.mxu0 0.0
    %1181 = vmatpush.xpose.msra.mxu0 0.0
    %1182 = vmatpush.xpose.msra.mxu0 0.0
    %1183 = vmatpush.xpose.msra.mxu0 0.0
    %1184 = vmatpush.xpose.msra.mxu0 0.0
    %1185 = vmatpush.xpose.msra.mxu0 0.0
    %1186 = vmatpush.xpose.msra.mxu0 0.0
    %1187 = vmatpush.xpose.msra.mxu0 0.0
    %1188 = vmatpush.xpose.msra.mxu0 0.0
    %1189 = vmatpush.xpose.msra.mxu0 0.0
    %1190 = vmatpush.xpose.msra.mxu0 0.0
    %1191 = vmatpush.xpose.msra.mxu0 0.0
    %1192 = vmatpush.xpose.msra.mxu0 0.0
    %1193 = vmatpush.xpose.msra.mxu0 0.0
    %v1194 = vand.u32 %v1178, 4294901760
    %1195 = vmatpush.xpose.msra.mxu0 %v1194
    %v1196 = vand.u32 %v1176, 4294901760
    %1197 = vmatpush.xpose.msra.mxu0 %v1196
    %v1198 = vand.u32 %v1174, 4294901760
    %v1199 = vsub.f32 %v1174, %v1198
    %v1200 = vand.u32 %v1199, 4294901760
    %v1201 = vsub.f32 %v1199, %v1200
    %v1202 = vand.u32 %v1201, 4294901760
    %1203 = vmatmul.f32.gmra.mxu0 %v1202
    %v1204 = vpop.f32.mrf.mxu0
    %v1205 = vadd.f32 0.0, %v1204
    %1206 = vdwg.mxu0
    %1207 = vmatpush.xpose.msra.mxu0 0.0
    %1208 = vmatpush.xpose.msra.mxu0 0.0
    %1209 = vmatpush.xpose.msra.mxu0 0.0
    %1210 = vmatpush.xpose.msra.mxu0 0.0
    %1211 = vmatpush.xpose.msra.mxu0 0.0
    %1212 = vmatpush.xpose.msra.mxu0 0.0
    %1213 = vmatpush.xpose.msra.mxu0 0.0
    %1214 = vmatpush.xpose.msra.mxu0 0.0
    %1215 = vmatpush.xpose.msra.mxu0 0.0
    %1216 = vmatpush.xpose.msra.mxu0 0.0
    %1217 = vmatpush.xpose.msra.mxu0 0.0
    %1218 = vmatpush.xpose.msra.mxu0 0.0
    %1219 = vmatpush.xpose.msra.mxu0 0.0
    %1220 = vmatpush.xpose.msra.mxu0 0.0
    %v1221 = vand.u32 %v1178, 4294901760
    %v1222 = vsub.f32 %v1178, %v1221
    %v1223 = vand.u32 %v1222, 4294901760
    %v1224 = vsub.f32 %v1222, %v1223
    %v1225 = vand.u32 %v1224, 4294901760
    %1226 = vmatpush.xpose.msra.mxu0 %v1225
    %v1227 = vand.u32 %v1176, 4294901760
    %v1228 = vsub.f32 %v1176, %v1227
    %v1229 = vand.u32 %v1228, 4294901760
    %v1230 = vsub.f32 %v1228, %v1229
    %v1231 = vand.u32 %v1230, 4294901760
    %1232 = vmatpush.xpose.msra.mxu0 %v1231
    %v1233 = vand.u32 %v1174, 4294901760
    %1234 = vmatmul.f32.gmra.mxu0 %v1233
    %v1235 = vpop.f32.mrf.mxu0
    %v1236 = vadd.f32 %v1205, %v1235
    %1237 = vdwg.mxu0
    %1238 = vmatpush.xpose.msra.mxu0 0.0
    %1239 = vmatpush.xpose.msra.mxu0 0.0
    %1240 = vmatpush.xpose.msra.mxu0 0.0
    %1241 = vmatpush.xpose.msra.mxu0 0.0
    %1242 = vmatpush.xpose.msra.mxu0 0.0
    %1243 = vmatpush.xpose.msra.mxu0 0.0
    %1244 = vmatpush.xpose.msra.mxu0 0.0
    %1245 = vmatpush.xpose.msra.mxu0 0.0
    %1246 = vmatpush.xpose.msra.mxu0 0.0
    %1247 = vmatpush.xpose.msra.mxu0 0.0
    %1248 = vmatpush.xpose.msra.mxu0 0.0
    %1249 = vmatpush.xpose.msra.mxu0 0.0
    %1250 = vmatpush.xpose.msra.mxu0 0.0
    %1251 = vmatpush.xpose.msra.mxu0 0.0
    %v1252 = vand.u32 %v1178, 4294901760
    %v1253 = vsub.f32 %v1178, %v1252
    %1254 = vmatpush.xpose.msra.mxu0 %v1253
    %v1255 = vand.u32 %v1176, 4294901760
    %v1256 = vsub.f32 %v1176, %v1255
    %1257 = vmatpush.xpose.msra.mxu0 %v1256
    %v1258 = vand.u32 %v1174, 4294901760
    %v1259 = vsub.f32 %v1174, %v1258
    %1260 = vmatmul.f32.gmra.mxu0 %v1259
    %v1261 = vpop.f32.mrf.mxu0
    %v1262 = vadd.f32 %v1236, %v1261
    %1263 = vdwg.mxu0
    %1264 = vmatpush.xpose.msra.mxu0 0.0
    %1265 = vmatpush.xpose.msra.mxu0 0.0
    %1266 = vmatpush.xpose.msra.mxu0 0.0
    %1267 = vmatpush.xpose.msra.mxu0 0.0
    %1268 = vmatpush.xpose.msra.mxu0 0.0
    %1269 = vmatpush.xpose.msra.mxu0 0.0
    %1270 = vmatpush.xpose.msra.mxu0 0.0
    %1271 = vmatpush.xpose.msra.mxu0 0.0
    %1272 = vmatpush.xpose.msra.mxu0 0.0
    %1273 = vmatpush.xpose.msra.mxu0 0.0
    %1274 = vmatpush.xpose.msra.mxu0 0.0
    %1275 = vmatpush.xpose.msra.mxu0 0.0
    %1276 = vmatpush.xpose.msra.mxu0 0.0
    %1277 = vmatpush.xpose.msra.mxu0 0.0
    %v1278 = vand.u32 %v1178, 4294901760
    %1279 = vmatpush.xpose.msra.mxu0 %v1278
    %v1280 = vand.u32 %v1176, 4294901760
    %1281 = vmatpush.xpose.msra.mxu0 %v1280
    %v1282 = vand.u32 %v1174, 4294901760
    %v1283 = vsub.f32 %v1174, %v1282
    %v1284 = vand.u32 %v1283, 4294901760
    %1285 = vmatmul.f32.gmra.mxu0 %v1284
    %v1286 = vpop.f32.mrf.mxu0
    %v1287 = vadd.f32 %v1262, %v1286
    %1288 = vdwg.mxu0
    %1289 = vmatpush.xpose.msra.mxu0 0.0
    %1290 = vmatpush.xpose.msra.mxu0 0.0
    %1291 = vmatpush.xpose.msra.mxu0 0.0
    %1292 = vmatpush.xpose.msra.mxu0 0.0
    %1293 = vmatpush.xpose.msra.mxu0 0.0
    %1294 = vmatpush.xpose.msra.mxu0 0.0
    %1295 = vmatpush.xpose.msra.mxu0 0.0
    %1296 = vmatpush.xpose.msra.mxu0 0.0
    %1297 = vmatpush.xpose.msra.mxu0 0.0
    %1298 = vmatpush.xpose.msra.mxu0 0.0
    %1299 = vmatpush.xpose.msra.mxu0 0.0
    %1300 = vmatpush.xpose.msra.mxu0 0.0
    %1301 = vmatpush.xpose.msra.mxu0 0.0
    %1302 = vmatpush.xpose.msra.mxu0 0.0
    %v1303 = vand.u32 %v1178, 4294901760
    %v1304 = vsub.f32 %v1178, %v1303
    %v1305 = vand.u32 %v1304, 4294901760
    %1306 = vmatpush.xpose.msra.mxu0 %v1305
    %v1307 = vand.u32 %v1176, 4294901760
    %v1308 = vsub.f32 %v1176, %v1307
    %v1309 = vand.u32 %v1308, 4294901760
    %1310 = vmatpush.xpose.msra.mxu0 %v1309
    %v1311 = vand.u32 %v1174, 4294901760
    %1312 = vmatmul.f32.gmra.mxu0 %v1311
    %v1313 = vpop.f32.mrf.mxu0
    %v1314 = vadd.f32 %v1287, %v1313
    %1315 = vdwg.mxu0
    %1316 = vmatpush.xpose.msra.mxu0 0.0
    %1317 = vmatpush.xpose.msra.mxu0 0.0
    %1318 = vmatpush.xpose.msra.mxu0 0.0
    %1319 = vmatpush.xpose.msra.mxu0 0.0
    %1320 = vmatpush.xpose.msra.mxu0 0.0
    %1321 = vmatpush.xpose.msra.mxu0 0.0
    %1322 = vmatpush.xpose.msra.mxu0 0.0
    %1323 = vmatpush.xpose.msra.mxu0 0.0
    %1324 = vmatpush.xpose.msra.mxu0 0.0
    %1325 = vmatpush.xpose.msra.mxu0 0.0
    %1326 = vmatpush.xpose.msra.mxu0 0.0
    %1327 = vmatpush.xpose.msra.mxu0 0.0
    %1328 = vmatpush.xpose.msra.mxu0 0.0
    %1329 = vmatpush.xpose.msra.mxu0 0.0
    %v1330 = vand.u32 %v1178, 4294901760
    %1331 = vmatpush.xpose.msra.mxu0 %v1330
    %v1332 = vand.u32 %v1176, 4294901760
    %1333 = vmatpush.xpose.msra.mxu0 %v1332
    %v1334 = vand.u32 %v1174, 4294901760
    %1335 = vmatmul.f32.gmra.mxu0 %v1334
    %v1336 = vpop.f32.mrf.mxu0
    %v1337 = vadd.f32 %v1314, %v1336
    %1338 = vdwg.mxu0
    %s1339 = scalar_lea.vmem %s4, 10
    %1340 = vst.msk [vmem:[%s1339] sm:$0x3] %vm294, %v1337
    %v1341 = vld [vmem:[%s0 + $0x6] sm:$0x1]
    %v1342 = vld [vmem:[%s0 + $0x16] sm:$0x1]
    %v1343 = vld [vmem:[#allocation4 + $0x6] sm:$0x1]
    %v1344 = vld [vmem:[#allocation4 + $0x16] sm:$0x1]
    %v1345 = vld [vmem:[#allocation4 + $0x26] sm:$0x1]
    %v1346 = vld [vmem:[#allocation4 + $0x36] sm:$0x1]
    %v1347 = vld [vmem:[#allocation4 + $0x46] sm:$0x1]
    %v1348 = vld [vmem:[#allocation4 + $0x56] sm:$0x1]
    %v1349 = vld [vmem:[#allocation4 + $0x66] sm:$0x1]
    %v1350 = vld [vmem:[#allocation4 + $0x76] sm:$0x1]
    %v1351 = vld [vmem:[#allocation4 + $0x86] sm:$0x1]
    %v1352 = vld [vmem:[#allocation4 + $0x96] sm:$0x1]
    %v1355 = vrot.slane %v1342, 7
    %v1356 = vsel %vm95, %v1355, %v1341
    %v1367 = vrot.slane %v1344, 7
    %v1368 = vsel %vm95, %v1367, %v1343
    %v1369 = vrot.slane %v1345, 6
    %v1370 = vsel %vm110, %v1369, %v1368
    %v1371 = vrot.slane %v1346, 5
    %v1372 = vsel %vm113, %v1371, %v1370
    %v1373 = vrot.slane %v1347, 4
    %v1374 = vsel %vm116, %v1373, %v1372
    %v1375 = vrot.slane %v1348, 3
    %v1376 = vsel %vm119, %v1375, %v1374
    %v1377 = vrot.slane %v1349, 2
    %v1378 = vsel %vm122, %v1377, %v1376
    %v1379 = vrot.slane %v1350, 1
    %v1380 = vsel %vm125, %v1379, %v1378
    %v1381 = vrot.slane %v1352, 7
    %v1382 = vsel %vm95, %v1381, %v1351
    %v1383 = vsel %vm52, %v1356, 0
    %v1385 = vsel %vm52, %v1380, 0
    %v1387 = vsel %vm52, %v1382, 0
    %1389 = vmatpush.xpose.msra.mxu0 0.0
    %1390 = vmatpush.xpose.msra.mxu0 0.0
    %1391 = vmatpush.xpose.msra.mxu0 0.0
    %1392 = vmatpush.xpose.msra.mxu0 0.0
    %1393 = vmatpush.xpose.msra.mxu0 0.0
    %1394 = vmatpush.xpose.msra.mxu0 0.0
    %1395 = vmatpush.xpose.msra.mxu0 0.0
    %1396 = vmatpush.xpose.msra.mxu0 0.0
    %1397 = vmatpush.xpose.msra.mxu0 0.0
    %1398 = vmatpush.xpose.msra.mxu0 0.0
    %1399 = vmatpush.xpose.msra.mxu0 0.0
    %1400 = vmatpush.xpose.msra.mxu0 0.0
    %1401 = vmatpush.xpose.msra.mxu0 0.0
    %1402 = vmatpush.xpose.msra.mxu0 0.0
    %v1403 = vand.u32 %v1387, 4294901760
    %1404 = vmatpush.xpose.msra.mxu0 %v1403
    %v1405 = vand.u32 %v1385, 4294901760
    %1406 = vmatpush.xpose.msra.mxu0 %v1405
    %v1407 = vand.u32 %v1383, 4294901760
    %v1408 = vsub.f32 %v1383, %v1407
    %v1409 = vand.u32 %v1408, 4294901760
    %v1410 = vsub.f32 %v1408, %v1409
    %v1411 = vand.u32 %v1410, 4294901760
    %1412 = vmatmul.f32.gmra.mxu0 %v1411
    %v1413 = vpop.f32.mrf.mxu0
    %v1414 = vadd.f32 0.0, %v1413
    %1415 = vdwg.mxu0
    %1416 = vmatpush.xpose.msra.mxu0 0.0
    %1417 = vmatpush.xpose.msra.mxu0 0.0
    %1418 = vmatpush.xpose.msra.mxu0 0.0
    %1419 = vmatpush.xpose.msra.mxu0 0.0
    %1420 = vmatpush.xpose.msra.mxu0 0.0
    %1421 = vmatpush.xpose.msra.mxu0 0.0
    %1422 = vmatpush.xpose.msra.mxu0 0.0
    %1423 = vmatpush.xpose.msra.mxu0 0.0
    %1424 = vmatpush.xpose.msra.mxu0 0.0
    %1425 = vmatpush.xpose.msra.mxu0 0.0
    %1426 = vmatpush.xpose.msra.mxu0 0.0
    %1427 = vmatpush.xpose.msra.mxu0 0.0
    %1428 = vmatpush.xpose.msra.mxu0 0.0
    %1429 = vmatpush.xpose.msra.mxu0 0.0
    %v1430 = vand.u32 %v1387, 4294901760
    %v1431 = vsub.f32 %v1387, %v1430
    %v1432 = vand.u32 %v1431, 4294901760
    %v1433 = vsub.f32 %v1431, %v1432
    %v1434 = vand.u32 %v1433, 4294901760
    %1435 = vmatpush.xpose.msra.mxu0 %v1434
    %v1436 = vand.u32 %v1385, 4294901760
    %v1437 = vsub.f32 %v1385, %v1436
    %v1438 = vand.u32 %v1437, 4294901760
    %v1439 = vsub.f32 %v1437, %v1438
    %v1440 = vand.u32 %v1439, 4294901760
    %1441 = vmatpush.xpose.msra.mxu0 %v1440
    %v1442 = vand.u32 %v1383, 4294901760
    %1443 = vmatmul.f32.gmra.mxu0 %v1442
    %v1444 = vpop.f32.mrf.mxu0
    %v1445 = vadd.f32 %v1414, %v1444
    %1446 = vdwg.mxu0
    %1447 = vmatpush.xpose.msra.mxu0 0.0
    %1448 = vmatpush.xpose.msra.mxu0 0.0
    %1449 = vmatpush.xpose.msra.mxu0 0.0
    %1450 = vmatpush.xpose.msra.mxu0 0.0
    %1451 = vmatpush.xpose.msra.mxu0 0.0
    %1452 = vmatpush.xpose.msra.mxu0 0.0
    %1453 = vmatpush.xpose.msra.mxu0 0.0
    %1454 = vmatpush.xpose.msra.mxu0 0.0
    %1455 = vmatpush.xpose.msra.mxu0 0.0
    %1456 = vmatpush.xpose.msra.mxu0 0.0
    %1457 = vmatpush.xpose.msra.mxu0 0.0
    %1458 = vmatpush.xpose.msra.mxu0 0.0
    %1459 = vmatpush.xpose.msra.mxu0 0.0
    %1460 = vmatpush.xpose.msra.mxu0 0.0
    %v1461 = vand.u32 %v1387, 4294901760
    %v1462 = vsub.f32 %v1387, %v1461
    %1463 = vmatpush.xpose.msra.mxu0 %v1462
    %v1464 = vand.u32 %v1385, 4294901760
    %v1465 = vsub.f32 %v1385, %v1464
    %1466 = vmatpush.xpose.msra.mxu0 %v1465
    %v1467 = vand.u32 %v1383, 4294901760
    %v1468 = vsub.f32 %v1383, %v1467
    %1469 = vmatmul.f32.gmra.mxu0 %v1468
    %v1470 = vpop.f32.mrf.mxu0
    %v1471 = vadd.f32 %v1445, %v1470
    %1472 = vdwg.mxu0
    %1473 = vmatpush.xpose.msra.mxu0 0.0
    %1474 = vmatpush.xpose.msra.mxu0 0.0
    %1475 = vmatpush.xpose.msra.mxu0 0.0
    %1476 = vmatpush.xpose.msra.mxu0 0.0
    %1477 = vmatpush.xpose.msra.mxu0 0.0
    %1478 = vmatpush.xpose.msra.mxu0 0.0
    %1479 = vmatpush.xpose.msra.mxu0 0.0
    %1480 = vmatpush.xpose.msra.mxu0 0.0
    %1481 = vmatpush.xpose.msra.mxu0 0.0
    %1482 = vmatpush.xpose.msra.mxu0 0.0
    %1483 = vmatpush.xpose.msra.mxu0 0.0
    %1484 = vmatpush.xpose.msra.mxu0 0.0
    %1485 = vmatpush.xpose.msra.mxu0 0.0
    %1486 = vmatpush.xpose.msra.mxu0 0.0
    %v1487 = vand.u32 %v1387, 4294901760
    %1488 = vmatpush.xpose.msra.mxu0 %v1487
    %v1489 = vand.u32 %v1385, 4294901760
    %1490 = vmatpush.xpose.msra.mxu0 %v1489
    %v1491 = vand.u32 %v1383, 4294901760
    %v1492 = vsub.f32 %v1383, %v1491
    %v1493 = vand.u32 %v1492, 4294901760
    %1494 = vmatmul.f32.gmra.mxu0 %v1493
    %v1495 = vpop.f32.mrf.mxu0
    %v1496 = vadd.f32 %v1471, %v1495
    %1497 = vdwg.mxu0
    %1498 = vmatpush.xpose.msra.mxu0 0.0
    %1499 = vmatpush.xpose.msra.mxu0 0.0
    %1500 = vmatpush.xpose.msra.mxu0 0.0
    %1501 = vmatpush.xpose.msra.mxu0 0.0
    %1502 = vmatpush.xpose.msra.mxu0 0.0
    %1503 = vmatpush.xpose.msra.mxu0 0.0
    %1504 = vmatpush.xpose.msra.mxu0 0.0
    %1505 = vmatpush.xpose.msra.mxu0 0.0
    %1506 = vmatpush.xpose.msra.mxu0 0.0
    %1507 = vmatpush.xpose.msra.mxu0 0.0
    %1508 = vmatpush.xpose.msra.mxu0 0.0
    %1509 = vmatpush.xpose.msra.mxu0 0.0
    %1510 = vmatpush.xpose.msra.mxu0 0.0
    %1511 = vmatpush.xpose.msra.mxu0 0.0
    %v1512 = vand.u32 %v1387, 4294901760
    %v1513 = vsub.f32 %v1387, %v1512
    %v1514 = vand.u32 %v1513, 4294901760
    %1515 = vmatpush.xpose.msra.mxu0 %v1514
    %v1516 = vand.u32 %v1385, 4294901760
    %v1517 = vsub.f32 %v1385, %v1516
    %v1518 = vand.u32 %v1517, 4294901760
    %1519 = vmatpush.xpose.msra.mxu0 %v1518
    %v1520 = vand.u32 %v1383, 4294901760
    %1521 = vmatmul.f32.gmra.mxu0 %v1520
    %v1522 = vpop.f32.mrf.mxu0
    %v1523 = vadd.f32 %v1496, %v1522
    %1524 = vdwg.mxu0
    %1525 = vmatpush.xpose.msra.mxu0 0.0
    %1526 = vmatpush.xpose.msra.mxu0 0.0
    %1527 = vmatpush.xpose.msra.mxu0 0.0
    %1528 = vmatpush.xpose.msra.mxu0 0.0
    %1529 = vmatpush.xpose.msra.mxu0 0.0
    %1530 = vmatpush.xpose.msra.mxu0 0.0
    %1531 = vmatpush.xpose.msra.mxu0 0.0
    %1532 = vmatpush.xpose.msra.mxu0 0.0
    %1533 = vmatpush.xpose.msra.mxu0 0.0
    %1534 = vmatpush.xpose.msra.mxu0 0.0
    %1535 = vmatpush.xpose.msra.mxu0 0.0
    %1536 = vmatpush.xpose.msra.mxu0 0.0
    %1537 = vmatpush.xpose.msra.mxu0 0.0
    %1538 = vmatpush.xpose.msra.mxu0 0.0
    %v1539 = vand.u32 %v1387, 4294901760
    %1540 = vmatpush.xpose.msra.mxu0 %v1539
    %v1541 = vand.u32 %v1385, 4294901760
    %1542 = vmatpush.xpose.msra.mxu0 %v1541
    %v1543 = vand.u32 %v1383, 4294901760
    %1544 = vmatmul.f32.gmra.mxu0 %v1543
    %v1545 = vpop.f32.mrf.mxu0
    %v1546 = vadd.f32 %v1523, %v1545
    %1547 = vdwg.mxu0
    %s1548 = scalar_lea.vmem %s4, 12
    %1549 = vst.msk [vmem:[%s1548] sm:$0x3] %vm294, %v1546
    %v1550 = vld [vmem:[%s0 + $0x7] sm:$0x1]
    %v1551 = vld [vmem:[%s0 + $0x17] sm:$0x1]
    %v1552 = vld [vmem:[#allocation4 + $0x7] sm:$0x1]
    %v1553 = vld [vmem:[#allocation4 + $0x17] sm:$0x1]
    %v1554 = vld [vmem:[#allocation4 + $0x27] sm:$0x1]
    %v1555 = vld [vmem:[#allocation4 + $0x37] sm:$0x1]
    %v1556 = vld [vmem:[#allocation4 + $0x47] sm:$0x1]
    %v1557 = vld [vmem:[#allocation4 + $0x57] sm:$0x1]
    %v1558 = vld [vmem:[#allocation4 + $0x67] sm:$0x1]
    %v1559 = vld [vmem:[#allocation4 + $0x77] sm:$0x1]
    %v1560 = vld [vmem:[#allocation4 + $0x87] sm:$0x1]
    %v1561 = vld [vmem:[#allocation4 + $0x97] sm:$0x1]
    %v1564 = vrot.slane %v1551, 7
    %v1565 = vsel %vm95, %v1564, %v1550
    %v1576 = vrot.slane %v1553, 7
    %v1577 = vsel %vm95, %v1576, %v1552
    %v1578 = vrot.slane %v1554, 6
    %v1579 = vsel %vm110, %v1578, %v1577
    %v1580 = vrot.slane %v1555, 5
    %v1581 = vsel %vm113, %v1580, %v1579
    %v1582 = vrot.slane %v1556, 4
    %v1583 = vsel %vm116, %v1582, %v1581
    %v1584 = vrot.slane %v1557, 3
    %v1585 = vsel %vm119, %v1584, %v1583
    %v1586 = vrot.slane %v1558, 2
    %v1587 = vsel %vm122, %v1586, %v1585
    %v1588 = vrot.slane %v1559, 1
    %v1589 = vsel %vm125, %v1588, %v1587
    %v1590 = vrot.slane %v1561, 7
    %v1591 = vsel %vm95, %v1590, %v1560
    %v1592 = vsel %vm52, %v1565, 0
    %v1594 = vsel %vm52, %v1589, 0
    %v1596 = vsel %vm52, %v1591, 0
    %1598 = vmatpush.xpose.msra.mxu0 0.0
    %1599 = vmatpush.xpose.msra.mxu0 0.0
    %1600 = vmatpush.xpose.msra.mxu0 0.0
    %1601 = vmatpush.xpose.msra.mxu0 0.0
    %1602 = vmatpush.xpose.msra.mxu0 0.0
    %1603 = vmatpush.xpose.msra.mxu0 0.0
    %1604 = vmatpush.xpose.msra.mxu0 0.0
    %1605 = vmatpush.xpose.msra.mxu0 0.0
    %1606 = vmatpush.xpose.msra.mxu0 0.0
    %1607 = vmatpush.xpose.msra.mxu0 0.0
    %1608 = vmatpush.xpose.msra.mxu0 0.0
    %1609 = vmatpush.xpose.msra.mxu0 0.0
    %1610 = vmatpush.xpose.msra.mxu0 0.0
    %1611 = vmatpush.xpose.msra.mxu0 0.0
    %v1612 = vand.u32 %v1596, 4294901760
    %1613 = vmatpush.xpose.msra.mxu0 %v1612
    %v1614 = vand.u32 %v1594, 4294901760
    %1615 = vmatpush.xpose.msra.mxu0 %v1614
    %v1616 = vand.u32 %v1592, 4294901760
    %v1617 = vsub.f32 %v1592, %v1616
    %v1618 = vand.u32 %v1617, 4294901760
    %v1619 = vsub.f32 %v1617, %v1618
    %v1620 = vand.u32 %v1619, 4294901760
    %1621 = vmatmul.f32.gmra.mxu0 %v1620
    %v1622 = vpop.f32.mrf.mxu0
    %v1623 = vadd.f32 0.0, %v1622
    %1624 = vdwg.mxu0
    %1625 = vmatpush.xpose.msra.mxu0 0.0
    %1626 = vmatpush.xpose.msra.mxu0 0.0
    %1627 = vmatpush.xpose.msra.mxu0 0.0
    %1628 = vmatpush.xpose.msra.mxu0 0.0
    %1629 = vmatpush.xpose.msra.mxu0 0.0
    %1630 = vmatpush.xpose.msra.mxu0 0.0
    %1631 = vmatpush.xpose.msra.mxu0 0.0
    %1632 = vmatpush.xpose.msra.mxu0 0.0
    %1633 = vmatpush.xpose.msra.mxu0 0.0
    %1634 = vmatpush.xpose.msra.mxu0 0.0
    %1635 = vmatpush.xpose.msra.mxu0 0.0
    %1636 = vmatpush.xpose.msra.mxu0 0.0
    %1637 = vmatpush.xpose.msra.mxu0 0.0
    %1638 = vmatpush.xpose.msra.mxu0 0.0
    %v1639 = vand.u32 %v1596, 4294901760
    %v1640 = vsub.f32 %v1596, %v1639
    %v1641 = vand.u32 %v1640, 4294901760
    %v1642 = vsub.f32 %v1640, %v1641
    %v1643 = vand.u32 %v1642, 4294901760
    %1644 = vmatpush.xpose.msra.mxu0 %v1643
    %v1645 = vand.u32 %v1594, 4294901760
    %v1646 = vsub.f32 %v1594, %v1645
    %v1647 = vand.u32 %v1646, 4294901760
    %v1648 = vsub.f32 %v1646, %v1647
    %v1649 = vand.u32 %v1648, 4294901760
    %1650 = vmatpush.xpose.msra.mxu0 %v1649
    %v1651 = vand.u32 %v1592, 4294901760
    %1652 = vmatmul.f32.gmra.mxu0 %v1651
    %v1653 = vpop.f32.mrf.mxu0
    %v1654 = vadd.f32 %v1623, %v1653
    %1655 = vdwg.mxu0
    %1656 = vmatpush.xpose.msra.mxu0 0.0
    %1657 = vmatpush.xpose.msra.mxu0 0.0
    %1658 = vmatpush.xpose.msra.mxu0 0.0
    %1659 = vmatpush.xpose.msra.mxu0 0.0
    %1660 = vmatpush.xpose.msra.mxu0 0.0
    %1661 = vmatpush.xpose.msra.mxu0 0.0
    %1662 = vmatpush.xpose.msra.mxu0 0.0
    %1663 = vmatpush.xpose.msra.mxu0 0.0
    %1664 = vmatpush.xpose.msra.mxu0 0.0
    %1665 = vmatpush.xpose.msra.mxu0 0.0
    %1666 = vmatpush.xpose.msra.mxu0 0.0
    %1667 = vmatpush.xpose.msra.mxu0 0.0
    %1668 = vmatpush.xpose.msra.mxu0 0.0
    %1669 = vmatpush.xpose.msra.mxu0 0.0
    %v1670 = vand.u32 %v1596, 4294901760
    %v1671 = vsub.f32 %v1596, %v1670
    %1672 = vmatpush.xpose.msra.mxu0 %v1671
    %v1673 = vand.u32 %v1594, 4294901760
    %v1674 = vsub.f32 %v1594, %v1673
    %1675 = vmatpush.xpose.msra.mxu0 %v1674
    %v1676 = vand.u32 %v1592, 4294901760
    %v1677 = vsub.f32 %v1592, %v1676
    %1678 = vmatmul.f32.gmra.mxu0 %v1677
    %v1679 = vpop.f32.mrf.mxu0
    %v1680 = vadd.f32 %v1654, %v1679
    %1681 = vdwg.mxu0
    %1682 = vmatpush.xpose.msra.mxu0 0.0
    %1683 = vmatpush.xpose.msra.mxu0 0.0
    %1684 = vmatpush.xpose.msra.mxu0 0.0
    %1685 = vmatpush.xpose.msra.mxu0 0.0
    %1686 = vmatpush.xpose.msra.mxu0 0.0
    %1687 = vmatpush.xpose.msra.mxu0 0.0
    %1688 = vmatpush.xpose.msra.mxu0 0.0
    %1689 = vmatpush.xpose.msra.mxu0 0.0
    %1690 = vmatpush.xpose.msra.mxu0 0.0
    %1691 = vmatpush.xpose.msra.mxu0 0.0
    %1692 = vmatpush.xpose.msra.mxu0 0.0
    %1693 = vmatpush.xpose.msra.mxu0 0.0
    %1694 = vmatpush.xpose.msra.mxu0 0.0
    %1695 = vmatpush.xpose.msra.mxu0 0.0
    %v1696 = vand.u32 %v1596, 4294901760
    %1697 = vmatpush.xpose.msra.mxu0 %v1696
    %v1698 = vand.u32 %v1594, 4294901760
    %1699 = vmatpush.xpose.msra.mxu0 %v1698
    %v1700 = vand.u32 %v1592, 4294901760
    %v1701 = vsub.f32 %v1592, %v1700
    %v1702 = vand.u32 %v1701, 4294901760
    %1703 = vmatmul.f32.gmra.mxu0 %v1702
    %v1704 = vpop.f32.mrf.mxu0
    %v1705 = vadd.f32 %v1680, %v1704
    %1706 = vdwg.mxu0
    %1707 = vmatpush.xpose.msra.mxu0 0.0
    %1708 = vmatpush.xpose.msra.mxu0 0.0
    %1709 = vmatpush.xpose.msra.mxu0 0.0
    %1710 = vmatpush.xpose.msra.mxu0 0.0
    %1711 = vmatpush.xpose.msra.mxu0 0.0
    %1712 = vmatpush.xpose.msra.mxu0 0.0
    %1713 = vmatpush.xpose.msra.mxu0 0.0
    %1714 = vmatpush.xpose.msra.mxu0 0.0
    %1715 = vmatpush.xpose.msra.mxu0 0.0
    %1716 = vmatpush.xpose.msra.mxu0 0.0
    %1717 = vmatpush.xpose.msra.mxu0 0.0
    %1718 = vmatpush.xpose.msra.mxu0 0.0
    %1719 = vmatpush.xpose.msra.mxu0 0.0
    %1720 = vmatpush.xpose.msra.mxu0 0.0
    %v1721 = vand.u32 %v1596, 4294901760
    %v1722 = vsub.f32 %v1596, %v1721
    %v1723 = vand.u32 %v1722, 4294901760
    %1724 = vmatpush.xpose.msra.mxu0 %v1723
    %v1725 = vand.u32 %v1594, 4294901760
    %v1726 = vsub.f32 %v1594, %v1725
    %v1727 = vand.u32 %v1726, 4294901760
    %1728 = vmatpush.xpose.msra.mxu0 %v1727
    %v1729 = vand.u32 %v1592, 4294901760
    %1730 = vmatmul.f32.gmra.mxu0 %v1729
    %v1731 = vpop.f32.mrf.mxu0
    %v1732 = vadd.f32 %v1705, %v1731
    %1733 = vdwg.mxu0
    %1734 = vmatpush.xpose.msra.mxu0 0.0
    %1735 = vmatpush.xpose.msra.mxu0 0.0
    %1736 = vmatpush.xpose.msra.mxu0 0.0
    %1737 = vmatpush.xpose.msra.mxu0 0.0
    %1738 = vmatpush.xpose.msra.mxu0 0.0
    %1739 = vmatpush.xpose.msra.mxu0 0.0
    %1740 = vmatpush.xpose.msra.mxu0 0.0
    %1741 = vmatpush.xpose.msra.mxu0 0.0
    %1742 = vmatpush.xpose.msra.mxu0 0.0
    %1743 = vmatpush.xpose.msra.mxu0 0.0
    %1744 = vmatpush.xpose.msra.mxu0 0.0
    %1745 = vmatpush.xpose.msra.mxu0 0.0
    %1746 = vmatpush.xpose.msra.mxu0 0.0
    %1747 = vmatpush.xpose.msra.mxu0 0.0
    %v1748 = vand.u32 %v1596, 4294901760
    %1749 = vmatpush.xpose.msra.mxu0 %v1748
    %v1750 = vand.u32 %v1594, 4294901760
    %1751 = vmatpush.xpose.msra.mxu0 %v1750
    %v1752 = vand.u32 %v1592, 4294901760
    %1753 = vmatmul.f32.gmra.mxu0 %v1752
    %v1754 = vpop.f32.mrf.mxu0
    %v1755 = vadd.f32 %v1732, %v1754
    %1756 = vdwg.mxu0
    %s1757 = scalar_lea.vmem %s4, 14
    %1758 = vst.msk [vmem:[%s1757] sm:$0x3] %vm294, %v1755
    %v1759 = vld [vmem:[%s0 + $0x8] sm:$0x1]
    %v1760 = vld [vmem:[%s0 + $0x18] sm:$0x1]
    %v1761 = vld [vmem:[#allocation4 + $0x8] sm:$0x1]
    %v1762 = vld [vmem:[#allocation4 + $0x18] sm:$0x1]
    %v1763 = vld [vmem:[#allocation4 + $0x28] sm:$0x1]
    %v1764 = vld [vmem:[#allocation4 + $0x38] sm:$0x1]
    %v1765 = vld [vmem:[#allocation4 + $0x48] sm:$0x1]
    %v1766 = vld [vmem:[#allocation4 + $0x58] sm:$0x1]
    %v1767 = vld [vmem:[#allocation4 + $0x68] sm:$0x1]
    %v1768 = vld [vmem:[#allocation4 + $0x78] sm:$0x1]
    %v1769 = vld [vmem:[#allocation4 + $0x88] sm:$0x1]
    %v1770 = vld [vmem:[#allocation4 + $0x98] sm:$0x1]
    %v1773 = vrot.slane %v1760, 7
    %v1774 = vsel %vm95, %v1773, %v1759
    %v1785 = vrot.slane %v1762, 7
    %v1786 = vsel %vm95, %v1785, %v1761
    %v1787 = vrot.slane %v1763, 6
    %v1788 = vsel %vm110, %v1787, %v1786
    %v1789 = vrot.slane %v1764, 5
    %v1790 = vsel %vm113, %v1789, %v1788
    %v1791 = vrot.slane %v1765, 4
    %v1792 = vsel %vm116, %v1791, %v1790
    %v1793 = vrot.slane %v1766, 3
    %v1794 = vsel %vm119, %v1793, %v1792
    %v1795 = vrot.slane %v1767, 2
    %v1796 = vsel %vm122, %v1795, %v1794
    %v1797 = vrot.slane %v1768, 1
    %v1798 = vsel %vm125, %v1797, %v1796
    %v1799 = vrot.slane %v1770, 7
    %v1800 = vsel %vm95, %v1799, %v1769
    %v1801 = vsel %vm52, %v1774, 0
    %v1803 = vsel %vm52, %v1798, 0
    %v1805 = vsel %vm52, %v1800, 0
    %1807 = vmatpush.xpose.msra.mxu0 0.0
    %1808 = vmatpush.xpose.msra.mxu0 0.0
    %1809 = vmatpush.xpose.msra.mxu0 0.0
    %1810 = vmatpush.xpose.msra.mxu0 0.0
    %1811 = vmatpush.xpose.msra.mxu0 0.0
    %1812 = vmatpush.xpose.msra.mxu0 0.0
    %1813 = vmatpush.xpose.msra.mxu0 0.0
    %1814 = vmatpush.xpose.msra.mxu0 0.0
    %1815 = vmatpush.xpose.msra.mxu0 0.0
    %1816 = vmatpush.xpose.msra.mxu0 0.0
    %1817 = vmatpush.xpose.msra.mxu0 0.0
    %1818 = vmatpush.xpose.msra.mxu0 0.0
    %1819 = vmatpush.xpose.msra.mxu0 0.0
    %1820 = vmatpush.xpose.msra.mxu0 0.0
    %v1821 = vand.u32 %v1805, 4294901760
    %1822 = vmatpush.xpose.msra.mxu0 %v1821
    %v1823 = vand.u32 %v1803, 4294901760
    %1824 = vmatpush.xpose.msra.mxu0 %v1823
    %v1825 = vand.u32 %v1801, 4294901760
    %v1826 = vsub.f32 %v1801, %v1825
    %v1827 = vand.u32 %v1826, 4294901760
    %v1828 = vsub.f32 %v1826, %v1827
    %v1829 = vand.u32 %v1828, 4294901760
    %1830 = vmatmul.f32.gmra.mxu0 %v1829
    %v1831 = vpop.f32.mrf.mxu0
    %v1832 = vadd.f32 0.0, %v1831
    %1833 = vdwg.mxu0
    %1834 = vmatpush.xpose.msra.mxu0 0.0
    %1835 = vmatpush.xpose.msra.mxu0 0.0
    %1836 = vmatpush.xpose.msra.mxu0 0.0
    %1837 = vmatpush.xpose.msra.mxu0 0.0
    %1838 = vmatpush.xpose.msra.mxu0 0.0
    %1839 = vmatpush.xpose.msra.mxu0 0.0
    %1840 = vmatpush.xpose.msra.mxu0 0.0
    %1841 = vmatpush.xpose.msra.mxu0 0.0
    %1842 = vmatpush.xpose.msra.mxu0 0.0
    %1843 = vmatpush.xpose.msra.mxu0 0.0
    %1844 = vmatpush.xpose.msra.mxu0 0.0
    %1845 = vmatpush.xpose.msra.mxu0 0.0
    %1846 = vmatpush.xpose.msra.mxu0 0.0
    %1847 = vmatpush.xpose.msra.mxu0 0.0
    %v1848 = vand.u32 %v1805, 4294901760
    %v1849 = vsub.f32 %v1805, %v1848
    %v1850 = vand.u32 %v1849, 4294901760
    %v1851 = vsub.f32 %v1849, %v1850
    %v1852 = vand.u32 %v1851, 4294901760
    %1853 = vmatpush.xpose.msra.mxu0 %v1852
    %v1854 = vand.u32 %v1803, 4294901760
    %v1855 = vsub.f32 %v1803, %v1854
    %v1856 = vand.u32 %v1855, 4294901760
    %v1857 = vsub.f32 %v1855, %v1856
    %v1858 = vand.u32 %v1857, 4294901760
    %1859 = vmatpush.xpose.msra.mxu0 %v1858
    %v1860 = vand.u32 %v1801, 4294901760
    %1861 = vmatmul.f32.gmra.mxu0 %v1860
    %v1862 = vpop.f32.mrf.mxu0
    %v1863 = vadd.f32 %v1832, %v1862
    %1864 = vdwg.mxu0
    %1865 = vmatpush.xpose.msra.mxu0 0.0
    %1866 = vmatpush.xpose.msra.mxu0 0.0
    %1867 = vmatpush.xpose.msra.mxu0 0.0
    %1868 = vmatpush.xpose.msra.mxu0 0.0
    %1869 = vmatpush.xpose.msra.mxu0 0.0
    %1870 = vmatpush.xpose.msra.mxu0 0.0
    %1871 = vmatpush.xpose.msra.mxu0 0.0
    %1872 = vmatpush.xpose.msra.mxu0 0.0
    %1873 = vmatpush.xpose.msra.mxu0 0.0
    %1874 = vmatpush.xpose.msra.mxu0 0.0
    %1875 = vmatpush.xpose.msra.mxu0 0.0
    %1876 = vmatpush.xpose.msra.mxu0 0.0
    %1877 = vmatpush.xpose.msra.mxu0 0.0
    %1878 = vmatpush.xpose.msra.mxu0 0.0
    %v1879 = vand.u32 %v1805, 4294901760
    %v1880 = vsub.f32 %v1805, %v1879
    %1881 = vmatpush.xpose.msra.mxu0 %v1880
    %v1882 = vand.u32 %v1803, 4294901760
    %v1883 = vsub.f32 %v1803, %v1882
    %1884 = vmatpush.xpose.msra.mxu0 %v1883
    %v1885 = vand.u32 %v1801, 4294901760
    %v1886 = vsub.f32 %v1801, %v1885
    %1887 = vmatmul.f32.gmra.mxu0 %v1886
    %v1888 = vpop.f32.mrf.mxu0
    %v1889 = vadd.f32 %v1863, %v1888
    %1890 = vdwg.mxu0
    %1891 = vmatpush.xpose.msra.mxu0 0.0
    %1892 = vmatpush.xpose.msra.mxu0 0.0
    %1893 = vmatpush.xpose.msra.mxu0 0.0
    %1894 = vmatpush.xpose.msra.mxu0 0.0
    %1895 = vmatpush.xpose.msra.mxu0 0.0
    %1896 = vmatpush.xpose.msra.mxu0 0.0
    %1897 = vmatpush.xpose.msra.mxu0 0.0
    %1898 = vmatpush.xpose.msra.mxu0 0.0
    %1899 = vmatpush.xpose.msra.mxu0 0.0
    %1900 = vmatpush.xpose.msra.mxu0 0.0
    %1901 = vmatpush.xpose.msra.mxu0 0.0
    %1902 = vmatpush.xpose.msra.mxu0 0.0
    %1903 = vmatpush.xpose.msra.mxu0 0.0
    %1904 = vmatpush.xpose.msra.mxu0 0.0
    %v1905 = vand.u32 %v1805, 4294901760
    %1906 = vmatpush.xpose.msra.mxu0 %v1905
    %v1907 = vand.u32 %v1803, 4294901760
    %1908 = vmatpush.xpose.msra.mxu0 %v1907
    %v1909 = vand.u32 %v1801, 4294901760
    %v1910 = vsub.f32 %v1801, %v1909
    %v1911 = vand.u32 %v1910, 4294901760
    %1912 = vmatmul.f32.gmra.mxu0 %v1911
    %v1913 = vpop.f32.mrf.mxu0
    %v1914 = vadd.f32 %v1889, %v1913
    %1915 = vdwg.mxu0
    %1916 = vmatpush.xpose.msra.mxu0 0.0
    %1917 = vmatpush.xpose.msra.mxu0 0.0
    %1918 = vmatpush.xpose.msra.mxu0 0.0
    %1919 = vmatpush.xpose.msra.mxu0 0.0
    %1920 = vmatpush.xpose.msra.mxu0 0.0
    %1921 = vmatpush.xpose.msra.mxu0 0.0
    %1922 = vmatpush.xpose.msra.mxu0 0.0
    %1923 = vmatpush.xpose.msra.mxu0 0.0
    %1924 = vmatpush.xpose.msra.mxu0 0.0
    %1925 = vmatpush.xpose.msra.mxu0 0.0
    %1926 = vmatpush.xpose.msra.mxu0 0.0
    %1927 = vmatpush.xpose.msra.mxu0 0.0
    %1928 = vmatpush.xpose.msra.mxu0 0.0
    %1929 = vmatpush.xpose.msra.mxu0 0.0
    %v1930 = vand.u32 %v1805, 4294901760
    %v1931 = vsub.f32 %v1805, %v1930
    %v1932 = vand.u32 %v1931, 4294901760
    %1933 = vmatpush.xpose.msra.mxu0 %v1932
    %v1934 = vand.u32 %v1803, 4294901760
    %v1935 = vsub.f32 %v1803, %v1934
    %v1936 = vand.u32 %v1935, 4294901760
    %1937 = vmatpush.xpose.msra.mxu0 %v1936
    %v1938 = vand.u32 %v1801, 4294901760
    %1939 = vmatmul.f32.gmra.mxu0 %v1938
    %v1940 = vpop.f32.mrf.mxu0
    %v1941 = vadd.f32 %v1914, %v1940
    %1942 = vdwg.mxu0
    %1943 = vmatpush.xpose.msra.mxu0 0.0
    %1944 = vmatpush.xpose.msra.mxu0 0.0
    %1945 = vmatpush.xpose.msra.mxu0 0.0
    %1946 = vmatpush.xpose.msra.mxu0 0.0
    %1947 = vmatpush.xpose.msra.mxu0 0.0
    %1948 = vmatpush.xpose.msra.mxu0 0.0
    %1949 = vmatpush.xpose.msra.mxu0 0.0
    %1950 = vmatpush.xpose.msra.mxu0 0.0
    %1951 = vmatpush.xpose.msra.mxu0 0.0
    %1952 = vmatpush.xpose.msra.mxu0 0.0
    %1953 = vmatpush.xpose.msra.mxu0 0.0
    %1954 = vmatpush.xpose.msra.mxu0 0.0
    %1955 = vmatpush.xpose.msra.mxu0 0.0
    %1956 = vmatpush.xpose.msra.mxu0 0.0
    %v1957 = vand.u32 %v1805, 4294901760
    %1958 = vmatpush.xpose.msra.mxu0 %v1957
    %v1959 = vand.u32 %v1803, 4294901760
    %1960 = vmatpush.xpose.msra.mxu0 %v1959
    %v1961 = vand.u32 %v1801, 4294901760
    %1962 = vmatmul.f32.gmra.mxu0 %v1961
    %v1963 = vpop.f32.mrf.mxu0
    %v1964 = vadd.f32 %v1941, %v1963
    %1965 = vdwg.mxu0
    %s1966 = scalar_lea.vmem %s4, 16
    %1967 = vst.msk [vmem:[%s1966] sm:$0x3] %vm294, %v1964
    %v1968 = vld [vmem:[%s0 + $0x9] sm:$0x1]
    %v1969 = vld [vmem:[%s0 + $0x19] sm:$0x1]
    %v1970 = vld [vmem:[#allocation4 + $0x9] sm:$0x1]
    %v1971 = vld [vmem:[#allocation4 + $0x19] sm:$0x1]
    %v1972 = vld [vmem:[#allocation4 + $0x29] sm:$0x1]
    %v1973 = vld [vmem:[#allocation4 + $0x39] sm:$0x1]
    %v1974 = vld [vmem:[#allocation4 + $0x49] sm:$0x1]
    %v1975 = vld [vmem:[#allocation4 + $0x59] sm:$0x1]
    %v1976 = vld [vmem:[#allocation4 + $0x69] sm:$0x1]
    %v1977 = vld [vmem:[#allocation4 + $0x79] sm:$0x1]
    %v1978 = vld [vmem:[#allocation4 + $0x89] sm:$0x1]
    %v1979 = vld [vmem:[#allocation4 + $0x99] sm:$0x1]
    %v1982 = vrot.slane %v1969, 7
    %v1983 = vsel %vm95, %v1982, %v1968
    %v1994 = vrot.slane %v1971, 7
    %v1995 = vsel %vm95, %v1994, %v1970
    %v1996 = vrot.slane %v1972, 6
    %v1997 = vsel %vm110, %v1996, %v1995
    %v1998 = vrot.slane %v1973, 5
    %v1999 = vsel %vm113, %v1998, %v1997
    %v2000 = vrot.slane %v1974, 4
    %v2001 = vsel %vm116, %v2000, %v1999
    %v2002 = vrot.slane %v1975, 3
    %v2003 = vsel %vm119, %v2002, %v2001
    %v2004 = vrot.slane %v1976, 2
    %v2005 = vsel %vm122, %v2004, %v2003
    %v2006 = vrot.slane %v1977, 1
    %v2007 = vsel %vm125, %v2006, %v2005
    %v2008 = vrot.slane %v1979, 7
    %v2009 = vsel %vm95, %v2008, %v1978
    %v2010 = vsel %vm52, %v1983, 0
    %v2012 = vsel %vm52, %v2007, 0
    %v2014 = vsel %vm52, %v2009, 0
    %2016 = vmatpush.xpose.msra.mxu0 0.0
    %2017 = vmatpush.xpose.msra.mxu0 0.0
    %2018 = vmatpush.xpose.msra.mxu0 0.0
    %2019 = vmatpush.xpose.msra.mxu0 0.0
    %2020 = vmatpush.xpose.msra.mxu0 0.0
    %2021 = vmatpush.xpose.msra.mxu0 0.0
    %2022 = vmatpush.xpose.msra.mxu0 0.0
    %2023 = vmatpush.xpose.msra.mxu0 0.0
    %2024 = vmatpush.xpose.msra.mxu0 0.0
    %2025 = vmatpush.xpose.msra.mxu0 0.0
    %2026 = vmatpush.xpose.msra.mxu0 0.0
    %2027 = vmatpush.xpose.msra.mxu0 0.0
    %2028 = vmatpush.xpose.msra.mxu0 0.0
    %2029 = vmatpush.xpose.msra.mxu0 0.0
    %v2030 = vand.u32 %v2014, 4294901760
    %2031 = vmatpush.xpose.msra.mxu0 %v2030
    %v2032 = vand.u32 %v2012, 4294901760
    %2033 = vmatpush.xpose.msra.mxu0 %v2032
    %v2034 = vand.u32 %v2010, 4294901760
    %v2035 = vsub.f32 %v2010, %v2034
    %v2036 = vand.u32 %v2035, 4294901760
    %v2037 = vsub.f32 %v2035, %v2036
    %v2038 = vand.u32 %v2037, 4294901760
    %2039 = vmatmul.f32.gmra.mxu0 %v2038
    %v2040 = vpop.f32.mrf.mxu0
    %v2041 = vadd.f32 0.0, %v2040
    %2042 = vdwg.mxu0
    %2043 = vmatpush.xpose.msra.mxu0 0.0
    %2044 = vmatpush.xpose.msra.mxu0 0.0
    %2045 = vmatpush.xpose.msra.mxu0 0.0
    %2046 = vmatpush.xpose.msra.mxu0 0.0
    %2047 = vmatpush.xpose.msra.mxu0 0.0
    %2048 = vmatpush.xpose.msra.mxu0 0.0
    %2049 = vmatpush.xpose.msra.mxu0 0.0
    %2050 = vmatpush.xpose.msra.mxu0 0.0
    %2051 = vmatpush.xpose.msra.mxu0 0.0
    %2052 = vmatpush.xpose.msra.mxu0 0.0
    %2053 = vmatpush.xpose.msra.mxu0 0.0
    %2054 = vmatpush.xpose.msra.mxu0 0.0
    %2055 = vmatpush.xpose.msra.mxu0 0.0
    %2056 = vmatpush.xpose.msra.mxu0 0.0
    %v2057 = vand.u32 %v2014, 4294901760
    %v2058 = vsub.f32 %v2014, %v2057
    %v2059 = vand.u32 %v2058, 4294901760
    %v2060 = vsub.f32 %v2058, %v2059
    %v2061 = vand.u32 %v2060, 4294901760
    %2062 = vmatpush.xpose.msra.mxu0 %v2061
    %v2063 = vand.u32 %v2012, 4294901760
    %v2064 = vsub.f32 %v2012, %v2063
    %v2065 = vand.u32 %v2064, 4294901760
    %v2066 = vsub.f32 %v2064, %v2065
    %v2067 = vand.u32 %v2066, 4294901760
    %2068 = vmatpush.xpose.msra.mxu0 %v2067
    %v2069 = vand.u32 %v2010, 4294901760
    %2070 = vmatmul.f32.gmra.mxu0 %v2069
    %v2071 = vpop.f32.mrf.mxu0
    %v2072 = vadd.f32 %v2041, %v2071
    %2073 = vdwg.mxu0
    %2074 = vmatpush.xpose.msra.mxu0 0.0
    %2075 = vmatpush.xpose.msra.mxu0 0.0
    %2076 = vmatpush.xpose.msra.mxu0 0.0
    %2077 = vmatpush.xpose.msra.mxu0 0.0
    %2078 = vmatpush.xpose.msra.mxu0 0.0
    %2079 = vmatpush.xpose.msra.mxu0 0.0
    %2080 = vmatpush.xpose.msra.mxu0 0.0
    %2081 = vmatpush.xpose.msra.mxu0 0.0
    %2082 = vmatpush.xpose.msra.mxu0 0.0
    %2083 = vmatpush.xpose.msra.mxu0 0.0
    %2084 = vmatpush.xpose.msra.mxu0 0.0
    %2085 = vmatpush.xpose.msra.mxu0 0.0
    %2086 = vmatpush.xpose.msra.mxu0 0.0
    %2087 = vmatpush.xpose.msra.mxu0 0.0
    %v2088 = vand.u32 %v2014, 4294901760
    %v2089 = vsub.f32 %v2014, %v2088
    %2090 = vmatpush.xpose.msra.mxu0 %v2089
    %v2091 = vand.u32 %v2012, 4294901760
    %v2092 = vsub.f32 %v2012, %v2091
    %2093 = vmatpush.xpose.msra.mxu0 %v2092
    %v2094 = vand.u32 %v2010, 4294901760
    %v2095 = vsub.f32 %v2010, %v2094
    %2096 = vmatmul.f32.gmra.mxu0 %v2095
    %v2097 = vpop.f32.mrf.mxu0
    %v2098 = vadd.f32 %v2072, %v2097
    %2099 = vdwg.mxu0
    %2100 = vmatpush.xpose.msra.mxu0 0.0
    %2101 = vmatpush.xpose.msra.mxu0 0.0
    %2102 = vmatpush.xpose.msra.mxu0 0.0
    %2103 = vmatpush.xpose.msra.mxu0 0.0
    %2104 = vmatpush.xpose.msra.mxu0 0.0
    %2105 = vmatpush.xpose.msra.mxu0 0.0
    %2106 = vmatpush.xpose.msra.mxu0 0.0
    %2107 = vmatpush.xpose.msra.mxu0 0.0
    %2108 = vmatpush.xpose.msra.mxu0 0.0
    %2109 = vmatpush.xpose.msra.mxu0 0.0
    %2110 = vmatpush.xpose.msra.mxu0 0.0
    %2111 = vmatpush.xpose.msra.mxu0 0.0
    %2112 = vmatpush.xpose.msra.mxu0 0.0
    %2113 = vmatpush.xpose.msra.mxu0 0.0
    %v2114 = vand.u32 %v2014, 4294901760
    %2115 = vmatpush.xpose.msra.mxu0 %v2114
    %v2116 = vand.u32 %v2012, 4294901760
    %2117 = vmatpush.xpose.msra.mxu0 %v2116
    %v2118 = vand.u32 %v2010, 4294901760
    %v2119 = vsub.f32 %v2010, %v2118
    %v2120 = vand.u32 %v2119, 4294901760
    %2121 = vmatmul.f32.gmra.mxu0 %v2120
    %v2122 = vpop.f32.mrf.mxu0
    %v2123 = vadd.f32 %v2098, %v2122
    %2124 = vdwg.mxu0
    %2125 = vmatpush.xpose.msra.mxu0 0.0
    %2126 = vmatpush.xpose.msra.mxu0 0.0
    %2127 = vmatpush.xpose.msra.mxu0 0.0
    %2128 = vmatpush.xpose.msra.mxu0 0.0
    %2129 = vmatpush.xpose.msra.mxu0 0.0
    %2130 = vmatpush.xpose.msra.mxu0 0.0
    %2131 = vmatpush.xpose.msra.mxu0 0.0
    %2132 = vmatpush.xpose.msra.mxu0 0.0
    %2133 = vmatpush.xpose.msra.mxu0 0.0
    %2134 = vmatpush.xpose.msra.mxu0 0.0
    %2135 = vmatpush.xpose.msra.mxu0 0.0
    %2136 = vmatpush.xpose.msra.mxu0 0.0
    %2137 = vmatpush.xpose.msra.mxu0 0.0
    %2138 = vmatpush.xpose.msra.mxu0 0.0
    %v2139 = vand.u32 %v2014, 4294901760
    %v2140 = vsub.f32 %v2014, %v2139
    %v2141 = vand.u32 %v2140, 4294901760
    %2142 = vmatpush.xpose.msra.mxu0 %v2141
    %v2143 = vand.u32 %v2012, 4294901760
    %v2144 = vsub.f32 %v2012, %v2143
    %v2145 = vand.u32 %v2144, 4294901760
    %2146 = vmatpush.xpose.msra.mxu0 %v2145
    %v2147 = vand.u32 %v2010, 4294901760
    %2148 = vmatmul.f32.gmra.mxu0 %v2147
    %v2149 = vpop.f32.mrf.mxu0
    %v2150 = vadd.f32 %v2123, %v2149
    %2151 = vdwg.mxu0
    %2152 = vmatpush.xpose.msra.mxu0 0.0
    %2153 = vmatpush.xpose.msra.mxu0 0.0
    %2154 = vmatpush.xpose.msra.mxu0 0.0
    %2155 = vmatpush.xpose.msra.mxu0 0.0
    %2156 = vmatpush.xpose.msra.mxu0 0.0
    %2157 = vmatpush.xpose.msra.mxu0 0.0
    %2158 = vmatpush.xpose.msra.mxu0 0.0
    %2159 = vmatpush.xpose.msra.mxu0 0.0
    %2160 = vmatpush.xpose.msra.mxu0 0.0
    %2161 = vmatpush.xpose.msra.mxu0 0.0
    %2162 = vmatpush.xpose.msra.mxu0 0.0
    %2163 = vmatpush.xpose.msra.mxu0 0.0
    %2164 = vmatpush.xpose.msra.mxu0 0.0
    %2165 = vmatpush.xpose.msra.mxu0 0.0
    %v2166 = vand.u32 %v2014, 4294901760
    %2167 = vmatpush.xpose.msra.mxu0 %v2166
    %v2168 = vand.u32 %v2012, 4294901760
    %2169 = vmatpush.xpose.msra.mxu0 %v2168
    %v2170 = vand.u32 %v2010, 4294901760
    %2171 = vmatmul.f32.gmra.mxu0 %v2170
    %v2172 = vpop.f32.mrf.mxu0
    %v2173 = vadd.f32 %v2150, %v2172
    %2174 = vdwg.mxu0
    %s2175 = scalar_lea.vmem %s4, 18
    %2176 = vst.msk [vmem:[%s2175] sm:$0x3] %vm294, %v2173
    %v2177 = vld [vmem:[%s0 + $0xa] sm:$0x1]
    %v2178 = vld [vmem:[%s0 + $0x1a] sm:$0x1]
    %v2179 = vld [vmem:[#allocation4 + $0xa] sm:$0x1]
    %v2180 = vld [vmem:[#allocation4 + $0x1a] sm:$0x1]
    %v2181 = vld [vmem:[#allocation4 + $0x2a] sm:$0x1]
    %v2182 = vld [vmem:[#allocation4 + $0x3a] sm:$0x1]
    %v2183 = vld [vmem:[#allocation4 + $0x4a] sm:$0x1]
    %v2184 = vld [vmem:[#allocation4 + $0x5a] sm:$0x1]
    %v2185 = vld [vmem:[#allocation4 + $0x6a] sm:$0x1]
    %v2186 = vld [vmem:[#allocation4 + $0x7a] sm:$0x1]
    %v2187 = vld [vmem:[#allocation4 + $0x8a] sm:$0x1]
    %v2188 = vld [vmem:[#allocation4 + $0x9a] sm:$0x1]
    %v2191 = vrot.slane %v2178, 7
    %v2192 = vsel %vm95, %v2191, %v2177
    %v2203 = vrot.slane %v2180, 7
    %v2204 = vsel %vm95, %v2203, %v2179
    %v2205 = vrot.slane %v2181, 6
    %v2206 = vsel %vm110, %v2205, %v2204
    %v2207 = vrot.slane %v2182, 5
    %v2208 = vsel %vm113, %v2207, %v2206
    %v2209 = vrot.slane %v2183, 4
    %v2210 = vsel %vm116, %v2209, %v2208
    %v2211 = vrot.slane %v2184, 3
    %v2212 = vsel %vm119, %v2211, %v2210
    %v2213 = vrot.slane %v2185, 2
    %v2214 = vsel %vm122, %v2213, %v2212
    %v2215 = vrot.slane %v2186, 1
    %v2216 = vsel %vm125, %v2215, %v2214
    %v2217 = vrot.slane %v2188, 7
    %v2218 = vsel %vm95, %v2217, %v2187
    %v2219 = vsel %vm52, %v2192, 0
    %v2221 = vsel %vm52, %v2216, 0
    %v2223 = vsel %vm52, %v2218, 0
    %2225 = vmatpush.xpose.msra.mxu0 0.0
    %2226 = vmatpush.xpose.msra.mxu0 0.0
    %2227 = vmatpush.xpose.msra.mxu0 0.0
    %2228 = vmatpush.xpose.msra.mxu0 0.0
    %2229 = vmatpush.xpose.msra.mxu0 0.0
    %2230 = vmatpush.xpose.msra.mxu0 0.0
    %2231 = vmatpush.xpose.msra.mxu0 0.0
    %2232 = vmatpush.xpose.msra.mxu0 0.0
    %2233 = vmatpush.xpose.msra.mxu0 0.0
    %2234 = vmatpush.xpose.msra.mxu0 0.0
    %2235 = vmatpush.xpose.msra.mxu0 0.0
    %2236 = vmatpush.xpose.msra.mxu0 0.0
    %2237 = vmatpush.xpose.msra.mxu0 0.0
    %2238 = vmatpush.xpose.msra.mxu0 0.0
    %v2239 = vand.u32 %v2223, 4294901760
    %2240 = vmatpush.xpose.msra.mxu0 %v2239
    %v2241 = vand.u32 %v2221, 4294901760
    %2242 = vmatpush.xpose.msra.mxu0 %v2241
    %v2243 = vand.u32 %v2219, 4294901760
    %v2244 = vsub.f32 %v2219, %v2243
    %v2245 = vand.u32 %v2244, 4294901760
    %v2246 = vsub.f32 %v2244, %v2245
    %v2247 = vand.u32 %v2246, 4294901760
    %2248 = vmatmul.f32.gmra.mxu0 %v2247
    %v2249 = vpop.f32.mrf.mxu0
    %v2250 = vadd.f32 0.0, %v2249
    %2251 = vdwg.mxu0
    %2252 = vmatpush.xpose.msra.mxu0 0.0
    %2253 = vmatpush.xpose.msra.mxu0 0.0
    %2254 = vmatpush.xpose.msra.mxu0 0.0
    %2255 = vmatpush.xpose.msra.mxu0 0.0
    %2256 = vmatpush.xpose.msra.mxu0 0.0
    %2257 = vmatpush.xpose.msra.mxu0 0.0
    %2258 = vmatpush.xpose.msra.mxu0 0.0
    %2259 = vmatpush.xpose.msra.mxu0 0.0
    %2260 = vmatpush.xpose.msra.mxu0 0.0
    %2261 = vmatpush.xpose.msra.mxu0 0.0
    %2262 = vmatpush.xpose.msra.mxu0 0.0
    %2263 = vmatpush.xpose.msra.mxu0 0.0
    %2264 = vmatpush.xpose.msra.mxu0 0.0
    %2265 = vmatpush.xpose.msra.mxu0 0.0
    %v2266 = vand.u32 %v2223, 4294901760
    %v2267 = vsub.f32 %v2223, %v2266
    %v2268 = vand.u32 %v2267, 4294901760
    %v2269 = vsub.f32 %v2267, %v2268
    %v2270 = vand.u32 %v2269, 4294901760
    %2271 = vmatpush.xpose.msra.mxu0 %v2270
    %v2272 = vand.u32 %v2221, 4294901760
    %v2273 = vsub.f32 %v2221, %v2272
    %v2274 = vand.u32 %v2273, 4294901760
    %v2275 = vsub.f32 %v2273, %v2274
    %v2276 = vand.u32 %v2275, 4294901760
    %2277 = vmatpush.xpose.msra.mxu0 %v2276
    %v2278 = vand.u32 %v2219, 4294901760
    %2279 = vmatmul.f32.gmra.mxu0 %v2278
    %v2280 = vpop.f32.mrf.mxu0
    %v2281 = vadd.f32 %v2250, %v2280
    %2282 = vdwg.mxu0
    %2283 = vmatpush.xpose.msra.mxu0 0.0
    %2284 = vmatpush.xpose.msra.mxu0 0.0
    %2285 = vmatpush.xpose.msra.mxu0 0.0
    %2286 = vmatpush.xpose.msra.mxu0 0.0
    %2287 = vmatpush.xpose.msra.mxu0 0.0
    %2288 = vmatpush.xpose.msra.mxu0 0.0
    %2289 = vmatpush.xpose.msra.mxu0 0.0
    %2290 = vmatpush.xpose.msra.mxu0 0.0
    %2291 = vmatpush.xpose.msra.mxu0 0.0
    %2292 = vmatpush.xpose.msra.mxu0 0.0
    %2293 = vmatpush.xpose.msra.mxu0 0.0
    %2294 = vmatpush.xpose.msra.mxu0 0.0
    %2295 = vmatpush.xpose.msra.mxu0 0.0
    %2296 = vmatpush.xpose.msra.mxu0 0.0
    %v2297 = vand.u32 %v2223, 4294901760
    %v2298 = vsub.f32 %v2223, %v2297
    %2299 = vmatpush.xpose.msra.mxu0 %v2298
    %v2300 = vand.u32 %v2221, 4294901760
    %v2301 = vsub.f32 %v2221, %v2300
    %2302 = vmatpush.xpose.msra.mxu0 %v2301
    %v2303 = vand.u32 %v2219, 4294901760
    %v2304 = vsub.f32 %v2219, %v2303
    %2305 = vmatmul.f32.gmra.mxu0 %v2304
    %v2306 = vpop.f32.mrf.mxu0
    %v2307 = vadd.f32 %v2281, %v2306
    %2308 = vdwg.mxu0
    %2309 = vmatpush.xpose.msra.mxu0 0.0
    %2310 = vmatpush.xpose.msra.mxu0 0.0
    %2311 = vmatpush.xpose.msra.mxu0 0.0
    %2312 = vmatpush.xpose.msra.mxu0 0.0
    %2313 = vmatpush.xpose.msra.mxu0 0.0
    %2314 = vmatpush.xpose.msra.mxu0 0.0
    %2315 = vmatpush.xpose.msra.mxu0 0.0
    %2316 = vmatpush.xpose.msra.mxu0 0.0
    %2317 = vmatpush.xpose.msra.mxu0 0.0
    %2318 = vmatpush.xpose.msra.mxu0 0.0
    %2319 = vmatpush.xpose.msra.mxu0 0.0
    %2320 = vmatpush.xpose.msra.mxu0 0.0
    %2321 = vmatpush.xpose.msra.mxu0 0.0
    %2322 = vmatpush.xpose.msra.mxu0 0.0
    %v2323 = vand.u32 %v2223, 4294901760
    %2324 = vmatpush.xpose.msra.mxu0 %v2323
    %v2325 = vand.u32 %v2221, 4294901760
    %2326 = vmatpush.xpose.msra.mxu0 %v2325
    %v2327 = vand.u32 %v2219, 4294901760
    %v2328 = vsub.f32 %v2219, %v2327
    %v2329 = vand.u32 %v2328, 4294901760
    %2330 = vmatmul.f32.gmra.mxu0 %v2329
    %v2331 = vpop.f32.mrf.mxu0
    %v2332 = vadd.f32 %v2307, %v2331
    %2333 = vdwg.mxu0
    %2334 = vmatpush.xpose.msra.mxu0 0.0
    %2335 = vmatpush.xpose.msra.mxu0 0.0
    %2336 = vmatpush.xpose.msra.mxu0 0.0
    %2337 = vmatpush.xpose.msra.mxu0 0.0
    %2338 = vmatpush.xpose.msra.mxu0 0.0
    %2339 = vmatpush.xpose.msra.mxu0 0.0
    %2340 = vmatpush.xpose.msra.mxu0 0.0
    %2341 = vmatpush.xpose.msra.mxu0 0.0
    %2342 = vmatpush.xpose.msra.mxu0 0.0
    %2343 = vmatpush.xpose.msra.mxu0 0.0
    %2344 = vmatpush.xpose.msra.mxu0 0.0
    %2345 = vmatpush.xpose.msra.mxu0 0.0
    %2346 = vmatpush.xpose.msra.mxu0 0.0
    %2347 = vmatpush.xpose.msra.mxu0 0.0
    %v2348 = vand.u32 %v2223, 4294901760
    %v2349 = vsub.f32 %v2223, %v2348
    %v2350 = vand.u32 %v2349, 4294901760
    %2351 = vmatpush.xpose.msra.mxu0 %v2350
    %v2352 = vand.u32 %v2221, 4294901760
    %v2353 = vsub.f32 %v2221, %v2352
    %v2354 = vand.u32 %v2353, 4294901760
    %2355 = vmatpush.xpose.msra.mxu0 %v2354
    %v2356 = vand.u32 %v2219, 4294901760
    %2357 = vmatmul.f32.gmra.mxu0 %v2356
    %v2358 = vpop.f32.mrf.mxu0
    %v2359 = vadd.f32 %v2332, %v2358
    %2360 = vdwg.mxu0
    %2361 = vmatpush.xpose.msra.mxu0 0.0
    %2362 = vmatpush.xpose.msra.mxu0 0.0
    %2363 = vmatpush.xpose.msra.mxu0 0.0
    %2364 = vmatpush.xpose.msra.mxu0 0.0
    %2365 = vmatpush.xpose.msra.mxu0 0.0
    %2366 = vmatpush.xpose.msra.mxu0 0.0
    %2367 = vmatpush.xpose.msra.mxu0 0.0
    %2368 = vmatpush.xpose.msra.mxu0 0.0
    %2369 = vmatpush.xpose.msra.mxu0 0.0
    %2370 = vmatpush.xpose.msra.mxu0 0.0
    %2371 = vmatpush.xpose.msra.mxu0 0.0
    %2372 = vmatpush.xpose.msra.mxu0 0.0
    %2373 = vmatpush.xpose.msra.mxu0 0.0
    %2374 = vmatpush.xpose.msra.mxu0 0.0
    %v2375 = vand.u32 %v2223, 4294901760
    %2376 = vmatpush.xpose.msra.mxu0 %v2375
    %v2377 = vand.u32 %v2221, 4294901760
    %2378 = vmatpush.xpose.msra.mxu0 %v2377
    %v2379 = vand.u32 %v2219, 4294901760
    %2380 = vmatmul.f32.gmra.mxu0 %v2379
    %v2381 = vpop.f32.mrf.mxu0
    %v2382 = vadd.f32 %v2359, %v2381
    %2383 = vdwg.mxu0
    %s2384 = scalar_lea.vmem %s4, 20
    %2385 = vst.msk [vmem:[%s2384] sm:$0x3] %vm294, %v2382
    %v2386 = vld [vmem:[%s0 + $0xb] sm:$0x1]
    %v2387 = vld [vmem:[%s0 + $0x1b] sm:$0x1]
    %v2388 = vld [vmem:[#allocation4 + $0xb] sm:$0x1]
    %v2389 = vld [vmem:[#allocation4 + $0x1b] sm:$0x1]
    %v2390 = vld [vmem:[#allocation4 + $0x2b] sm:$0x1]
    %v2391 = vld [vmem:[#allocation4 + $0x3b] sm:$0x1]
    %v2392 = vld [vmem:[#allocation4 + $0x4b] sm:$0x1]
    %v2393 = vld [vmem:[#allocation4 + $0x5b] sm:$0x1]
    %v2394 = vld [vmem:[#allocation4 + $0x6b] sm:$0x1]
    %v2395 = vld [vmem:[#allocation4 + $0x7b] sm:$0x1]
    %v2396 = vld [vmem:[#allocation4 + $0x8b] sm:$0x1]
    %v2397 = vld [vmem:[#allocation4 + $0x9b] sm:$0x1]
    %v2400 = vrot.slane %v2387, 7
    %v2401 = vsel %vm95, %v2400, %v2386
    %v2412 = vrot.slane %v2389, 7
    %v2413 = vsel %vm95, %v2412, %v2388
    %v2414 = vrot.slane %v2390, 6
    %v2415 = vsel %vm110, %v2414, %v2413
    %v2416 = vrot.slane %v2391, 5
    %v2417 = vsel %vm113, %v2416, %v2415
    %v2418 = vrot.slane %v2392, 4
    %v2419 = vsel %vm116, %v2418, %v2417
    %v2420 = vrot.slane %v2393, 3
    %v2421 = vsel %vm119, %v2420, %v2419
    %v2422 = vrot.slane %v2394, 2
    %v2423 = vsel %vm122, %v2422, %v2421
    %v2424 = vrot.slane %v2395, 1
    %v2425 = vsel %vm125, %v2424, %v2423
    %v2426 = vrot.slane %v2397, 7
    %v2427 = vsel %vm95, %v2426, %v2396
    %v2428 = vsel %vm52, %v2401, 0
    %v2430 = vsel %vm52, %v2425, 0
    %v2432 = vsel %vm52, %v2427, 0
    %2434 = vmatpush.xpose.msra.mxu0 0.0
    %2435 = vmatpush.xpose.msra.mxu0 0.0
    %2436 = vmatpush.xpose.msra.mxu0 0.0
    %2437 = vmatpush.xpose.msra.mxu0 0.0
    %2438 = vmatpush.xpose.msra.mxu0 0.0
    %2439 = vmatpush.xpose.msra.mxu0 0.0
    %2440 = vmatpush.xpose.msra.mxu0 0.0
    %2441 = vmatpush.xpose.msra.mxu0 0.0
    %2442 = vmatpush.xpose.msra.mxu0 0.0
    %2443 = vmatpush.xpose.msra.mxu0 0.0
    %2444 = vmatpush.xpose.msra.mxu0 0.0
    %2445 = vmatpush.xpose.msra.mxu0 0.0
    %2446 = vmatpush.xpose.msra.mxu0 0.0
    %2447 = vmatpush.xpose.msra.mxu0 0.0
    %v2448 = vand.u32 %v2432, 4294901760
    %2449 = vmatpush.xpose.msra.mxu0 %v2448
    %v2450 = vand.u32 %v2430, 4294901760
    %2451 = vmatpush.xpose.msra.mxu0 %v2450
    %v2452 = vand.u32 %v2428, 4294901760
    %v2453 = vsub.f32 %v2428, %v2452
    %v2454 = vand.u32 %v2453, 4294901760
    %v2455 = vsub.f32 %v2453, %v2454
    %v2456 = vand.u32 %v2455, 4294901760
    %2457 = vmatmul.f32.gmra.mxu0 %v2456
    %v2458 = vpop.f32.mrf.mxu0
    %v2459 = vadd.f32 0.0, %v2458
    %2460 = vdwg.mxu0
    %2461 = vmatpush.xpose.msra.mxu0 0.0
    %2462 = vmatpush.xpose.msra.mxu0 0.0
    %2463 = vmatpush.xpose.msra.mxu0 0.0
    %2464 = vmatpush.xpose.msra.mxu0 0.0
    %2465 = vmatpush.xpose.msra.mxu0 0.0
    %2466 = vmatpush.xpose.msra.mxu0 0.0
    %2467 = vmatpush.xpose.msra.mxu0 0.0
    %2468 = vmatpush.xpose.msra.mxu0 0.0
    %2469 = vmatpush.xpose.msra.mxu0 0.0
    %2470 = vmatpush.xpose.msra.mxu0 0.0
    %2471 = vmatpush.xpose.msra.mxu0 0.0
    %2472 = vmatpush.xpose.msra.mxu0 0.0
    %2473 = vmatpush.xpose.msra.mxu0 0.0
    %2474 = vmatpush.xpose.msra.mxu0 0.0
    %v2475 = vand.u32 %v2432, 4294901760
    %v2476 = vsub.f32 %v2432, %v2475
    %v2477 = vand.u32 %v2476, 4294901760
    %v2478 = vsub.f32 %v2476, %v2477
    %v2479 = vand.u32 %v2478, 4294901760
    %2480 = vmatpush.xpose.msra.mxu0 %v2479
    %v2481 = vand.u32 %v2430, 4294901760
    %v2482 = vsub.f32 %v2430, %v2481
    %v2483 = vand.u32 %v2482, 4294901760
    %v2484 = vsub.f32 %v2482, %v2483
    %v2485 = vand.u32 %v2484, 4294901760
    %2486 = vmatpush.xpose.msra.mxu0 %v2485
    %v2487 = vand.u32 %v2428, 4294901760
    %2488 = vmatmul.f32.gmra.mxu0 %v2487
    %v2489 = vpop.f32.mrf.mxu0
    %v2490 = vadd.f32 %v2459, %v2489
    %2491 = vdwg.mxu0
    %2492 = vmatpush.xpose.msra.mxu0 0.0
    %2493 = vmatpush.xpose.msra.mxu0 0.0
    %2494 = vmatpush.xpose.msra.mxu0 0.0
    %2495 = vmatpush.xpose.msra.mxu0 0.0
    %2496 = vmatpush.xpose.msra.mxu0 0.0
    %2497 = vmatpush.xpose.msra.mxu0 0.0
    %2498 = vmatpush.xpose.msra.mxu0 0.0
    %2499 = vmatpush.xpose.msra.mxu0 0.0
    %2500 = vmatpush.xpose.msra.mxu0 0.0
    %2501 = vmatpush.xpose.msra.mxu0 0.0
    %2502 = vmatpush.xpose.msra.mxu0 0.0
    %2503 = vmatpush.xpose.msra.mxu0 0.0
    %2504 = vmatpush.xpose.msra.mxu0 0.0
    %2505 = vmatpush.xpose.msra.mxu0 0.0
    %v2506 = vand.u32 %v2432, 4294901760
    %v2507 = vsub.f32 %v2432, %v2506
    %2508 = vmatpush.xpose.msra.mxu0 %v2507
    %v2509 = vand.u32 %v2430, 4294901760
    %v2510 = vsub.f32 %v2430, %v2509
    %2511 = vmatpush.xpose.msra.mxu0 %v2510
    %v2512 = vand.u32 %v2428, 4294901760
    %v2513 = vsub.f32 %v2428, %v2512
    %2514 = vmatmul.f32.gmra.mxu0 %v2513
    %v2515 = vpop.f32.mrf.mxu0
    %v2516 = vadd.f32 %v2490, %v2515
    %2517 = vdwg.mxu0
    %2518 = vmatpush.xpose.msra.mxu0 0.0
    %2519 = vmatpush.xpose.msra.mxu0 0.0
    %2520 = vmatpush.xpose.msra.mxu0 0.0
    %2521 = vmatpush.xpose.msra.mxu0 0.0
    %2522 = vmatpush.xpose.msra.mxu0 0.0
    %2523 = vmatpush.xpose.msra.mxu0 0.0
    %2524 = vmatpush.xpose.msra.mxu0 0.0
    %2525 = vmatpush.xpose.msra.mxu0 0.0
    %2526 = vmatpush.xpose.msra.mxu0 0.0
    %2527 = vmatpush.xpose.msra.mxu0 0.0
    %2528 = vmatpush.xpose.msra.mxu0 0.0
    %2529 = vmatpush.xpose.msra.mxu0 0.0
    %2530 = vmatpush.xpose.msra.mxu0 0.0
    %2531 = vmatpush.xpose.msra.mxu0 0.0
    %v2532 = vand.u32 %v2432, 4294901760
    %2533 = vmatpush.xpose.msra.mxu0 %v2532
    %v2534 = vand.u32 %v2430, 4294901760
    %2535 = vmatpush.xpose.msra.mxu0 %v2534
    %v2536 = vand.u32 %v2428, 4294901760
    %v2537 = vsub.f32 %v2428, %v2536
    %v2538 = vand.u32 %v2537, 4294901760
    %2539 = vmatmul.f32.gmra.mxu0 %v2538
    %v2540 = vpop.f32.mrf.mxu0
    %v2541 = vadd.f32 %v2516, %v2540
    %2542 = vdwg.mxu0
    %2543 = vmatpush.xpose.msra.mxu0 0.0
    %2544 = vmatpush.xpose.msra.mxu0 0.0
    %2545 = vmatpush.xpose.msra.mxu0 0.0
    %2546 = vmatpush.xpose.msra.mxu0 0.0
    %2547 = vmatpush.xpose.msra.mxu0 0.0
    %2548 = vmatpush.xpose.msra.mxu0 0.0
    %2549 = vmatpush.xpose.msra.mxu0 0.0
    %2550 = vmatpush.xpose.msra.mxu0 0.0
    %2551 = vmatpush.xpose.msra.mxu0 0.0
    %2552 = vmatpush.xpose.msra.mxu0 0.0
    %2553 = vmatpush.xpose.msra.mxu0 0.0
    %2554 = vmatpush.xpose.msra.mxu0 0.0
    %2555 = vmatpush.xpose.msra.mxu0 0.0
    %2556 = vmatpush.xpose.msra.mxu0 0.0
    %v2557 = vand.u32 %v2432, 4294901760
    %v2558 = vsub.f32 %v2432, %v2557
    %v2559 = vand.u32 %v2558, 4294901760
    %2560 = vmatpush.xpose.msra.mxu0 %v2559
    %v2561 = vand.u32 %v2430, 4294901760
    %v2562 = vsub.f32 %v2430, %v2561
    %v2563 = vand.u32 %v2562, 4294901760
    %2564 = vmatpush.xpose.msra.mxu0 %v2563
    %v2565 = vand.u32 %v2428, 4294901760
    %2566 = vmatmul.f32.gmra.mxu0 %v2565
    %v2567 = vpop.f32.mrf.mxu0
    %v2568 = vadd.f32 %v2541, %v2567
    %2569 = vdwg.mxu0
    %2570 = vmatpush.xpose.msra.mxu0 0.0
    %2571 = vmatpush.xpose.msra.mxu0 0.0
    %2572 = vmatpush.xpose.msra.mxu0 0.0
    %2573 = vmatpush.xpose.msra.mxu0 0.0
    %2574 = vmatpush.xpose.msra.mxu0 0.0
    %2575 = vmatpush.xpose.msra.mxu0 0.0
    %2576 = vmatpush.xpose.msra.mxu0 0.0
    %2577 = vmatpush.xpose.msra.mxu0 0.0
    %2578 = vmatpush.xpose.msra.mxu0 0.0
    %2579 = vmatpush.xpose.msra.mxu0 0.0
    %2580 = vmatpush.xpose.msra.mxu0 0.0
    %2581 = vmatpush.xpose.msra.mxu0 0.0
    %2582 = vmatpush.xpose.msra.mxu0 0.0
    %2583 = vmatpush.xpose.msra.mxu0 0.0
    %v2584 = vand.u32 %v2432, 4294901760
    %2585 = vmatpush.xpose.msra.mxu0 %v2584
    %v2586 = vand.u32 %v2430, 4294901760
    %2587 = vmatpush.xpose.msra.mxu0 %v2586
    %v2588 = vand.u32 %v2428, 4294901760
    %2589 = vmatmul.f32.gmra.mxu0 %v2588
    %v2590 = vpop.f32.mrf.mxu0
    %v2591 = vadd.f32 %v2568, %v2590
    %2592 = vdwg.mxu0
    %s2593 = scalar_lea.vmem %s4, 22
    %2594 = vst.msk [vmem:[%s2593] sm:$0x3] %vm294, %v2591
    // Predicated region
    $region26: #{tpu_custom_call.1} parent=1 // pred_check
      %p2595 = pneg %p36
    $region27: #{tpu_custom_call.1} parent=1 // pred_check_branch
      %2597 = sbr.rel (%p2595) target = $region29
    $region28: #{tpu_custom_call.1} parent=1 // pred_region
      %v2598 = vld [vmem:[#allocation2] sm:$0xff]
      %v2599 = vld [vmem:[#allocation2 + $0x8] sm:$0xf]
      %v2600 = vsel %vm52, %v2598, 0.0
      %2601 = vadd.xlane.f32.xlu0 %v2600
      %v2602 = vpop.xlane.xlu0 %2601
      %v2603 = vsel %vm56, %v2599, 0.0
      %2604 = vadd.xlane.f32.xlu0 %v2603
      %v2605 = vpop.xlane.xlu0 %2604
      %v2606 = vmul.f32 %v2602, 0.0078125
      %v2607 = vmul.f32 %v2605, 0.0078125
      %v2608 = vld [vmem:[#allocation3] sm:$0xff]
      %v2609 = vld [vmem:[#allocation3 + $0x8] sm:$0xf]
      %v2610 = vsel %vm52, %v2608, 0.0
      %2611 = vadd.xlane.f32.xlu0 %v2610
      %v2612 = vpop.xlane.xlu0 %2611
      %v2613 = vsel %vm56, %v2609, 0.0
      %2614 = vadd.xlane.f32.xlu0 %v2613
      %v2615 = vpop.xlane.xlu0 %2614
      %v2616 = vmul.f32 %v2612, 0.0078125
      %v2617 = vmul.f32 %v2615, 0.0078125
      %v2618 = vmul.f32 %v2606, %v2606
      %v2619 = vmul.f32 %v2607, %v2607
      %v2620 = vsub.f32 %v2616, %v2618
      %v2621 = vsub.f32 %v2617, %v2619
      %v2622 = vmax.f32 %v2620, 0.0
      %v2623 = vmax.f32 %v2621, 0.0
      %v2624 = vld [vmem:[%s1] sm:$0xff]
      %v2625 = vld [vmem:[%s1 + $0x8] sm:$0xf]
      %v2626 = vadd.f32 %v2622, 1e-05
      %v2627 = vadd.f32 %v2623, 1e-05
      %v2628 = vrsqrt.pop %v2626
      %v2629 = vmul.f32 %v2628, %v2626
      %v2630 = vmul.f32 %v2629, %v2628
      %v2631 = vmul.f32 0.5, %v2630
      %v2632 = vsub.f32 1.5, %v2631
      %v2633 = vmul.f32 %v2628, %v2632
      %vm2634 = vweird.f32 %v2626
      %vm2635 = vweird.f32 %v2628
      %vm2636 = vmor %vm2634, %vm2635
      %v2637 = vsel %vm2636, %v2628, %v2633
      %v2638 = vrsqrt.pop %v2627
      %v2639 = vmul.f32 %v2638, %v2627
      %v2640 = vmul.f32 %v2639, %v2638
      %v2641 = vmul.f32 0.5, %v2640
      %v2642 = vsub.f32 1.5, %v2641
      %v2643 = vmul.f32 %v2638, %v2642
      %vm2644 = vweird.f32 %v2627
      %vm2645 = vweird.f32 %v2638
      %vm2646 = vmor %vm2644, %vm2645
      %v2647 = vsel %vm2646, %v2638, %v2643
      %v2648 = vmul.f32 %v2624, %v2637
      %v2649 = vmul.f32 %v2625, %v2647
      %vm2650 = vcmask 7168
      %2651 = vst.msk [vmem:[%s5] sm:$0xff] %vm2650, %v2648
      %vm2652 = vcmask 3072
      %2653 = vst.msk [vmem:[%s5 + $0x8] sm:$0xf] %vm2652, %v2649
      %v2654 = vld [vmem:[%s2] sm:$0xff]
      %v2655 = vld [vmem:[%s2 + $0x8] sm:$0xf]
      %v2656 = vmul.f32 %v2606, %v2648
      %v2657 = vmul.f32 %v2607, %v2649
      %v2658 = vsub.f32 %v2654, %v2656
      %v2659 = vsub.f32 %v2655, %v2657
      %2660 = vst.msk [vmem:[%s6] sm:$0xff] %vm2650, %v2658
      %2661 = vst.msk [vmem:[%s6 + $0x8] sm:$0xf] %vm2652, %v2659
    $region29: #{tpu_custom_call.1} parent=1 // pred_fallthru
      _
    // Predicated region
    $region30: #{tpu_custom_call.1} parent=1 // pred_check
      _
    $region31: #{tpu_custom_call.1} parent=1 // pred_check_branch
      %2663 = sbr.rel (0) target = $region33
    $region32: #{tpu_custom_call.1} parent=1 // pred_region
      _
    $region33: #{tpu_custom_call.1} parent=1 // pred_fallthru
      _
    // Predicated region
    $region34: #{tpu_custom_call.1} parent=1 // pred_check
      _
    $region35: #{tpu_custom_call.1} parent=1 // pred_check_branch
      %2665 = sbr.rel (0) target = $region37
    $region36: #{tpu_custom_call.1} parent=1 // pred_region
      _
    $region37: #{tpu_custom_call.1} parent=1 // pred_fallthru
      _
    // Predicated region
    $region38: #{tpu_custom_call.1} parent=1 // pred_check
      _
    $region39: #{tpu_custom_call.1} parent=1 // pred_check_branch
      %2667 = sbr.rel (0) target = $region41
    $region40: #{tpu_custom_call.1} parent=1 // pred_region
      _
    $region41: #{tpu_custom_call.1} parent=1 // pred_fallthru
      _
    // Predicated region
    $region42: #{tpu_custom_call.1} parent=1 // pred_check
      _
    $region43: #{tpu_custom_call.1} parent=1 // pred_check_branch
      %2669 = sbr.rel (0) target = $region45
    $region44: #{tpu_custom_call.1} parent=1 // pred_region
      _
    $region45: #{tpu_custom_call.1} parent=1 // pred_fallthru
      _
    // Predicated region
    $region46: #{tpu_custom_call.1} parent=1 // pred_check
      _
    $region47: #{tpu_custom_call.1} parent=1 // pred_check_branch
      %2671 = sbr.rel (0) target = $region49
    $region48: #{tpu_custom_call.1} parent=1 // pred_region
      _
    $region49: #{tpu_custom_call.1} parent=1 // pred_fallthru
      _
    // Predicated region
    $region50: #{tpu_custom_call.1} parent=1 // pred_check
      _
    $region51: #{tpu_custom_call.1} parent=1 // pred_check_branch
      %2673 = sbr.rel (0) target = $region53
    $region52: #{tpu_custom_call.1} parent=1 // pred_region
      _
    $region53: #{tpu_custom_call.1} parent=1 // pred_fallthru
      _
    %2674 = vsyncpa [#allocation5], 1

</llo_original>
